<compile_context>
chip_gen: v6e
topology: v6e:2x2x1
jax: 0.10.0
libtpu: 0.0.40
codegen_flags: <defaults>
</compile_context>

<pallas_src>
import functools
import math

import jax
import jax.numpy as jnp
from jax.experimental import pallas as pl
from jax.experimental.pallas import tpu as pltpu

# ----- true / padded layer sizes -------------------------------------------------
H1, H2 = 400, 300            # PyTorch hidden sizes
HP1 = 512                    # padded hidden-1 per head (multiple of 256)
HP2 = 384                    # padded hidden-2 per head (multiple of 128)
HDR = 16                     # header rows (bf16 sublane tile = 16)
W14_COLS = 2 * HP1           # 1024: layer-1 weights, both heads side by side
Q_COLS = 128                 # lane-dense output block (q1 -> lane 0, q2 -> lane 1)
W2_C0 = 0                    # W2 columns [0, 384)
W5_C0 = HP2                  # W5 columns [384, 768)
W3_C0 = 2 * HP2              # W3 block columns [768, 896)
W6_C0 = 2 * HP2 + Q_COLS     # W6 block columns [896, 1024)
SLAB_ROWS = HDR + HP1        # 528
SLAB_COLS = W14_COLS         # 1024


def _critic_kernel(xu_ref, slab_ref, out_ref, *, in_dim):
    xu = xu_ref[...]                                      # (TB, in_dim) f32
    top = slab_ref[0:HDR, :].astype(jnp.float32)          # (16, 1024) header: W1|W4 + biases

    # ---- layer 1, both heads fused 1024-wide. K = in_dim = 4 is far too skinny for the
    #      MXU, so use VPU broadcast-MACs (the concat is already folded in by the wrapper).
    h = top[in_dim:in_dim + 1, :]                         # [b1 | b4], broadcasts over batch
    for k in range(in_dim):
        h = h + xu[:, k:k + 1] * top[k:k + 1, :]
    h = jnp.maximum(h, 0.0).astype(jnp.bfloat16)          # relu; padded lanes stay exactly 0
    h1 = h[:, 0:HP1]
    h2 = h[:, HP1:W14_COLS]

    # ---- layer 2: two (TB,512)x(512,384) native-bf16 MXU matmuls, f32 accumulation,
    #      on aligned slices of the resident slab.
    b2 = top[in_dim + 1:in_dim + 2, 0:HP2]
    b5 = top[in_dim + 1:in_dim + 2, HP2:2 * HP2]
    g1 = jnp.maximum(
        jnp.dot(h1, slab_ref[HDR:HDR + HP1, W2_C0:W2_C0 + HP2],
                preferred_element_type=jnp.float32) + b2, 0.0)
    g2 = jnp.maximum(
        jnp.dot(h2, slab_ref[HDR:HDR + HP1, W5_C0:W5_C0 + HP2],
                preferred_element_type=jnp.float32) + b5, 0.0)

    # ---- layer 3: W3 sits in lane 0 of its (384,128) block, W6 in lane 1 of its block.
    #      dot(g1,W3blk) is nonzero only in lane 0, dot(g2,W6blk) only in lane 1, so their
    #      sum (+ bias row) is directly the lane-dense output — no iota/select epilogue.
    w3 = slab_ref[HDR:HDR + HP2, W3_C0:W3_C0 + Q_COLS]
    w6 = slab_ref[HDR:HDR + HP2, W6_C0:W6_C0 + Q_COLS]
    b36 = top[in_dim + 2:in_dim + 3, 0:Q_COLS]
    q = (jnp.dot(g1.astype(jnp.bfloat16), w3, preferred_element_type=jnp.float32)
         + jnp.dot(g2.astype(jnp.bfloat16), w6, preferred_element_type=jnp.float32)
         + b36)
    out_ref[...] = q.astype(out_ref.dtype)                # unmasked lane-dense (TB,128) store


def pack_critic_params(params, state_dim, action_dim):
    """Pack all weights/biases into one aligned bf16 slab (once per parameter update)."""
    IN = state_dim + action_dim
    assert IN + 3 <= HDR, "layer-1 rows + 3 bias rows must fit in the 16-row header"
    slab = jnp.zeros((SLAB_ROWS, SLAB_COLS), jnp.float32)
    # layer-1 weights (both heads side by side) + biases
    slab = slab.at[0:IN, 0:H1].set(params["w1"])
    slab = slab.at[0:IN, HP1:HP1 + H1].set(params["w4"])
    slab = slab.at[IN, 0:H1].set(params["b1"])
    slab = slab.at[IN, HP1:HP1 + H1].set(params["b4"])
    slab = slab.at[IN + 1, 0:H2].set(params["b2"])
    slab = slab.at[IN + 1, HP2:HP2 + H2].set(params["b5"])
    slab = slab.at[IN + 2, 0].set(params["b3"][0])
    slab = slab.at[IN + 2, 1].set(params["b6"][0])
    # layer-2 weights
    slab = slab.at[HDR:HDR + H1, W2_C0:W2_C0 + H2].set(params["w2"])
    slab = slab.at[HDR:HDR + H1, W5_C0:W5_C0 + H2].set(params["w5"])
    # layer-3 weights: W3 -> lane 0 of its block, W6 -> lane 1 of its block
    slab = slab.at[HDR:HDR + H2, W3_C0].set(params["w3"][:, 0])
    slab = slab.at[HDR:HDR + H2, W6_C0 + 1].set(params["w6"][:, 0])
    return slab.astype(jnp.bfloat16)


def critic_forward(x, u, slab):
    """Pallas equivalent of Critic.forward(x, u) -> (q1, q2)."""
    B, state_dim = x.shape
    action_dim = u.shape[1]
    in_dim = state_dim + action_dim
    xu = jnp.concatenate([x, u], axis=1)                  # single (B, 4) operand -> one DMA

    # Fixed batch tile + cdiv grid (never TB = B): keeps in-kernel intermediates bounded in
    # VMEM for any B, and when B >= 256 guarantees >= 2 "parallel" steps for v7x's 2 TCs.
    if B <= 128:
        TB = 128
    else:
        TB = min(512, max(128, ((B // 2) // 128) * 128))
    grid = pl.cdiv(B, TB)
    Bp = grid * TB
    if Bp != B:
        xu = jnp.pad(xu, ((0, Bp - B), (0, 0)))           # padded rows are independent junk

    flops = 2 * Bp * (in_dim * W14_COLS + 2 * HP1 * HP2 + 2 * HP2 * Q_COLS)
    bytes_accessed = (slab.size * slab.dtype.itemsize
                      + Bp * (in_dim + Q_COLS) * 4)

    out = pl.pallas_call(
        functools.partial(_critic_kernel, in_dim=in_dim),
        out_shape=jax.ShapeDtypeStruct((Bp, Q_COLS), jnp.float32),
        grid=(grid,),
        in_specs=[
            pl.BlockSpec((TB, in_dim), lambda i: (i, 0)),
            # weight slab: same block every step -> stays resident in VMEM
            pl.BlockSpec((SLAB_ROWS, SLAB_COLS), lambda i: (0, 0)),
        ],
        out_specs=pl.BlockSpec((TB, Q_COLS), lambda i: (i, 0)),
        compiler_params=pltpu.CompilerParams(dimension_semantics=("parallel",)),
        cost_estimate=pl.CostEstimate(flops=flops, transcendentals=0,
                                      bytes_accessed=bytes_accessed),
    )(xu, slab)
    return out[:B, 0:1], out[:B, 1:2]


def init_critic_params(key, state_dim, action_dim):
    """nn.Linear-style init, weights stored as (in, out) = PyTorch weight.T."""
    dims = [
        ("w1", "b1", state_dim + action_dim, H1),
        ("w2", "b2", H1, H2),
        ("w3", "b3", H2, 1),
        ("w4", "b4", state_dim + action_dim, H1),
        ("w5", "b5", H1, H2),
        ("w6", "b6", H2, 1),
    ]
    params = {}
    for wname, bname, fin, fout in dims:
        key, kw, kb = jax.random.split(key, 3)
        bound = 1.0 / math.sqrt(fin)
        params[wname] = jax.random.uniform(kw, (fin, fout), jnp.float32, -bound, bound)
        params[bname] = jax.random.uniform(kb, (fout,), jnp.float32, -bound, bound)
    return params


def _reference_forward(x, u, params):
    """Pure-JAX f32 reference matching the PyTorch module."""
    xu = jnp.concatenate([x, u], axis=1)
    h1 = jax.nn.relu(xu @ params["w1"] + params["b1"])
    h1 = jax.nn.relu(h1 @ params["w2"] + params["b2"])
    q1 = h1 @ params["w3"] + params["b3"]
    h2 = jax.nn.relu(xu @ params["w4"] + params["b4"])
    h2 = jax.nn.relu(h2 @ params["w5"] + params["b5"])
    q2 = h2 @ params["w6"] + params["b6"]
    return q1, q2


if __name__ == "__main__":
    state_dim, action_dim = 3, 1       # Pendulum-v1
    batch = 8

    key = jax.random.PRNGKey(0)
    kx, ku, kp = jax.random.split(key, 3)
    x = jax.random.normal(kx, (batch, state_dim), jnp.float32)
    u = jax.random.normal(ku, (batch, action_dim), jnp.float32)
    params = init_critic_params(kp, state_dim, action_dim)
    slab = pack_critic_params(params, state_dim, action_dim)   # one-time packing (bf16)

    q1, q2 = jax.jit(critic_forward)(x, u, slab)
    jax.block_until_ready((q1, q2))

    r1, r2 = _reference_forward(x, u, params)
    assert q1.shape == (batch, 1) and q2.shape == (batch, 1)
    # Tolerance loosened for the bf16 weight slab / bf16 MXU inputs (f32 accumulation).
    assert jnp.allclose(q1, r1, atol=2e-2, rtol=2e-2)
    assert jnp.allclose(q2, r2, atol=2e-2, rtol=2e-2)

    print("KERNEL_OK")
</pallas_src>

<mosaic_0001>
module attributes {stable_mosaic.version = 11 : i64} {
  func.func @_critic_kernel(%arg0: i32, %arg1: memref<128x4xf32, #tpu.memory_space<vmem>>, %arg2: memref<528x1024xbf16, #tpu.memory_space<vmem>>, %arg3: memref<128x128xf32, #tpu.memory_space<vmem>>) attributes {dimension_semantics = [#tpu.dimension_semantics<parallel>], iteration_bounds = array<i64: 1>, scalar_prefetch = 0 : i64, scratch_operands = 0 : i64, tpu.core_type = #tpu.core_type<tc>, window_params = [{transform_indices = @transform_0, window_bounds = array<i64: 128, 4>}, {pipeline_mode = #tpu.pipeline_mode<synchronous>, transform_indices = @transform_1, window_bounds = array<i64: 528, 1024>}, {transform_indices = @transform_2, window_bounds = array<i64: 128, 128>}]} {
    %c0 = arith.constant 0 : index
    %c0_0 = arith.constant 0 : index
    %0 = vector.load %arg1[%c0, %c0_0] : memref<128x4xf32, #tpu.memory_space<vmem>>, vector<128x4xf32>
    %c0_1 = arith.constant 0 : index
    %c0_2 = arith.constant 0 : index
    %1 = vector.load %arg2[%c0_1, %c0_2] : memref<528x1024xbf16, #tpu.memory_space<vmem>>, vector<16x1024xbf16>
    %2 = arith.extf %1 : vector<16x1024xbf16> to vector<16x1024xf32>
    %3 = vector.extract_strided_slice %2 {offsets = [4, 0], sizes = [1, 1024], strides = [1, 1]} : vector<16x1024xf32> to vector<1x1024xf32>
    %4 = vector.extract_strided_slice %0 {offsets = [0, 0], sizes = [128, 1], strides = [1, 1]} : vector<128x4xf32> to vector<128x1xf32>
    %5 = vector.extract_strided_slice %2 {offsets = [0, 0], sizes = [1, 1024], strides = [1, 1]} : vector<16x1024xf32> to vector<1x1024xf32>
    %6 = vector.broadcast %4 : vector<128x1xf32> to vector<128x1024xf32>
    %7 = vector.broadcast %5 : vector<1x1024xf32> to vector<128x1024xf32>
    %8 = arith.mulf %6, %7 : vector<128x1024xf32>
    %9 = vector.broadcast %3 : vector<1x1024xf32> to vector<128x1024xf32>
    %10 = arith.addf %9, %8 : vector<128x1024xf32>
    %11 = vector.extract_strided_slice %0 {offsets = [0, 1], sizes = [128, 1], strides = [1, 1]} : vector<128x4xf32> to vector<128x1xf32>
    %12 = vector.extract_strided_slice %2 {offsets = [1, 0], sizes = [1, 1024], strides = [1, 1]} : vector<16x1024xf32> to vector<1x1024xf32>
    %13 = vector.broadcast %11 : vector<128x1xf32> to vector<128x1024xf32>
    %14 = vector.broadcast %12 : vector<1x1024xf32> to vector<128x1024xf32>
    %15 = arith.mulf %13, %14 : vector<128x1024xf32>
    %16 = arith.addf %10, %15 : vector<128x1024xf32>
    %17 = vector.extract_strided_slice %0 {offsets = [0, 2], sizes = [128, 1], strides = [1, 1]} : vector<128x4xf32> to vector<128x1xf32>
    %18 = vector.extract_strided_slice %2 {offsets = [2, 0], sizes = [1, 1024], strides = [1, 1]} : vector<16x1024xf32> to vector<1x1024xf32>
    %19 = vector.broadcast %17 : vector<128x1xf32> to vector<128x1024xf32>
    %20 = vector.broadcast %18 : vector<1x1024xf32> to vector<128x1024xf32>
    %21 = arith.mulf %19, %20 : vector<128x1024xf32>
    %22 = arith.addf %16, %21 : vector<128x1024xf32>
    %23 = vector.extract_strided_slice %0 {offsets = [0, 3], sizes = [128, 1], strides = [1, 1]} : vector<128x4xf32> to vector<128x1xf32>
    %24 = vector.extract_strided_slice %2 {offsets = [3, 0], sizes = [1, 1024], strides = [1, 1]} : vector<16x1024xf32> to vector<1x1024xf32>
    %25 = vector.broadcast %23 : vector<128x1xf32> to vector<128x1024xf32>
    %26 = vector.broadcast %24 : vector<1x1024xf32> to vector<128x1024xf32>
    %27 = arith.mulf %25, %26 : vector<128x1024xf32>
    %28 = arith.addf %22, %27 : vector<128x1024xf32>
    %cst = arith.constant 0.000000e+00 : f32
    %29 = vector.broadcast %cst : f32 to vector<128x1024xf32>
    %30 = arith.maximumf %28, %29 : vector<128x1024xf32>
    %31 = arith.truncf %30 : vector<128x1024xf32> to vector<128x1024xbf16>
    %32 = vector.extract_strided_slice %31 {offsets = [0, 0], sizes = [128, 512], strides = [1, 1]} : vector<128x1024xbf16> to vector<128x512xbf16>
    %33 = vector.extract_strided_slice %31 {offsets = [0, 512], sizes = [128, 512], strides = [1, 1]} : vector<128x1024xbf16> to vector<128x512xbf16>
    %34 = vector.extract_strided_slice %2 {offsets = [5, 0], sizes = [1, 384], strides = [1, 1]} : vector<16x1024xf32> to vector<1x384xf32>
    %35 = vector.extract_strided_slice %2 {offsets = [5, 384], sizes = [1, 384], strides = [1, 1]} : vector<16x1024xf32> to vector<1x384xf32>
    %c16 = arith.constant 16 : index
    %c0_3 = arith.constant 0 : index
    %36 = vector.load %arg2[%c16, %c0_3] : memref<528x1024xbf16, #tpu.memory_space<vmem>>, vector<512x384xbf16>
    %cst_4 = arith.constant dense<0.000000e+00> : vector<128x384xf32>
    %37 = tpu.matmul %32, %36, %cst_4 {dimension_numbers = #tpu.dot_dimension_numbers<[1], [0], [0], [1], [0, 0, 1, 1], [], []>} : vector<128x512xbf16>, vector<512x384xbf16>, vector<128x384xf32> -> vector<128x384xf32>
    %38 = vector.broadcast %34 : vector<1x384xf32> to vector<128x384xf32>
    %39 = arith.addf %37, %38 : vector<128x384xf32>
    %cst_5 = arith.constant 0.000000e+00 : f32
    %40 = vector.broadcast %cst_5 : f32 to vector<128x384xf32>
    %41 = arith.maximumf %39, %40 : vector<128x384xf32>
    %c16_6 = arith.constant 16 : index
    %c384 = arith.constant 384 : index
    %42 = vector.load %arg2[%c16_6, %c384] : memref<528x1024xbf16, #tpu.memory_space<vmem>>, vector<512x384xbf16>
    %cst_7 = arith.constant dense<0.000000e+00> : vector<128x384xf32>
    %43 = tpu.matmul %33, %42, %cst_7 {dimension_numbers = #tpu.dot_dimension_numbers<[1], [0], [0], [1], [0, 0, 1, 1], [], []>} : vector<128x512xbf16>, vector<512x384xbf16>, vector<128x384xf32> -> vector<128x384xf32>
    %44 = vector.broadcast %35 : vector<1x384xf32> to vector<128x384xf32>
    %45 = arith.addf %43, %44 : vector<128x384xf32>
    %cst_8 = arith.constant 0.000000e+00 : f32
    %46 = vector.broadcast %cst_8 : f32 to vector<128x384xf32>
    %47 = arith.maximumf %45, %46 : vector<128x384xf32>
    %c16_9 = arith.constant 16 : index
    %c768 = arith.constant 768 : index
    %48 = vector.load %arg2[%c16_9, %c768] : memref<528x1024xbf16, #tpu.memory_space<vmem>>, vector<384x128xbf16>
    %c16_10 = arith.constant 16 : index
    %c896 = arith.constant 896 : index
    %49 = vector.load %arg2[%c16_10, %c896] : memref<528x1024xbf16, #tpu.memory_space<vmem>>, vector<384x128xbf16>
    %50 = vector.extract_strided_slice %2 {offsets = [6, 0], sizes = [1, 128], strides = [1, 1]} : vector<16x1024xf32> to vector<1x128xf32>
    %51 = arith.truncf %41 : vector<128x384xf32> to vector<128x384xbf16>
    %cst_11 = arith.constant dense<0.000000e+00> : vector<128x128xf32>
    %52 = tpu.matmul %51, %48, %cst_11 {dimension_numbers = #tpu.dot_dimension_numbers<[1], [0], [0], [1], [0, 0, 1, 1], [], []>} : vector<128x384xbf16>, vector<384x128xbf16>, vector<128x128xf32> -> vector<128x128xf32>
    %53 = arith.truncf %47 : vector<128x384xf32> to vector<128x384xbf16>
    %cst_12 = arith.constant dense<0.000000e+00> : vector<128x128xf32>
    %54 = tpu.matmul %53, %49, %cst_12 {dimension_numbers = #tpu.dot_dimension_numbers<[1], [0], [0], [1], [0, 0, 1, 1], [], []>} : vector<128x384xbf16>, vector<384x128xbf16>, vector<128x128xf32> -> vector<128x128xf32>
    %55 = arith.addf %52, %54 : vector<128x128xf32>
    %56 = vector.broadcast %50 : vector<1x128xf32> to vector<128x128xf32>
    %57 = arith.addf %55, %56 : vector<128x128xf32>
    %c0_13 = arith.constant 0 : index
    %c0_14 = arith.constant 0 : index
    %58 = vector.load %arg3[%c0_13, %c0_14] : memref<128x128xf32, #tpu.memory_space<vmem>>, vector<128x128xf32>
    tpu.vector_store %arg3[%c0_13, %c0_14], %57 {strides = array<i32>} : memref<128x128xf32, #tpu.memory_space<vmem>>, vector<128x128xf32>,
    return
  }
  func.func @transform_0(%arg0: i32) -> (i32, i32) {
    %c0_i32 = arith.constant 0 : i32
    %c0_i32_0 = arith.constant 0 : i32
    return %arg0, %c0_i32 : i32, i32
  }
  func.func @transform_1(%arg0: i32) -> (i32, i32) {
    %c0_i32 = arith.constant 0 : i32
    %c0_i32_0 = arith.constant 0 : i32
    %c0_i32_1 = arith.constant 0 : i32
    return %c0_i32, %c0_i32_0 : i32, i32
  }
  func.func @transform_2(%arg0: i32) -> (i32, i32) {
    %c0_i32 = arith.constant 0 : i32
    %c0_i32_0 = arith.constant 0 : i32
    return %arg0, %c0_i32 : i32, i32
  }
}

</mosaic_0001>

<llo_original>
// kernel: critic_forward.1
$region0: #{critic_forward.1}
  #allocation0 [shape = 'u32[]', space=smem, size = 0x4, offset = 0x4, fixed_abs, tag = 'smem constant byte address 0x4 - core index']
  #allocation1 [shape = 'u32[144,128]{1,0:T(1,128)}', space=vmem, size = 0x12000, scoped, tag = 'internal scratch']
  %s0 = inlined_call_operand.vmem [shape: f32[128,4], index: 0, kind: input, shape index: {}]
  %s1 = inlined_call_operand.hbm [shape: bf16[528,1024], index: 1, kind: input, shape index: {}]
  %s2 = inlined_call_operand.vmem [shape: f32[128,128], index: 2, kind: output, shape index: {}]
  %s3 = sld [smem:[#allocation0]]
  $region22: #{critic_forward.1} parent=0
    _
  %s5 = ssub.s32 1, %s3
  %s6 = scalar_select 0, %s5, %s3
  $region1: #{critic_forward.1} parent=0
    #allocation2 [shape = 'u8[1081344]{0}', space=vmem, size = 0x108000, scoped, tag = 'input window, operand 1, single buffered']
    #allocation3 [shape = 's32[1]{0}', space=sflag, size = 0x4, scoped, tag = 'scoped memory for critic_forward.1']
    %7 = vsyncpa [#allocation3], 0
    // Predicated region
    $region2: #{critic_forward.1} parent=1 // pred_check
      _
    $region3: #{critic_forward.1} parent=1 // pred_check_branch
      %9 = sbr.rel (0) target = $region5
    $region4: #{critic_forward.1} parent=1 // pred_region
      _
    $region5: #{critic_forward.1} parent=1 // pred_fallthru
      _
    // Predicated region
    $region6: #{critic_forward.1} parent=1 // pred_check
      _
    $region7: #{critic_forward.1} parent=1 // pred_check_branch
      %11 = sbr.rel (0) target = $region9
    $region8: #{critic_forward.1} parent=1 // pred_region
      %s13 = ssub.s32 33792, 33792
      %14 = vsyncadd [#allocation3], %s13
      %s15 = sshll.u32 [#allocation2], 4
      %s16 = int_to_ptr.vmem [resolvable:$true] %s15
      %21 = dma.hbm_to_vmem [thread:$0]  %s1, 33792, %s16, [#allocation3], 512, 512, 32
    $region9: #{critic_forward.1} parent=1 // pred_fallthru
      _
    // Predicated region
    $region10: #{critic_forward.1} parent=1 // pred_check
      _
    $region11: #{critic_forward.1} parent=1 // pred_check_branch
      %23 = sbr.rel (0) target = $region13
    $region12: #{critic_forward.1} parent=1 // pred_region
      %24 = dma.done [#allocation3], 33792
    $region13: #{critic_forward.1} parent=1 // pred_fallthru
      _
    %v26 = vld [vmem:[%s0] sm:$0xff]
    %v27 = vld [vmem:[%s0 + $0x8] sm:$0xff]
    %v28 = vld [vmem:[%s0 + $0x10] sm:$0xff]
    %v29 = vld [vmem:[%s0 + $0x18] sm:$0xff]
    %v30 = vld [vmem:[%s0 + $0x20] sm:$0xff]
    %v31 = vld [vmem:[%s0 + $0x28] sm:$0xff]
    %v32 = vld [vmem:[%s0 + $0x30] sm:$0xff]
    %v33 = vld [vmem:[%s0 + $0x38] sm:$0xff]
    %v34 = vld [vmem:[%s0 + $0x40] sm:$0xff]
    %v35 = vld [vmem:[%s0 + $0x48] sm:$0xff]
    %v36 = vld [vmem:[%s0 + $0x50] sm:$0xff]
    %v37 = vld [vmem:[%s0 + $0x58] sm:$0xff]
    %v38 = vld [vmem:[%s0 + $0x60] sm:$0xff]
    %v39 = vld [vmem:[%s0 + $0x68] sm:$0xff]
    %v40 = vld [vmem:[%s0 + $0x70] sm:$0xff]
    %v41 = vld [vmem:[%s0 + $0x78] sm:$0xff]
    %v42 = vld [vmem:[#allocation2] sm:$0xff]
    %v43 = vld [vmem:[#allocation2 + $0x8] sm:$0xff]
    %v44 = vld [vmem:[#allocation2 + $0x10] sm:$0xff]
    %v45 = vld [vmem:[#allocation2 + $0x18] sm:$0xff]
    %v46 = vunpack.c.l.bf16 %v42
    %v47 = vunpack.c.h.bf16 %v42
    %v48 = vunpack.c.l.bf16 %v43
    %v49 = vunpack.c.h.bf16 %v43
    %v50 = vunpack.c.l.bf16 %v44
    %v51 = vunpack.c.h.bf16 %v44
    %v52 = vunpack.c.l.bf16 %v45
    %v53 = vunpack.c.h.bf16 %v45
    %55 = vset.pattern.permute.xlu0 0
    %56 = vperm.xlu0 %55, %v26
    %v57 = vpop.permute.xlu0 %56
    %60 = vset.pattern.permute.xlu0 0
    %61 = vperm.xlu0 %60, %v27
    %v62 = vpop.permute.xlu0 %61
    %65 = vset.pattern.permute.xlu0 0
    %66 = vperm.xlu0 %65, %v28
    %v67 = vpop.permute.xlu0 %66
    %70 = vset.pattern.permute.xlu0 0
    %71 = vperm.xlu0 %70, %v29
    %v72 = vpop.permute.xlu0 %71
    %75 = vset.pattern.permute.xlu0 0
    %76 = vperm.xlu0 %75, %v30
    %v77 = vpop.permute.xlu0 %76
    %80 = vset.pattern.permute.xlu0 0
    %81 = vperm.xlu0 %80, %v31
    %v82 = vpop.permute.xlu0 %81
    %85 = vset.pattern.permute.xlu0 0
    %86 = vperm.xlu0 %85, %v32
    %v87 = vpop.permute.xlu0 %86
    %90 = vset.pattern.permute.xlu0 0
    %91 = vperm.xlu0 %90, %v33
    %v92 = vpop.permute.xlu0 %91
    %95 = vset.pattern.permute.xlu0 0
    %96 = vperm.xlu0 %95, %v34
    %v97 = vpop.permute.xlu0 %96
    %100 = vset.pattern.permute.xlu0 0
    %101 = vperm.xlu0 %100, %v35
    %v102 = vpop.permute.xlu0 %101
    %105 = vset.pattern.permute.xlu0 0
    %106 = vperm.xlu0 %105, %v36
    %v107 = vpop.permute.xlu0 %106
    %110 = vset.pattern.permute.xlu0 0
    %111 = vperm.xlu0 %110, %v37
    %v112 = vpop.permute.xlu0 %111
    %115 = vset.pattern.permute.xlu0 0
    %116 = vperm.xlu0 %115, %v38
    %v117 = vpop.permute.xlu0 %116
    %120 = vset.pattern.permute.xlu0 0
    %121 = vperm.xlu0 %120, %v39
    %v122 = vpop.permute.xlu0 %121
    %125 = vset.pattern.permute.xlu0 0
    %126 = vperm.xlu0 %125, %v40
    %v127 = vpop.permute.xlu0 %126
    %130 = vset.pattern.permute.xlu0 0
    %131 = vperm.xlu0 %130, %v41
    %v132 = vpop.permute.xlu0 %131
    %v134 = vlaneseq
    %v135 = vshrl.u32 %v134, 7
    %v136 = vsub.s32 0, %v135
    %v137 = vrot.slane %v46, %v136
    %v138 = vlaneseq
    %v139 = vshrl.u32 %v138, 7
    %v140 = vsub.s32 0, %v139
    %v141 = vrot.slane %v47, %v140
    %v142 = vlaneseq
    %v143 = vshrl.u32 %v142, 7
    %v144 = vsub.s32 0, %v143
    %v145 = vrot.slane %v48, %v144
    %v146 = vlaneseq
    %v147 = vshrl.u32 %v146, 7
    %v148 = vsub.s32 0, %v147
    %v149 = vrot.slane %v49, %v148
    %v150 = vlaneseq
    %v151 = vshrl.u32 %v150, 7
    %v152 = vsub.s32 0, %v151
    %v153 = vrot.slane %v50, %v152
    %v154 = vlaneseq
    %v155 = vshrl.u32 %v154, 7
    %v156 = vsub.s32 0, %v155
    %v157 = vrot.slane %v51, %v156
    %v158 = vlaneseq
    %v159 = vshrl.u32 %v158, 7
    %v160 = vsub.s32 0, %v159
    %v161 = vrot.slane %v52, %v160
    %v162 = vlaneseq
    %v163 = vshrl.u32 %v162, 7
    %v164 = vsub.s32 0, %v163
    %v165 = vrot.slane %v53, %v164
    %v166 = vmul.f32 %v57, %v137
    %v167 = vmul.f32 %v57, %v141
    %v168 = vmul.f32 %v57, %v145
    %v169 = vmul.f32 %v57, %v149
    %v170 = vmul.f32 %v57, %v153
    %v171 = vmul.f32 %v57, %v157
    %v172 = vmul.f32 %v57, %v161
    %v173 = vmul.f32 %v57, %v165
    %v174 = vmul.f32 %v62, %v137
    %v175 = vmul.f32 %v62, %v141
    %v176 = vmul.f32 %v62, %v145
    %v177 = vmul.f32 %v62, %v149
    %v178 = vmul.f32 %v62, %v153
    %v179 = vmul.f32 %v62, %v157
    %v180 = vmul.f32 %v62, %v161
    %v181 = vmul.f32 %v62, %v165
    %v182 = vmul.f32 %v67, %v137
    %v183 = vmul.f32 %v67, %v141
    %v184 = vmul.f32 %v67, %v145
    %v185 = vmul.f32 %v67, %v149
    %v186 = vmul.f32 %v67, %v153
    %v187 = vmul.f32 %v67, %v157
    %v188 = vmul.f32 %v67, %v161
    %v189 = vmul.f32 %v67, %v165
    %v190 = vmul.f32 %v72, %v137
    %v191 = vmul.f32 %v72, %v141
    %v192 = vmul.f32 %v72, %v145
    %v193 = vmul.f32 %v72, %v149
    %v194 = vmul.f32 %v72, %v153
    %v195 = vmul.f32 %v72, %v157
    %v196 = vmul.f32 %v72, %v161
    %v197 = vmul.f32 %v72, %v165
    %v198 = vmul.f32 %v77, %v137
    %v199 = vmul.f32 %v77, %v141
    %v200 = vmul.f32 %v77, %v145
    %v201 = vmul.f32 %v77, %v149
    %v202 = vmul.f32 %v77, %v153
    %v203 = vmul.f32 %v77, %v157
    %v204 = vmul.f32 %v77, %v161
    %v205 = vmul.f32 %v77, %v165
    %v206 = vmul.f32 %v82, %v137
    %v207 = vmul.f32 %v82, %v141
    %v208 = vmul.f32 %v82, %v145
    %v209 = vmul.f32 %v82, %v149
    %v210 = vmul.f32 %v82, %v153
    %v211 = vmul.f32 %v82, %v157
    %v212 = vmul.f32 %v82, %v161
    %v213 = vmul.f32 %v82, %v165
    %v214 = vmul.f32 %v87, %v137
    %v215 = vmul.f32 %v87, %v141
    %v216 = vmul.f32 %v87, %v145
    %v217 = vmul.f32 %v87, %v149
    %v218 = vmul.f32 %v87, %v153
    %v219 = vmul.f32 %v87, %v157
    %v220 = vmul.f32 %v87, %v161
    %v221 = vmul.f32 %v87, %v165
    %v222 = vmul.f32 %v92, %v137
    %v223 = vmul.f32 %v92, %v141
    %v224 = vmul.f32 %v92, %v145
    %v225 = vmul.f32 %v92, %v149
    %v226 = vmul.f32 %v92, %v153
    %v227 = vmul.f32 %v92, %v157
    %v228 = vmul.f32 %v92, %v161
    %v229 = vmul.f32 %v92, %v165
    %v230 = vmul.f32 %v97, %v137
    %v231 = vmul.f32 %v97, %v141
    %v232 = vmul.f32 %v97, %v145
    %v233 = vmul.f32 %v97, %v149
    %v234 = vmul.f32 %v97, %v153
    %v235 = vmul.f32 %v97, %v157
    %v236 = vmul.f32 %v97, %v161
    %v237 = vmul.f32 %v97, %v165
    %v238 = vmul.f32 %v102, %v137
    %v239 = vmul.f32 %v102, %v141
    %v240 = vmul.f32 %v102, %v145
    %v241 = vmul.f32 %v102, %v149
    %v242 = vmul.f32 %v102, %v153
    %v243 = vmul.f32 %v102, %v157
    %v244 = vmul.f32 %v102, %v161
    %v245 = vmul.f32 %v102, %v165
    %v246 = vmul.f32 %v107, %v137
    %v247 = vmul.f32 %v107, %v141
    %v248 = vmul.f32 %v107, %v145
    %v249 = vmul.f32 %v107, %v149
    %v250 = vmul.f32 %v107, %v153
    %v251 = vmul.f32 %v107, %v157
    %v252 = vmul.f32 %v107, %v161
    %v253 = vmul.f32 %v107, %v165
    %v254 = vmul.f32 %v112, %v137
    %v255 = vmul.f32 %v112, %v141
    %v256 = vmul.f32 %v112, %v145
    %v257 = vmul.f32 %v112, %v149
    %v258 = vmul.f32 %v112, %v153
    %v259 = vmul.f32 %v112, %v157
    %v260 = vmul.f32 %v112, %v161
    %v261 = vmul.f32 %v112, %v165
    %v262 = vmul.f32 %v117, %v137
    %v263 = vmul.f32 %v117, %v141
    %v264 = vmul.f32 %v117, %v145
    %v265 = vmul.f32 %v117, %v149
    %v266 = vmul.f32 %v117, %v153
    %v267 = vmul.f32 %v117, %v157
    %v268 = vmul.f32 %v117, %v161
    %v269 = vmul.f32 %v117, %v165
    %v270 = vmul.f32 %v122, %v137
    %v271 = vmul.f32 %v122, %v141
    %v272 = vmul.f32 %v122, %v145
    %v273 = vmul.f32 %v122, %v149
    %v274 = vmul.f32 %v122, %v153
    %v275 = vmul.f32 %v122, %v157
    %v276 = vmul.f32 %v122, %v161
    %v277 = vmul.f32 %v122, %v165
    %v278 = vmul.f32 %v127, %v137
    %v279 = vmul.f32 %v127, %v141
    %v280 = vmul.f32 %v127, %v145
    %v281 = vmul.f32 %v127, %v149
    %v282 = vmul.f32 %v127, %v153
    %v283 = vmul.f32 %v127, %v157
    %v284 = vmul.f32 %v127, %v161
    %v285 = vmul.f32 %v127, %v165
    %v286 = vmul.f32 %v132, %v137
    %v287 = vmul.f32 %v132, %v141
    %v288 = vmul.f32 %v132, %v145
    %v289 = vmul.f32 %v132, %v149
    %v290 = vmul.f32 %v132, %v153
    %v291 = vmul.f32 %v132, %v157
    %v292 = vmul.f32 %v132, %v161
    %v293 = vmul.f32 %v132, %v165
    %v294 = vlaneseq
    %v295 = vshrl.u32 %v294, 7
    %v296 = vsub.s32 4, %v295
    %v297 = vrot.slane %v46, %v296
    %v298 = vlaneseq
    %v299 = vshrl.u32 %v298, 7
    %v300 = vsub.s32 4, %v299
    %v301 = vrot.slane %v47, %v300
    %v302 = vlaneseq
    %v303 = vshrl.u32 %v302, 7
    %v304 = vsub.s32 4, %v303
    %v305 = vrot.slane %v48, %v304
    %v306 = vlaneseq
    %v307 = vshrl.u32 %v306, 7
    %v308 = vsub.s32 4, %v307
    %v309 = vrot.slane %v49, %v308
    %v310 = vlaneseq
    %v311 = vshrl.u32 %v310, 7
    %v312 = vsub.s32 4, %v311
    %v313 = vrot.slane %v50, %v312
    %v314 = vlaneseq
    %v315 = vshrl.u32 %v314, 7
    %v316 = vsub.s32 4, %v315
    %v317 = vrot.slane %v51, %v316
    %v318 = vlaneseq
    %v319 = vshrl.u32 %v318, 7
    %v320 = vsub.s32 4, %v319
    %v321 = vrot.slane %v52, %v320
    %v322 = vlaneseq
    %v323 = vshrl.u32 %v322, 7
    %v324 = vsub.s32 4, %v323
    %v325 = vrot.slane %v53, %v324
    %v326 = vadd.f32 %v297, %v166
    %v327 = vadd.f32 %v301, %v167
    %v328 = vadd.f32 %v305, %v168
    %v329 = vadd.f32 %v309, %v169
    %v330 = vadd.f32 %v313, %v170
    %v331 = vadd.f32 %v317, %v171
    %v332 = vadd.f32 %v321, %v172
    %v333 = vadd.f32 %v325, %v173
    %v334 = vadd.f32 %v297, %v174
    %v335 = vadd.f32 %v301, %v175
    %v336 = vadd.f32 %v305, %v176
    %v337 = vadd.f32 %v309, %v177
    %v338 = vadd.f32 %v313, %v178
    %v339 = vadd.f32 %v317, %v179
    %v340 = vadd.f32 %v321, %v180
    %v341 = vadd.f32 %v325, %v181
    %v342 = vadd.f32 %v297, %v182
    %v343 = vadd.f32 %v301, %v183
    %v344 = vadd.f32 %v305, %v184
    %v345 = vadd.f32 %v309, %v185
    %v346 = vadd.f32 %v313, %v186
    %v347 = vadd.f32 %v317, %v187
    %v348 = vadd.f32 %v321, %v188
    %v349 = vadd.f32 %v325, %v189
    %v350 = vadd.f32 %v297, %v190
    %v351 = vadd.f32 %v301, %v191
    %v352 = vadd.f32 %v305, %v192
    %v353 = vadd.f32 %v309, %v193
    %v354 = vadd.f32 %v313, %v194
    %v355 = vadd.f32 %v317, %v195
    %v356 = vadd.f32 %v321, %v196
    %v357 = vadd.f32 %v325, %v197
    %v358 = vadd.f32 %v297, %v198
    %v359 = vadd.f32 %v301, %v199
    %v360 = vadd.f32 %v305, %v200
    %v361 = vadd.f32 %v309, %v201
    %v362 = vadd.f32 %v313, %v202
    %v363 = vadd.f32 %v317, %v203
    %v364 = vadd.f32 %v321, %v204
    %v365 = vadd.f32 %v325, %v205
    %v366 = vadd.f32 %v297, %v206
    %v367 = vadd.f32 %v301, %v207
    %v368 = vadd.f32 %v305, %v208
    %v369 = vadd.f32 %v309, %v209
    %v370 = vadd.f32 %v313, %v210
    %v371 = vadd.f32 %v317, %v211
    %v372 = vadd.f32 %v321, %v212
    %v373 = vadd.f32 %v325, %v213
    %v374 = vadd.f32 %v297, %v214
    %v375 = vadd.f32 %v301, %v215
    %v376 = vadd.f32 %v305, %v216
    %v377 = vadd.f32 %v309, %v217
    %v378 = vadd.f32 %v313, %v218
    %v379 = vadd.f32 %v317, %v219
    %v380 = vadd.f32 %v321, %v220
    %v381 = vadd.f32 %v325, %v221
    %v382 = vadd.f32 %v297, %v222
    %v383 = vadd.f32 %v301, %v223
    %v384 = vadd.f32 %v305, %v224
    %v385 = vadd.f32 %v309, %v225
    %v386 = vadd.f32 %v313, %v226
    %v387 = vadd.f32 %v317, %v227
    %v388 = vadd.f32 %v321, %v228
    %v389 = vadd.f32 %v325, %v229
    %v390 = vadd.f32 %v297, %v230
    %v391 = vadd.f32 %v301, %v231
    %v392 = vadd.f32 %v305, %v232
    %v393 = vadd.f32 %v309, %v233
    %v394 = vadd.f32 %v313, %v234
    %v395 = vadd.f32 %v317, %v235
    %v396 = vadd.f32 %v321, %v236
    %v397 = vadd.f32 %v325, %v237
    %v398 = vadd.f32 %v297, %v238
    %v399 = vadd.f32 %v301, %v239
    %v400 = vadd.f32 %v305, %v240
    %v401 = vadd.f32 %v309, %v241
    %v402 = vadd.f32 %v313, %v242
    %v403 = vadd.f32 %v317, %v243
    %v404 = vadd.f32 %v321, %v244
    %v405 = vadd.f32 %v325, %v245
    %v406 = vadd.f32 %v297, %v246
    %v407 = vadd.f32 %v301, %v247
    %v408 = vadd.f32 %v305, %v248
    %v409 = vadd.f32 %v309, %v249
    %v410 = vadd.f32 %v313, %v250
    %v411 = vadd.f32 %v317, %v251
    %v412 = vadd.f32 %v321, %v252
    %v413 = vadd.f32 %v325, %v253
    %v414 = vadd.f32 %v297, %v254
    %v415 = vadd.f32 %v301, %v255
    %v416 = vadd.f32 %v305, %v256
    %v417 = vadd.f32 %v309, %v257
    %v418 = vadd.f32 %v313, %v258
    %v419 = vadd.f32 %v317, %v259
    %v420 = vadd.f32 %v321, %v260
    %v421 = vadd.f32 %v325, %v261
    %v422 = vadd.f32 %v297, %v262
    %v423 = vadd.f32 %v301, %v263
    %v424 = vadd.f32 %v305, %v264
    %v425 = vadd.f32 %v309, %v265
    %v426 = vadd.f32 %v313, %v266
    %v427 = vadd.f32 %v317, %v267
    %v428 = vadd.f32 %v321, %v268
    %v429 = vadd.f32 %v325, %v269
    %v430 = vadd.f32 %v297, %v270
    %v431 = vadd.f32 %v301, %v271
    %v432 = vadd.f32 %v305, %v272
    %v433 = vadd.f32 %v309, %v273
    %v434 = vadd.f32 %v313, %v274
    %v435 = vadd.f32 %v317, %v275
    %v436 = vadd.f32 %v321, %v276
    %v437 = vadd.f32 %v325, %v277
    %v438 = vadd.f32 %v297, %v278
    %v439 = vadd.f32 %v301, %v279
    %v440 = vadd.f32 %v305, %v280
    %v441 = vadd.f32 %v309, %v281
    %v442 = vadd.f32 %v313, %v282
    %v443 = vadd.f32 %v317, %v283
    %v444 = vadd.f32 %v321, %v284
    %v445 = vadd.f32 %v325, %v285
    %v446 = vadd.f32 %v297, %v286
    %v447 = vadd.f32 %v301, %v287
    %v448 = vadd.f32 %v305, %v288
    %v449 = vadd.f32 %v309, %v289
    %v450 = vadd.f32 %v313, %v290
    %v451 = vadd.f32 %v317, %v291
    %v452 = vadd.f32 %v321, %v292
    %v453 = vadd.f32 %v325, %v293
    %454 = vset.pattern.permute.xlu0 1
    %455 = vperm.xlu0 %454, %v26
    %v456 = vpop.permute.xlu0 %455
    %458 = vset.pattern.permute.xlu0 1
    %459 = vperm.xlu0 %458, %v27
    %v460 = vpop.permute.xlu0 %459
    %462 = vset.pattern.permute.xlu0 1
    %463 = vperm.xlu0 %462, %v28
    %v464 = vpop.permute.xlu0 %463
    %466 = vset.pattern.permute.xlu0 1
    %467 = vperm.xlu0 %466, %v29
    %v468 = vpop.permute.xlu0 %467
    %470 = vset.pattern.permute.xlu0 1
    %471 = vperm.xlu0 %470, %v30
    %v472 = vpop.permute.xlu0 %471
    %474 = vset.pattern.permute.xlu0 1
    %475 = vperm.xlu0 %474, %v31
    %v476 = vpop.permute.xlu0 %475
    %478 = vset.pattern.permute.xlu0 1
    %479 = vperm.xlu0 %478, %v32
    %v480 = vpop.permute.xlu0 %479
    %482 = vset.pattern.permute.xlu0 1
    %483 = vperm.xlu0 %482, %v33
    %v484 = vpop.permute.xlu0 %483
    %486 = vset.pattern.permute.xlu0 1
    %487 = vperm.xlu0 %486, %v34
    %v488 = vpop.permute.xlu0 %487
    %490 = vset.pattern.permute.xlu0 1
    %491 = vperm.xlu0 %490, %v35
    %v492 = vpop.permute.xlu0 %491
    %494 = vset.pattern.permute.xlu0 1
    %495 = vperm.xlu0 %494, %v36
    %v496 = vpop.permute.xlu0 %495
    %498 = vset.pattern.permute.xlu0 1
    %499 = vperm.xlu0 %498, %v37
    %v500 = vpop.permute.xlu0 %499
    %502 = vset.pattern.permute.xlu0 1
    %503 = vperm.xlu0 %502, %v38
    %v504 = vpop.permute.xlu0 %503
    %506 = vset.pattern.permute.xlu0 1
    %507 = vperm.xlu0 %506, %v39
    %v508 = vpop.permute.xlu0 %507
    %510 = vset.pattern.permute.xlu0 1
    %511 = vperm.xlu0 %510, %v40
    %v512 = vpop.permute.xlu0 %511
    %514 = vset.pattern.permute.xlu0 1
    %515 = vperm.xlu0 %514, %v41
    %v516 = vpop.permute.xlu0 %515
    %v518 = vlaneseq
    %v519 = vshrl.u32 %v518, 7
    %v520 = vsub.s32 1, %v519
    %v521 = vrot.slane %v46, %v520
    %v522 = vlaneseq
    %v523 = vshrl.u32 %v522, 7
    %v524 = vsub.s32 1, %v523
    %v525 = vrot.slane %v47, %v524
    %v526 = vlaneseq
    %v527 = vshrl.u32 %v526, 7
    %v528 = vsub.s32 1, %v527
    %v529 = vrot.slane %v48, %v528
    %v530 = vlaneseq
    %v531 = vshrl.u32 %v530, 7
    %v532 = vsub.s32 1, %v531
    %v533 = vrot.slane %v49, %v532
    %v534 = vlaneseq
    %v535 = vshrl.u32 %v534, 7
    %v536 = vsub.s32 1, %v535
    %v537 = vrot.slane %v50, %v536
    %v538 = vlaneseq
    %v539 = vshrl.u32 %v538, 7
    %v540 = vsub.s32 1, %v539
    %v541 = vrot.slane %v51, %v540
    %v542 = vlaneseq
    %v543 = vshrl.u32 %v542, 7
    %v544 = vsub.s32 1, %v543
    %v545 = vrot.slane %v52, %v544
    %v546 = vlaneseq
    %v547 = vshrl.u32 %v546, 7
    %v548 = vsub.s32 1, %v547
    %v549 = vrot.slane %v53, %v548
    %v550 = vmul.f32 %v456, %v521
    %v551 = vmul.f32 %v456, %v525
    %v552 = vmul.f32 %v456, %v529
    %v553 = vmul.f32 %v456, %v533
    %v554 = vmul.f32 %v456, %v537
    %v555 = vmul.f32 %v456, %v541
    %v556 = vmul.f32 %v456, %v545
    %v557 = vmul.f32 %v456, %v549
    %v558 = vmul.f32 %v460, %v521
    %v559 = vmul.f32 %v460, %v525
    %v560 = vmul.f32 %v460, %v529
    %v561 = vmul.f32 %v460, %v533
    %v562 = vmul.f32 %v460, %v537
    %v563 = vmul.f32 %v460, %v541
    %v564 = vmul.f32 %v460, %v545
    %v565 = vmul.f32 %v460, %v549
    %v566 = vmul.f32 %v464, %v521
    %v567 = vmul.f32 %v464, %v525
    %v568 = vmul.f32 %v464, %v529
    %v569 = vmul.f32 %v464, %v533
    %v570 = vmul.f32 %v464, %v537
    %v571 = vmul.f32 %v464, %v541
    %v572 = vmul.f32 %v464, %v545
    %v573 = vmul.f32 %v464, %v549
    %v574 = vmul.f32 %v468, %v521
    %v575 = vmul.f32 %v468, %v525
    %v576 = vmul.f32 %v468, %v529
    %v577 = vmul.f32 %v468, %v533
    %v578 = vmul.f32 %v468, %v537
    %v579 = vmul.f32 %v468, %v541
    %v580 = vmul.f32 %v468, %v545
    %v581 = vmul.f32 %v468, %v549
    %v582 = vmul.f32 %v472, %v521
    %v583 = vmul.f32 %v472, %v525
    %v584 = vmul.f32 %v472, %v529
    %v585 = vmul.f32 %v472, %v533
    %v586 = vmul.f32 %v472, %v537
    %v587 = vmul.f32 %v472, %v541
    %v588 = vmul.f32 %v472, %v545
    %v589 = vmul.f32 %v472, %v549
    %v590 = vmul.f32 %v476, %v521
    %v591 = vmul.f32 %v476, %v525
    %v592 = vmul.f32 %v476, %v529
    %v593 = vmul.f32 %v476, %v533
    %v594 = vmul.f32 %v476, %v537
    %v595 = vmul.f32 %v476, %v541
    %v596 = vmul.f32 %v476, %v545
    %v597 = vmul.f32 %v476, %v549
    %v598 = vmul.f32 %v480, %v521
    %v599 = vmul.f32 %v480, %v525
    %v600 = vmul.f32 %v480, %v529
    %v601 = vmul.f32 %v480, %v533
    %v602 = vmul.f32 %v480, %v537
    %v603 = vmul.f32 %v480, %v541
    %v604 = vmul.f32 %v480, %v545
    %v605 = vmul.f32 %v480, %v549
    %v606 = vmul.f32 %v484, %v521
    %v607 = vmul.f32 %v484, %v525
    %v608 = vmul.f32 %v484, %v529
    %v609 = vmul.f32 %v484, %v533
    %v610 = vmul.f32 %v484, %v537
    %v611 = vmul.f32 %v484, %v541
    %v612 = vmul.f32 %v484, %v545
    %v613 = vmul.f32 %v484, %v549
    %v614 = vmul.f32 %v488, %v521
    %v615 = vmul.f32 %v488, %v525
    %v616 = vmul.f32 %v488, %v529
    %v617 = vmul.f32 %v488, %v533
    %v618 = vmul.f32 %v488, %v537
    %v619 = vmul.f32 %v488, %v541
    %v620 = vmul.f32 %v488, %v545
    %v621 = vmul.f32 %v488, %v549
    %v622 = vmul.f32 %v492, %v521
    %v623 = vmul.f32 %v492, %v525
    %v624 = vmul.f32 %v492, %v529
    %v625 = vmul.f32 %v492, %v533
    %v626 = vmul.f32 %v492, %v537
    %v627 = vmul.f32 %v492, %v541
    %v628 = vmul.f32 %v492, %v545
    %v629 = vmul.f32 %v492, %v549
    %v630 = vmul.f32 %v496, %v521
    %v631 = vmul.f32 %v496, %v525
    %v632 = vmul.f32 %v496, %v529
    %v633 = vmul.f32 %v496, %v533
    %v634 = vmul.f32 %v496, %v537
    %v635 = vmul.f32 %v496, %v541
    %v636 = vmul.f32 %v496, %v545
    %v637 = vmul.f32 %v496, %v549
    %v638 = vmul.f32 %v500, %v521
    %v639 = vmul.f32 %v500, %v525
    %v640 = vmul.f32 %v500, %v529
    %v641 = vmul.f32 %v500, %v533
    %v642 = vmul.f32 %v500, %v537
    %v643 = vmul.f32 %v500, %v541
    %v644 = vmul.f32 %v500, %v545
    %v645 = vmul.f32 %v500, %v549
    %v646 = vmul.f32 %v504, %v521
    %v647 = vmul.f32 %v504, %v525
    %v648 = vmul.f32 %v504, %v529
    %v649 = vmul.f32 %v504, %v533
    %v650 = vmul.f32 %v504, %v537
    %v651 = vmul.f32 %v504, %v541
    %v652 = vmul.f32 %v504, %v545
    %v653 = vmul.f32 %v504, %v549
    %v654 = vmul.f32 %v508, %v521
    %v655 = vmul.f32 %v508, %v525
    %v656 = vmul.f32 %v508, %v529
    %v657 = vmul.f32 %v508, %v533
    %v658 = vmul.f32 %v508, %v537
    %v659 = vmul.f32 %v508, %v541
    %v660 = vmul.f32 %v508, %v545
    %v661 = vmul.f32 %v508, %v549
    %v662 = vmul.f32 %v512, %v521
    %v663 = vmul.f32 %v512, %v525
    %v664 = vmul.f32 %v512, %v529
    %v665 = vmul.f32 %v512, %v533
    %v666 = vmul.f32 %v512, %v537
    %v667 = vmul.f32 %v512, %v541
    %v668 = vmul.f32 %v512, %v545
    %v669 = vmul.f32 %v512, %v549
    %v670 = vmul.f32 %v516, %v521
    %v671 = vmul.f32 %v516, %v525
    %v672 = vmul.f32 %v516, %v529
    %v673 = vmul.f32 %v516, %v533
    %v674 = vmul.f32 %v516, %v537
    %v675 = vmul.f32 %v516, %v541
    %v676 = vmul.f32 %v516, %v545
    %v677 = vmul.f32 %v516, %v549
    %v678 = vadd.f32 %v326, %v550
    %v679 = vadd.f32 %v327, %v551
    %v680 = vadd.f32 %v328, %v552
    %v681 = vadd.f32 %v329, %v553
    %v682 = vadd.f32 %v330, %v554
    %v683 = vadd.f32 %v331, %v555
    %v684 = vadd.f32 %v332, %v556
    %v685 = vadd.f32 %v333, %v557
    %v686 = vadd.f32 %v334, %v558
    %v687 = vadd.f32 %v335, %v559
    %v688 = vadd.f32 %v336, %v560
    %v689 = vadd.f32 %v337, %v561
    %v690 = vadd.f32 %v338, %v562
    %v691 = vadd.f32 %v339, %v563
    %v692 = vadd.f32 %v340, %v564
    %v693 = vadd.f32 %v341, %v565
    %v694 = vadd.f32 %v342, %v566
    %v695 = vadd.f32 %v343, %v567
    %v696 = vadd.f32 %v344, %v568
    %v697 = vadd.f32 %v345, %v569
    %v698 = vadd.f32 %v346, %v570
    %v699 = vadd.f32 %v347, %v571
    %v700 = vadd.f32 %v348, %v572
    %v701 = vadd.f32 %v349, %v573
    %v702 = vadd.f32 %v350, %v574
    %v703 = vadd.f32 %v351, %v575
    %v704 = vadd.f32 %v352, %v576
    %v705 = vadd.f32 %v353, %v577
    %v706 = vadd.f32 %v354, %v578
    %v707 = vadd.f32 %v355, %v579
    %v708 = vadd.f32 %v356, %v580
    %v709 = vadd.f32 %v357, %v581
    %v710 = vadd.f32 %v358, %v582
    %v711 = vadd.f32 %v359, %v583
    %v712 = vadd.f32 %v360, %v584
    %v713 = vadd.f32 %v361, %v585
    %v714 = vadd.f32 %v362, %v586
    %v715 = vadd.f32 %v363, %v587
    %v716 = vadd.f32 %v364, %v588
    %v717 = vadd.f32 %v365, %v589
    %v718 = vadd.f32 %v366, %v590
    %v719 = vadd.f32 %v367, %v591
    %v720 = vadd.f32 %v368, %v592
    %v721 = vadd.f32 %v369, %v593
    %v722 = vadd.f32 %v370, %v594
    %v723 = vadd.f32 %v371, %v595
    %v724 = vadd.f32 %v372, %v596
    %v725 = vadd.f32 %v373, %v597
    %v726 = vadd.f32 %v374, %v598
    %v727 = vadd.f32 %v375, %v599
    %v728 = vadd.f32 %v376, %v600
    %v729 = vadd.f32 %v377, %v601
    %v730 = vadd.f32 %v378, %v602
    %v731 = vadd.f32 %v379, %v603
    %v732 = vadd.f32 %v380, %v604
    %v733 = vadd.f32 %v381, %v605
    %v734 = vadd.f32 %v382, %v606
    %v735 = vadd.f32 %v383, %v607
    %v736 = vadd.f32 %v384, %v608
    %v737 = vadd.f32 %v385, %v609
    %v738 = vadd.f32 %v386, %v610
    %v739 = vadd.f32 %v387, %v611
    %v740 = vadd.f32 %v388, %v612
    %v741 = vadd.f32 %v389, %v613
    %v742 = vadd.f32 %v390, %v614
    %v743 = vadd.f32 %v391, %v615
    %v744 = vadd.f32 %v392, %v616
    %v745 = vadd.f32 %v393, %v617
    %v746 = vadd.f32 %v394, %v618
    %v747 = vadd.f32 %v395, %v619
    %v748 = vadd.f32 %v396, %v620
    %v749 = vadd.f32 %v397, %v621
    %v750 = vadd.f32 %v398, %v622
    %v751 = vadd.f32 %v399, %v623
    %v752 = vadd.f32 %v400, %v624
    %v753 = vadd.f32 %v401, %v625
    %v754 = vadd.f32 %v402, %v626
    %v755 = vadd.f32 %v403, %v627
    %v756 = vadd.f32 %v404, %v628
    %v757 = vadd.f32 %v405, %v629
    %v758 = vadd.f32 %v406, %v630
    %v759 = vadd.f32 %v407, %v631
    %v760 = vadd.f32 %v408, %v632
    %v761 = vadd.f32 %v409, %v633
    %v762 = vadd.f32 %v410, %v634
    %v763 = vadd.f32 %v411, %v635
    %v764 = vadd.f32 %v412, %v636
    %v765 = vadd.f32 %v413, %v637
    %v766 = vadd.f32 %v414, %v638
    %v767 = vadd.f32 %v415, %v639
    %v768 = vadd.f32 %v416, %v640
    %v769 = vadd.f32 %v417, %v641
    %v770 = vadd.f32 %v418, %v642
    %v771 = vadd.f32 %v419, %v643
    %v772 = vadd.f32 %v420, %v644
    %v773 = vadd.f32 %v421, %v645
    %v774 = vadd.f32 %v422, %v646
    %v775 = vadd.f32 %v423, %v647
    %v776 = vadd.f32 %v424, %v648
    %v777 = vadd.f32 %v425, %v649
    %v778 = vadd.f32 %v426, %v650
    %v779 = vadd.f32 %v427, %v651
    %v780 = vadd.f32 %v428, %v652
    %v781 = vadd.f32 %v429, %v653
    %v782 = vadd.f32 %v430, %v654
    %v783 = vadd.f32 %v431, %v655
    %v784 = vadd.f32 %v432, %v656
    %v785 = vadd.f32 %v433, %v657
    %v786 = vadd.f32 %v434, %v658
    %v787 = vadd.f32 %v435, %v659
    %v788 = vadd.f32 %v436, %v660
    %v789 = vadd.f32 %v437, %v661
    %v790 = vadd.f32 %v438, %v662
    %v791 = vadd.f32 %v439, %v663
    %v792 = vadd.f32 %v440, %v664
    %v793 = vadd.f32 %v441, %v665
    %v794 = vadd.f32 %v442, %v666
    %v795 = vadd.f32 %v443, %v667
    %v796 = vadd.f32 %v444, %v668
    %v797 = vadd.f32 %v445, %v669
    %v798 = vadd.f32 %v446, %v670
    %v799 = vadd.f32 %v447, %v671
    %v800 = vadd.f32 %v448, %v672
    %v801 = vadd.f32 %v449, %v673
    %v802 = vadd.f32 %v450, %v674
    %v803 = vadd.f32 %v451, %v675
    %v804 = vadd.f32 %v452, %v676
    %v805 = vadd.f32 %v453, %v677
    %806 = vset.pattern.permute.xlu0 2
    %807 = vperm.xlu0 %806, %v26
    %v808 = vpop.permute.xlu0 %807
    %810 = vset.pattern.permute.xlu0 2
    %811 = vperm.xlu0 %810, %v27
    %v812 = vpop.permute.xlu0 %811
    %814 = vset.pattern.permute.xlu0 2
    %815 = vperm.xlu0 %814, %v28
    %v816 = vpop.permute.xlu0 %815
    %818 = vset.pattern.permute.xlu0 2
    %819 = vperm.xlu0 %818, %v29
    %v820 = vpop.permute.xlu0 %819
    %822 = vset.pattern.permute.xlu0 2
    %823 = vperm.xlu0 %822, %v30
    %v824 = vpop.permute.xlu0 %823
    %826 = vset.pattern.permute.xlu0 2
    %827 = vperm.xlu0 %826, %v31
    %v828 = vpop.permute.xlu0 %827
    %830 = vset.pattern.permute.xlu0 2
    %831 = vperm.xlu0 %830, %v32
    %v832 = vpop.permute.xlu0 %831
    %834 = vset.pattern.permute.xlu0 2
    %835 = vperm.xlu0 %834, %v33
    %v836 = vpop.permute.xlu0 %835
    %838 = vset.pattern.permute.xlu0 2
    %839 = vperm.xlu0 %838, %v34
    %v840 = vpop.permute.xlu0 %839
    %842 = vset.pattern.permute.xlu0 2
    %843 = vperm.xlu0 %842, %v35
    %v844 = vpop.permute.xlu0 %843
    %846 = vset.pattern.permute.xlu0 2
    %847 = vperm.xlu0 %846, %v36
    %v848 = vpop.permute.xlu0 %847
    %850 = vset.pattern.permute.xlu0 2
    %851 = vperm.xlu0 %850, %v37
    %v852 = vpop.permute.xlu0 %851
    %854 = vset.pattern.permute.xlu0 2
    %855 = vperm.xlu0 %854, %v38
    %v856 = vpop.permute.xlu0 %855
    %858 = vset.pattern.permute.xlu0 2
    %859 = vperm.xlu0 %858, %v39
    %v860 = vpop.permute.xlu0 %859
    %862 = vset.pattern.permute.xlu0 2
    %863 = vperm.xlu0 %862, %v40
    %v864 = vpop.permute.xlu0 %863
    %866 = vset.pattern.permute.xlu0 2
    %867 = vperm.xlu0 %866, %v41
    %v868 = vpop.permute.xlu0 %867
    %v870 = vlaneseq
    %v871 = vshrl.u32 %v870, 7
    %v872 = vsub.s32 2, %v871
    %v873 = vrot.slane %v46, %v872
    %v874 = vlaneseq
    %v875 = vshrl.u32 %v874, 7
    %v876 = vsub.s32 2, %v875
    %v877 = vrot.slane %v47, %v876
    %v878 = vlaneseq
    %v879 = vshrl.u32 %v878, 7
    %v880 = vsub.s32 2, %v879
    %v881 = vrot.slane %v48, %v880
    %v882 = vlaneseq
    %v883 = vshrl.u32 %v882, 7
    %v884 = vsub.s32 2, %v883
    %v885 = vrot.slane %v49, %v884
    %v886 = vlaneseq
    %v887 = vshrl.u32 %v886, 7
    %v888 = vsub.s32 2, %v887
    %v889 = vrot.slane %v50, %v888
    %v890 = vlaneseq
    %v891 = vshrl.u32 %v890, 7
    %v892 = vsub.s32 2, %v891
    %v893 = vrot.slane %v51, %v892
    %v894 = vlaneseq
    %v895 = vshrl.u32 %v894, 7
    %v896 = vsub.s32 2, %v895
    %v897 = vrot.slane %v52, %v896
    %v898 = vlaneseq
    %v899 = vshrl.u32 %v898, 7
    %v900 = vsub.s32 2, %v899
    %v901 = vrot.slane %v53, %v900
    %v902 = vmul.f32 %v808, %v873
    %v903 = vmul.f32 %v808, %v877
    %v904 = vmul.f32 %v808, %v881
    %v905 = vmul.f32 %v808, %v885
    %v906 = vmul.f32 %v808, %v889
    %v907 = vmul.f32 %v808, %v893
    %v908 = vmul.f32 %v808, %v897
    %v909 = vmul.f32 %v808, %v901
    %v910 = vmul.f32 %v812, %v873
    %v911 = vmul.f32 %v812, %v877
    %v912 = vmul.f32 %v812, %v881
    %v913 = vmul.f32 %v812, %v885
    %v914 = vmul.f32 %v812, %v889
    %v915 = vmul.f32 %v812, %v893
    %v916 = vmul.f32 %v812, %v897
    %v917 = vmul.f32 %v812, %v901
    %v918 = vmul.f32 %v816, %v873
    %v919 = vmul.f32 %v816, %v877
    %v920 = vmul.f32 %v816, %v881
    %v921 = vmul.f32 %v816, %v885
    %v922 = vmul.f32 %v816, %v889
    %v923 = vmul.f32 %v816, %v893
    %v924 = vmul.f32 %v816, %v897
    %v925 = vmul.f32 %v816, %v901
    %v926 = vmul.f32 %v820, %v873
    %v927 = vmul.f32 %v820, %v877
    %v928 = vmul.f32 %v820, %v881
    %v929 = vmul.f32 %v820, %v885
    %v930 = vmul.f32 %v820, %v889
    %v931 = vmul.f32 %v820, %v893
    %v932 = vmul.f32 %v820, %v897
    %v933 = vmul.f32 %v820, %v901
    %v934 = vmul.f32 %v824, %v873
    %v935 = vmul.f32 %v824, %v877
    %v936 = vmul.f32 %v824, %v881
    %v937 = vmul.f32 %v824, %v885
    %v938 = vmul.f32 %v824, %v889
    %v939 = vmul.f32 %v824, %v893
    %v940 = vmul.f32 %v824, %v897
    %v941 = vmul.f32 %v824, %v901
    %v942 = vmul.f32 %v828, %v873
    %v943 = vmul.f32 %v828, %v877
    %v944 = vmul.f32 %v828, %v881
    %v945 = vmul.f32 %v828, %v885
    %v946 = vmul.f32 %v828, %v889
    %v947 = vmul.f32 %v828, %v893
    %v948 = vmul.f32 %v828, %v897
    %v949 = vmul.f32 %v828, %v901
    %v950 = vmul.f32 %v832, %v873
    %v951 = vmul.f32 %v832, %v877
    %v952 = vmul.f32 %v832, %v881
    %v953 = vmul.f32 %v832, %v885
    %v954 = vmul.f32 %v832, %v889
    %v955 = vmul.f32 %v832, %v893
    %v956 = vmul.f32 %v832, %v897
    %v957 = vmul.f32 %v832, %v901
    %v958 = vmul.f32 %v836, %v873
    %v959 = vmul.f32 %v836, %v877
    %v960 = vmul.f32 %v836, %v881
    %v961 = vmul.f32 %v836, %v885
    %v962 = vmul.f32 %v836, %v889
    %v963 = vmul.f32 %v836, %v893
    %v964 = vmul.f32 %v836, %v897
    %v965 = vmul.f32 %v836, %v901
    %v966 = vmul.f32 %v840, %v873
    %v967 = vmul.f32 %v840, %v877
    %v968 = vmul.f32 %v840, %v881
    %v969 = vmul.f32 %v840, %v885
    %v970 = vmul.f32 %v840, %v889
    %v971 = vmul.f32 %v840, %v893
    %v972 = vmul.f32 %v840, %v897
    %v973 = vmul.f32 %v840, %v901
    %v974 = vmul.f32 %v844, %v873
    %v975 = vmul.f32 %v844, %v877
    %v976 = vmul.f32 %v844, %v881
    %v977 = vmul.f32 %v844, %v885
    %v978 = vmul.f32 %v844, %v889
    %v979 = vmul.f32 %v844, %v893
    %v980 = vmul.f32 %v844, %v897
    %v981 = vmul.f32 %v844, %v901
    %v982 = vmul.f32 %v848, %v873
    %v983 = vmul.f32 %v848, %v877
    %v984 = vmul.f32 %v848, %v881
    %v985 = vmul.f32 %v848, %v885
    %v986 = vmul.f32 %v848, %v889
    %v987 = vmul.f32 %v848, %v893
    %v988 = vmul.f32 %v848, %v897
    %v989 = vmul.f32 %v848, %v901
    %v990 = vmul.f32 %v852, %v873
    %v991 = vmul.f32 %v852, %v877
    %v992 = vmul.f32 %v852, %v881
    %v993 = vmul.f32 %v852, %v885
    %v994 = vmul.f32 %v852, %v889
    %v995 = vmul.f32 %v852, %v893
    %v996 = vmul.f32 %v852, %v897
    %v997 = vmul.f32 %v852, %v901
    %v998 = vmul.f32 %v856, %v873
    %v999 = vmul.f32 %v856, %v877
    %v1000 = vmul.f32 %v856, %v881
    %v1001 = vmul.f32 %v856, %v885
    %v1002 = vmul.f32 %v856, %v889
    %v1003 = vmul.f32 %v856, %v893
    %v1004 = vmul.f32 %v856, %v897
    %v1005 = vmul.f32 %v856, %v901
    %v1006 = vmul.f32 %v860, %v873
    %v1007 = vmul.f32 %v860, %v877
    %v1008 = vmul.f32 %v860, %v881
    %v1009 = vmul.f32 %v860, %v885
    %v1010 = vmul.f32 %v860, %v889
    %v1011 = vmul.f32 %v860, %v893
    %v1012 = vmul.f32 %v860, %v897
    %v1013 = vmul.f32 %v860, %v901
    %v1014 = vmul.f32 %v864, %v873
    %v1015 = vmul.f32 %v864, %v877
    %v1016 = vmul.f32 %v864, %v881
    %v1017 = vmul.f32 %v864, %v885
    %v1018 = vmul.f32 %v864, %v889
    %v1019 = vmul.f32 %v864, %v893
    %v1020 = vmul.f32 %v864, %v897
    %v1021 = vmul.f32 %v864, %v901
    %v1022 = vmul.f32 %v868, %v873
    %v1023 = vmul.f32 %v868, %v877
    %v1024 = vmul.f32 %v868, %v881
    %v1025 = vmul.f32 %v868, %v885
    %v1026 = vmul.f32 %v868, %v889
    %v1027 = vmul.f32 %v868, %v893
    %v1028 = vmul.f32 %v868, %v897
    %v1029 = vmul.f32 %v868, %v901
    %v1030 = vadd.f32 %v678, %v902
    %v1031 = vadd.f32 %v679, %v903
    %v1032 = vadd.f32 %v680, %v904
    %v1033 = vadd.f32 %v681, %v905
    %v1034 = vadd.f32 %v682, %v906
    %v1035 = vadd.f32 %v683, %v907
    %v1036 = vadd.f32 %v684, %v908
    %v1037 = vadd.f32 %v685, %v909
    %v1038 = vadd.f32 %v686, %v910
    %v1039 = vadd.f32 %v687, %v911
    %v1040 = vadd.f32 %v688, %v912
    %v1041 = vadd.f32 %v689, %v913
    %v1042 = vadd.f32 %v690, %v914
    %v1043 = vadd.f32 %v691, %v915
    %v1044 = vadd.f32 %v692, %v916
    %v1045 = vadd.f32 %v693, %v917
    %v1046 = vadd.f32 %v694, %v918
    %v1047 = vadd.f32 %v695, %v919
    %v1048 = vadd.f32 %v696, %v920
    %v1049 = vadd.f32 %v697, %v921
    %v1050 = vadd.f32 %v698, %v922
    %v1051 = vadd.f32 %v699, %v923
    %v1052 = vadd.f32 %v700, %v924
    %v1053 = vadd.f32 %v701, %v925
    %v1054 = vadd.f32 %v702, %v926
    %v1055 = vadd.f32 %v703, %v927
    %v1056 = vadd.f32 %v704, %v928
    %v1057 = vadd.f32 %v705, %v929
    %v1058 = vadd.f32 %v706, %v930
    %v1059 = vadd.f32 %v707, %v931
    %v1060 = vadd.f32 %v708, %v932
    %v1061 = vadd.f32 %v709, %v933
    %v1062 = vadd.f32 %v710, %v934
    %v1063 = vadd.f32 %v711, %v935
    %v1064 = vadd.f32 %v712, %v936
    %v1065 = vadd.f32 %v713, %v937
    %v1066 = vadd.f32 %v714, %v938
    %v1067 = vadd.f32 %v715, %v939
    %v1068 = vadd.f32 %v716, %v940
    %v1069 = vadd.f32 %v717, %v941
    %v1070 = vadd.f32 %v718, %v942
    %v1071 = vadd.f32 %v719, %v943
    %v1072 = vadd.f32 %v720, %v944
    %v1073 = vadd.f32 %v721, %v945
    %v1074 = vadd.f32 %v722, %v946
    %v1075 = vadd.f32 %v723, %v947
    %v1076 = vadd.f32 %v724, %v948
    %v1077 = vadd.f32 %v725, %v949
    %v1078 = vadd.f32 %v726, %v950
    %v1079 = vadd.f32 %v727, %v951
    %v1080 = vadd.f32 %v728, %v952
    %v1081 = vadd.f32 %v729, %v953
    %v1082 = vadd.f32 %v730, %v954
    %v1083 = vadd.f32 %v731, %v955
    %v1084 = vadd.f32 %v732, %v956
    %v1085 = vadd.f32 %v733, %v957
    %v1086 = vadd.f32 %v734, %v958
    %v1087 = vadd.f32 %v735, %v959
    %v1088 = vadd.f32 %v736, %v960
    %v1089 = vadd.f32 %v737, %v961
    %v1090 = vadd.f32 %v738, %v962
    %v1091 = vadd.f32 %v739, %v963
    %v1092 = vadd.f32 %v740, %v964
    %v1093 = vadd.f32 %v741, %v965
    %v1094 = vadd.f32 %v742, %v966
    %v1095 = vadd.f32 %v743, %v967
    %v1096 = vadd.f32 %v744, %v968
    %v1097 = vadd.f32 %v745, %v969
    %v1098 = vadd.f32 %v746, %v970
    %v1099 = vadd.f32 %v747, %v971
    %v1100 = vadd.f32 %v748, %v972
    %v1101 = vadd.f32 %v749, %v973
    %v1102 = vadd.f32 %v750, %v974
    %v1103 = vadd.f32 %v751, %v975
    %v1104 = vadd.f32 %v752, %v976
    %v1105 = vadd.f32 %v753, %v977
    %v1106 = vadd.f32 %v754, %v978
    %v1107 = vadd.f32 %v755, %v979
    %v1108 = vadd.f32 %v756, %v980
    %v1109 = vadd.f32 %v757, %v981
    %v1110 = vadd.f32 %v758, %v982
    %v1111 = vadd.f32 %v759, %v983
    %v1112 = vadd.f32 %v760, %v984
    %v1113 = vadd.f32 %v761, %v985
    %v1114 = vadd.f32 %v762, %v986
    %v1115 = vadd.f32 %v763, %v987
    %v1116 = vadd.f32 %v764, %v988
    %v1117 = vadd.f32 %v765, %v989
    %v1118 = vadd.f32 %v766, %v990
    %v1119 = vadd.f32 %v767, %v991
    %v1120 = vadd.f32 %v768, %v992
    %v1121 = vadd.f32 %v769, %v993
    %v1122 = vadd.f32 %v770, %v994
    %v1123 = vadd.f32 %v771, %v995
    %v1124 = vadd.f32 %v772, %v996
    %v1125 = vadd.f32 %v773, %v997
    %v1126 = vadd.f32 %v774, %v998
    %v1127 = vadd.f32 %v775, %v999
    %v1128 = vadd.f32 %v776, %v1000
    %v1129 = vadd.f32 %v777, %v1001
    %v1130 = vadd.f32 %v778, %v1002
    %v1131 = vadd.f32 %v779, %v1003
    %v1132 = vadd.f32 %v780, %v1004
    %v1133 = vadd.f32 %v781, %v1005
    %v1134 = vadd.f32 %v782, %v1006
    %v1135 = vadd.f32 %v783, %v1007
    %v1136 = vadd.f32 %v784, %v1008
    %v1137 = vadd.f32 %v785, %v1009
    %v1138 = vadd.f32 %v786, %v1010
    %v1139 = vadd.f32 %v787, %v1011
    %v1140 = vadd.f32 %v788, %v1012
    %v1141 = vadd.f32 %v789, %v1013
    %v1142 = vadd.f32 %v790, %v1014
    %v1143 = vadd.f32 %v791, %v1015
    %v1144 = vadd.f32 %v792, %v1016
    %v1145 = vadd.f32 %v793, %v1017
    %v1146 = vadd.f32 %v794, %v1018
    %v1147 = vadd.f32 %v795, %v1019
    %v1148 = vadd.f32 %v796, %v1020
    %v1149 = vadd.f32 %v797, %v1021
    %v1150 = vadd.f32 %v798, %v1022
    %v1151 = vadd.f32 %v799, %v1023
    %v1152 = vadd.f32 %v800, %v1024
    %v1153 = vadd.f32 %v801, %v1025
    %v1154 = vadd.f32 %v802, %v1026
    %v1155 = vadd.f32 %v803, %v1027
    %v1156 = vadd.f32 %v804, %v1028
    %v1157 = vadd.f32 %v805, %v1029
    %1158 = vset.pattern.permute.xlu0 3
    %1159 = vperm.xlu0 %1158, %v26
    %v1160 = vpop.permute.xlu0 %1159
    %1162 = vset.pattern.permute.xlu0 3
    %1163 = vperm.xlu0 %1162, %v27
    %v1164 = vpop.permute.xlu0 %1163
    %1166 = vset.pattern.permute.xlu0 3
    %1167 = vperm.xlu0 %1166, %v28
    %v1168 = vpop.permute.xlu0 %1167
    %1170 = vset.pattern.permute.xlu0 3
    %1171 = vperm.xlu0 %1170, %v29
    %v1172 = vpop.permute.xlu0 %1171
    %1174 = vset.pattern.permute.xlu0 3
    %1175 = vperm.xlu0 %1174, %v30
    %v1176 = vpop.permute.xlu0 %1175
    %1178 = vset.pattern.permute.xlu0 3
    %1179 = vperm.xlu0 %1178, %v31
    %v1180 = vpop.permute.xlu0 %1179
    %1182 = vset.pattern.permute.xlu0 3
    %1183 = vperm.xlu0 %1182, %v32
    %v1184 = vpop.permute.xlu0 %1183
    %1186 = vset.pattern.permute.xlu0 3
    %1187 = vperm.xlu0 %1186, %v33
    %v1188 = vpop.permute.xlu0 %1187
    %1190 = vset.pattern.permute.xlu0 3
    %1191 = vperm.xlu0 %1190, %v34
    %v1192 = vpop.permute.xlu0 %1191
    %1194 = vset.pattern.permute.xlu0 3
    %1195 = vperm.xlu0 %1194, %v35
    %v1196 = vpop.permute.xlu0 %1195
    %1198 = vset.pattern.permute.xlu0 3
    %1199 = vperm.xlu0 %1198, %v36
    %v1200 = vpop.permute.xlu0 %1199
    %1202 = vset.pattern.permute.xlu0 3
    %1203 = vperm.xlu0 %1202, %v37
    %v1204 = vpop.permute.xlu0 %1203
    %1206 = vset.pattern.permute.xlu0 3
    %1207 = vperm.xlu0 %1206, %v38
    %v1208 = vpop.permute.xlu0 %1207
    %1210 = vset.pattern.permute.xlu0 3
    %1211 = vperm.xlu0 %1210, %v39
    %v1212 = vpop.permute.xlu0 %1211
    %1214 = vset.pattern.permute.xlu0 3
    %1215 = vperm.xlu0 %1214, %v40
    %v1216 = vpop.permute.xlu0 %1215
    %1218 = vset.pattern.permute.xlu0 3
    %1219 = vperm.xlu0 %1218, %v41
    %v1220 = vpop.permute.xlu0 %1219
    %v1222 = vlaneseq
    %v1223 = vshrl.u32 %v1222, 7
    %v1224 = vsub.s32 3, %v1223
    %v1225 = vrot.slane %v46, %v1224
    %v1226 = vlaneseq
    %v1227 = vshrl.u32 %v1226, 7
    %v1228 = vsub.s32 3, %v1227
    %v1229 = vrot.slane %v47, %v1228
    %v1230 = vlaneseq
    %v1231 = vshrl.u32 %v1230, 7
    %v1232 = vsub.s32 3, %v1231
    %v1233 = vrot.slane %v48, %v1232
    %v1234 = vlaneseq
    %v1235 = vshrl.u32 %v1234, 7
    %v1236 = vsub.s32 3, %v1235
    %v1237 = vrot.slane %v49, %v1236
    %v1238 = vlaneseq
    %v1239 = vshrl.u32 %v1238, 7
    %v1240 = vsub.s32 3, %v1239
    %v1241 = vrot.slane %v50, %v1240
    %v1242 = vlaneseq
    %v1243 = vshrl.u32 %v1242, 7
    %v1244 = vsub.s32 3, %v1243
    %v1245 = vrot.slane %v51, %v1244
    %v1246 = vlaneseq
    %v1247 = vshrl.u32 %v1246, 7
    %v1248 = vsub.s32 3, %v1247
    %v1249 = vrot.slane %v52, %v1248
    %v1250 = vlaneseq
    %v1251 = vshrl.u32 %v1250, 7
    %v1252 = vsub.s32 3, %v1251
    %v1253 = vrot.slane %v53, %v1252
    %v1254 = vmul.f32 %v1160, %v1225
    %v1255 = vmul.f32 %v1160, %v1229
    %v1256 = vmul.f32 %v1160, %v1233
    %v1257 = vmul.f32 %v1160, %v1237
    %v1258 = vmul.f32 %v1160, %v1241
    %v1259 = vmul.f32 %v1160, %v1245
    %v1260 = vmul.f32 %v1160, %v1249
    %v1261 = vmul.f32 %v1160, %v1253
    %v1262 = vmul.f32 %v1164, %v1225
    %v1263 = vmul.f32 %v1164, %v1229
    %v1264 = vmul.f32 %v1164, %v1233
    %v1265 = vmul.f32 %v1164, %v1237
    %v1266 = vmul.f32 %v1164, %v1241
    %v1267 = vmul.f32 %v1164, %v1245
    %v1268 = vmul.f32 %v1164, %v1249
    %v1269 = vmul.f32 %v1164, %v1253
    %v1270 = vmul.f32 %v1168, %v1225
    %v1271 = vmul.f32 %v1168, %v1229
    %v1272 = vmul.f32 %v1168, %v1233
    %v1273 = vmul.f32 %v1168, %v1237
    %v1274 = vmul.f32 %v1168, %v1241
    %v1275 = vmul.f32 %v1168, %v1245
    %v1276 = vmul.f32 %v1168, %v1249
    %v1277 = vmul.f32 %v1168, %v1253
    %v1278 = vmul.f32 %v1172, %v1225
    %v1279 = vmul.f32 %v1172, %v1229
    %v1280 = vmul.f32 %v1172, %v1233
    %v1281 = vmul.f32 %v1172, %v1237
    %v1282 = vmul.f32 %v1172, %v1241
    %v1283 = vmul.f32 %v1172, %v1245
    %v1284 = vmul.f32 %v1172, %v1249
    %v1285 = vmul.f32 %v1172, %v1253
    %v1286 = vmul.f32 %v1176, %v1225
    %v1287 = vmul.f32 %v1176, %v1229
    %v1288 = vmul.f32 %v1176, %v1233
    %v1289 = vmul.f32 %v1176, %v1237
    %v1290 = vmul.f32 %v1176, %v1241
    %v1291 = vmul.f32 %v1176, %v1245
    %v1292 = vmul.f32 %v1176, %v1249
    %v1293 = vmul.f32 %v1176, %v1253
    %v1294 = vmul.f32 %v1180, %v1225
    %v1295 = vmul.f32 %v1180, %v1229
    %v1296 = vmul.f32 %v1180, %v1233
    %v1297 = vmul.f32 %v1180, %v1237
    %v1298 = vmul.f32 %v1180, %v1241
    %v1299 = vmul.f32 %v1180, %v1245
    %v1300 = vmul.f32 %v1180, %v1249
    %v1301 = vmul.f32 %v1180, %v1253
    %v1302 = vmul.f32 %v1184, %v1225
    %v1303 = vmul.f32 %v1184, %v1229
    %v1304 = vmul.f32 %v1184, %v1233
    %v1305 = vmul.f32 %v1184, %v1237
    %v1306 = vmul.f32 %v1184, %v1241
    %v1307 = vmul.f32 %v1184, %v1245
    %v1308 = vmul.f32 %v1184, %v1249
    %v1309 = vmul.f32 %v1184, %v1253
    %v1310 = vmul.f32 %v1188, %v1225
    %v1311 = vmul.f32 %v1188, %v1229
    %v1312 = vmul.f32 %v1188, %v1233
    %v1313 = vmul.f32 %v1188, %v1237
    %v1314 = vmul.f32 %v1188, %v1241
    %v1315 = vmul.f32 %v1188, %v1245
    %v1316 = vmul.f32 %v1188, %v1249
    %v1317 = vmul.f32 %v1188, %v1253
    %v1318 = vmul.f32 %v1192, %v1225
    %v1319 = vmul.f32 %v1192, %v1229
    %v1320 = vmul.f32 %v1192, %v1233
    %v1321 = vmul.f32 %v1192, %v1237
    %v1322 = vmul.f32 %v1192, %v1241
    %v1323 = vmul.f32 %v1192, %v1245
    %v1324 = vmul.f32 %v1192, %v1249
    %v1325 = vmul.f32 %v1192, %v1253
    %v1326 = vmul.f32 %v1196, %v1225
    %v1327 = vmul.f32 %v1196, %v1229
    %v1328 = vmul.f32 %v1196, %v1233
    %v1329 = vmul.f32 %v1196, %v1237
    %v1330 = vmul.f32 %v1196, %v1241
    %v1331 = vmul.f32 %v1196, %v1245
    %v1332 = vmul.f32 %v1196, %v1249
    %v1333 = vmul.f32 %v1196, %v1253
    %v1334 = vmul.f32 %v1200, %v1225
    %v1335 = vmul.f32 %v1200, %v1229
    %v1336 = vmul.f32 %v1200, %v1233
    %v1337 = vmul.f32 %v1200, %v1237
    %v1338 = vmul.f32 %v1200, %v1241
    %v1339 = vmul.f32 %v1200, %v1245
    %v1340 = vmul.f32 %v1200, %v1249
    %v1341 = vmul.f32 %v1200, %v1253
    %v1342 = vmul.f32 %v1204, %v1225
    %v1343 = vmul.f32 %v1204, %v1229
    %v1344 = vmul.f32 %v1204, %v1233
    %v1345 = vmul.f32 %v1204, %v1237
    %v1346 = vmul.f32 %v1204, %v1241
    %v1347 = vmul.f32 %v1204, %v1245
    %v1348 = vmul.f32 %v1204, %v1249
    %v1349 = vmul.f32 %v1204, %v1253
    %v1350 = vmul.f32 %v1208, %v1225
    %v1351 = vmul.f32 %v1208, %v1229
    %v1352 = vmul.f32 %v1208, %v1233
    %v1353 = vmul.f32 %v1208, %v1237
    %v1354 = vmul.f32 %v1208, %v1241
    %v1355 = vmul.f32 %v1208, %v1245
    %v1356 = vmul.f32 %v1208, %v1249
    %v1357 = vmul.f32 %v1208, %v1253
    %v1358 = vmul.f32 %v1212, %v1225
    %v1359 = vmul.f32 %v1212, %v1229
    %v1360 = vmul.f32 %v1212, %v1233
    %v1361 = vmul.f32 %v1212, %v1237
    %v1362 = vmul.f32 %v1212, %v1241
    %v1363 = vmul.f32 %v1212, %v1245
    %v1364 = vmul.f32 %v1212, %v1249
    %v1365 = vmul.f32 %v1212, %v1253
    %v1366 = vmul.f32 %v1216, %v1225
    %v1367 = vmul.f32 %v1216, %v1229
    %v1368 = vmul.f32 %v1216, %v1233
    %v1369 = vmul.f32 %v1216, %v1237
    %v1370 = vmul.f32 %v1216, %v1241
    %v1371 = vmul.f32 %v1216, %v1245
    %v1372 = vmul.f32 %v1216, %v1249
    %v1373 = vmul.f32 %v1216, %v1253
    %v1374 = vmul.f32 %v1220, %v1225
    %v1375 = vmul.f32 %v1220, %v1229
    %v1376 = vmul.f32 %v1220, %v1233
    %v1377 = vmul.f32 %v1220, %v1237
    %v1378 = vmul.f32 %v1220, %v1241
    %v1379 = vmul.f32 %v1220, %v1245
    %v1380 = vmul.f32 %v1220, %v1249
    %v1381 = vmul.f32 %v1220, %v1253
    %v1382 = vadd.f32 %v1030, %v1254
    %v1383 = vadd.f32 %v1031, %v1255
    %v1384 = vadd.f32 %v1032, %v1256
    %v1385 = vadd.f32 %v1033, %v1257
    %v1386 = vadd.f32 %v1034, %v1258
    %v1387 = vadd.f32 %v1035, %v1259
    %v1388 = vadd.f32 %v1036, %v1260
    %v1389 = vadd.f32 %v1037, %v1261
    %v1390 = vadd.f32 %v1038, %v1262
    %v1391 = vadd.f32 %v1039, %v1263
    %v1392 = vadd.f32 %v1040, %v1264
    %v1393 = vadd.f32 %v1041, %v1265
    %v1394 = vadd.f32 %v1042, %v1266
    %v1395 = vadd.f32 %v1043, %v1267
    %v1396 = vadd.f32 %v1044, %v1268
    %v1397 = vadd.f32 %v1045, %v1269
    %v1398 = vadd.f32 %v1046, %v1270
    %v1399 = vadd.f32 %v1047, %v1271
    %v1400 = vadd.f32 %v1048, %v1272
    %v1401 = vadd.f32 %v1049, %v1273
    %v1402 = vadd.f32 %v1050, %v1274
    %v1403 = vadd.f32 %v1051, %v1275
    %v1404 = vadd.f32 %v1052, %v1276
    %v1405 = vadd.f32 %v1053, %v1277
    %v1406 = vadd.f32 %v1054, %v1278
    %v1407 = vadd.f32 %v1055, %v1279
    %v1408 = vadd.f32 %v1056, %v1280
    %v1409 = vadd.f32 %v1057, %v1281
    %v1410 = vadd.f32 %v1058, %v1282
    %v1411 = vadd.f32 %v1059, %v1283
    %v1412 = vadd.f32 %v1060, %v1284
    %v1413 = vadd.f32 %v1061, %v1285
    %v1414 = vadd.f32 %v1062, %v1286
    %v1415 = vadd.f32 %v1063, %v1287
    %v1416 = vadd.f32 %v1064, %v1288
    %v1417 = vadd.f32 %v1065, %v1289
    %v1418 = vadd.f32 %v1066, %v1290
    %v1419 = vadd.f32 %v1067, %v1291
    %v1420 = vadd.f32 %v1068, %v1292
    %v1421 = vadd.f32 %v1069, %v1293
    %v1422 = vadd.f32 %v1070, %v1294
    %v1423 = vadd.f32 %v1071, %v1295
    %v1424 = vadd.f32 %v1072, %v1296
    %v1425 = vadd.f32 %v1073, %v1297
    %v1426 = vadd.f32 %v1074, %v1298
    %v1427 = vadd.f32 %v1075, %v1299
    %v1428 = vadd.f32 %v1076, %v1300
    %v1429 = vadd.f32 %v1077, %v1301
    %v1430 = vadd.f32 %v1078, %v1302
    %v1431 = vadd.f32 %v1079, %v1303
    %v1432 = vadd.f32 %v1080, %v1304
    %v1433 = vadd.f32 %v1081, %v1305
    %v1434 = vadd.f32 %v1082, %v1306
    %v1435 = vadd.f32 %v1083, %v1307
    %v1436 = vadd.f32 %v1084, %v1308
    %v1437 = vadd.f32 %v1085, %v1309
    %v1438 = vadd.f32 %v1086, %v1310
    %v1439 = vadd.f32 %v1087, %v1311
    %v1440 = vadd.f32 %v1088, %v1312
    %v1441 = vadd.f32 %v1089, %v1313
    %v1442 = vadd.f32 %v1090, %v1314
    %v1443 = vadd.f32 %v1091, %v1315
    %v1444 = vadd.f32 %v1092, %v1316
    %v1445 = vadd.f32 %v1093, %v1317
    %v1446 = vadd.f32 %v1094, %v1318
    %v1447 = vadd.f32 %v1095, %v1319
    %v1448 = vadd.f32 %v1096, %v1320
    %v1449 = vadd.f32 %v1097, %v1321
    %v1450 = vadd.f32 %v1098, %v1322
    %v1451 = vadd.f32 %v1099, %v1323
    %v1452 = vadd.f32 %v1100, %v1324
    %v1453 = vadd.f32 %v1101, %v1325
    %v1454 = vadd.f32 %v1102, %v1326
    %v1455 = vadd.f32 %v1103, %v1327
    %v1456 = vadd.f32 %v1104, %v1328
    %v1457 = vadd.f32 %v1105, %v1329
    %v1458 = vadd.f32 %v1106, %v1330
    %v1459 = vadd.f32 %v1107, %v1331
    %v1460 = vadd.f32 %v1108, %v1332
    %v1461 = vadd.f32 %v1109, %v1333
    %v1462 = vadd.f32 %v1110, %v1334
    %v1463 = vadd.f32 %v1111, %v1335
    %v1464 = vadd.f32 %v1112, %v1336
    %v1465 = vadd.f32 %v1113, %v1337
    %v1466 = vadd.f32 %v1114, %v1338
    %v1467 = vadd.f32 %v1115, %v1339
    %v1468 = vadd.f32 %v1116, %v1340
    %v1469 = vadd.f32 %v1117, %v1341
    %v1470 = vadd.f32 %v1118, %v1342
    %v1471 = vadd.f32 %v1119, %v1343
    %v1472 = vadd.f32 %v1120, %v1344
    %v1473 = vadd.f32 %v1121, %v1345
    %v1474 = vadd.f32 %v1122, %v1346
    %v1475 = vadd.f32 %v1123, %v1347
    %v1476 = vadd.f32 %v1124, %v1348
    %v1477 = vadd.f32 %v1125, %v1349
    %v1478 = vadd.f32 %v1126, %v1350
    %v1479 = vadd.f32 %v1127, %v1351
    %v1480 = vadd.f32 %v1128, %v1352
    %v1481 = vadd.f32 %v1129, %v1353
    %v1482 = vadd.f32 %v1130, %v1354
    %v1483 = vadd.f32 %v1131, %v1355
    %v1484 = vadd.f32 %v1132, %v1356
    %v1485 = vadd.f32 %v1133, %v1357
    %v1486 = vadd.f32 %v1134, %v1358
    %v1487 = vadd.f32 %v1135, %v1359
    %v1488 = vadd.f32 %v1136, %v1360
    %v1489 = vadd.f32 %v1137, %v1361
    %v1490 = vadd.f32 %v1138, %v1362
    %v1491 = vadd.f32 %v1139, %v1363
    %v1492 = vadd.f32 %v1140, %v1364
    %v1493 = vadd.f32 %v1141, %v1365
    %v1494 = vadd.f32 %v1142, %v1366
    %v1495 = vadd.f32 %v1143, %v1367
    %v1496 = vadd.f32 %v1144, %v1368
    %v1497 = vadd.f32 %v1145, %v1369
    %v1498 = vadd.f32 %v1146, %v1370
    %v1499 = vadd.f32 %v1147, %v1371
    %v1500 = vadd.f32 %v1148, %v1372
    %v1501 = vadd.f32 %v1149, %v1373
    %v1502 = vadd.f32 %v1150, %v1374
    %v1503 = vadd.f32 %v1151, %v1375
    %v1504 = vadd.f32 %v1152, %v1376
    %v1505 = vadd.f32 %v1153, %v1377
    %v1506 = vadd.f32 %v1154, %v1378
    %v1507 = vadd.f32 %v1155, %v1379
    %v1508 = vadd.f32 %v1156, %v1380
    %v1509 = vadd.f32 %v1157, %v1381
    %v1510 = vmax.f32 %v1382, 0.0
    %v1511 = vmax.f32 %v1383, 0.0
    %v1512 = vmax.f32 %v1384, 0.0
    %v1513 = vmax.f32 %v1385, 0.0
    %v1514 = vmax.f32 %v1386, 0.0
    %v1515 = vmax.f32 %v1387, 0.0
    %v1516 = vmax.f32 %v1388, 0.0
    %v1517 = vmax.f32 %v1389, 0.0
    %v1518 = vmax.f32 %v1390, 0.0
    %v1519 = vmax.f32 %v1391, 0.0
    %v1520 = vmax.f32 %v1392, 0.0
    %v1521 = vmax.f32 %v1393, 0.0
    %v1522 = vmax.f32 %v1394, 0.0
    %v1523 = vmax.f32 %v1395, 0.0
    %v1524 = vmax.f32 %v1396, 0.0
    %v1525 = vmax.f32 %v1397, 0.0
    %v1526 = vmax.f32 %v1398, 0.0
    %v1527 = vmax.f32 %v1399, 0.0
    %v1528 = vmax.f32 %v1400, 0.0
    %v1529 = vmax.f32 %v1401, 0.0
    %v1530 = vmax.f32 %v1402, 0.0
    %v1531 = vmax.f32 %v1403, 0.0
    %v1532 = vmax.f32 %v1404, 0.0
    %v1533 = vmax.f32 %v1405, 0.0
    %v1534 = vmax.f32 %v1406, 0.0
    %v1535 = vmax.f32 %v1407, 0.0
    %v1536 = vmax.f32 %v1408, 0.0
    %v1537 = vmax.f32 %v1409, 0.0
    %v1538 = vmax.f32 %v1410, 0.0
    %v1539 = vmax.f32 %v1411, 0.0
    %v1540 = vmax.f32 %v1412, 0.0
    %v1541 = vmax.f32 %v1413, 0.0
    %v1542 = vmax.f32 %v1414, 0.0
    %v1543 = vmax.f32 %v1415, 0.0
    %v1544 = vmax.f32 %v1416, 0.0
    %v1545 = vmax.f32 %v1417, 0.0
    %v1546 = vmax.f32 %v1418, 0.0
    %v1547 = vmax.f32 %v1419, 0.0
    %v1548 = vmax.f32 %v1420, 0.0
    %v1549 = vmax.f32 %v1421, 0.0
    %v1550 = vmax.f32 %v1422, 0.0
    %v1551 = vmax.f32 %v1423, 0.0
    %v1552 = vmax.f32 %v1424, 0.0
    %v1553 = vmax.f32 %v1425, 0.0
    %v1554 = vmax.f32 %v1426, 0.0
    %v1555 = vmax.f32 %v1427, 0.0
    %v1556 = vmax.f32 %v1428, 0.0
    %v1557 = vmax.f32 %v1429, 0.0
    %v1558 = vmax.f32 %v1430, 0.0
    %v1559 = vmax.f32 %v1431, 0.0
    %v1560 = vmax.f32 %v1432, 0.0
    %v1561 = vmax.f32 %v1433, 0.0
    %v1562 = vmax.f32 %v1434, 0.0
    %v1563 = vmax.f32 %v1435, 0.0
    %v1564 = vmax.f32 %v1436, 0.0
    %v1565 = vmax.f32 %v1437, 0.0
    %v1566 = vmax.f32 %v1438, 0.0
    %v1567 = vmax.f32 %v1439, 0.0
    %v1568 = vmax.f32 %v1440, 0.0
    %v1569 = vmax.f32 %v1441, 0.0
    %v1570 = vmax.f32 %v1442, 0.0
    %v1571 = vmax.f32 %v1443, 0.0
    %v1572 = vmax.f32 %v1444, 0.0
    %v1573 = vmax.f32 %v1445, 0.0
    %v1574 = vmax.f32 %v1446, 0.0
    %v1575 = vmax.f32 %v1447, 0.0
    %v1576 = vmax.f32 %v1448, 0.0
    %v1577 = vmax.f32 %v1449, 0.0
    %v1578 = vmax.f32 %v1450, 0.0
    %v1579 = vmax.f32 %v1451, 0.0
    %v1580 = vmax.f32 %v1452, 0.0
    %v1581 = vmax.f32 %v1453, 0.0
    %v1582 = vmax.f32 %v1454, 0.0
    %v1583 = vmax.f32 %v1455, 0.0
    %v1584 = vmax.f32 %v1456, 0.0
    %v1585 = vmax.f32 %v1457, 0.0
    %v1586 = vmax.f32 %v1458, 0.0
    %v1587 = vmax.f32 %v1459, 0.0
    %v1588 = vmax.f32 %v1460, 0.0
    %v1589 = vmax.f32 %v1461, 0.0
    %v1590 = vmax.f32 %v1462, 0.0
    %v1591 = vmax.f32 %v1463, 0.0
    %v1592 = vmax.f32 %v1464, 0.0
    %v1593 = vmax.f32 %v1465, 0.0
    %v1594 = vmax.f32 %v1466, 0.0
    %v1595 = vmax.f32 %v1467, 0.0
    %v1596 = vmax.f32 %v1468, 0.0
    %v1597 = vmax.f32 %v1469, 0.0
    %v1598 = vmax.f32 %v1470, 0.0
    %v1599 = vmax.f32 %v1471, 0.0
    %v1600 = vmax.f32 %v1472, 0.0
    %v1601 = vmax.f32 %v1473, 0.0
    %v1602 = vmax.f32 %v1474, 0.0
    %v1603 = vmax.f32 %v1475, 0.0
    %v1604 = vmax.f32 %v1476, 0.0
    %v1605 = vmax.f32 %v1477, 0.0
    %v1606 = vmax.f32 %v1478, 0.0
    %v1607 = vmax.f32 %v1479, 0.0
    %v1608 = vmax.f32 %v1480, 0.0
    %v1609 = vmax.f32 %v1481, 0.0
    %v1610 = vmax.f32 %v1482, 0.0
    %v1611 = vmax.f32 %v1483, 0.0
    %v1612 = vmax.f32 %v1484, 0.0
    %v1613 = vmax.f32 %v1485, 0.0
    %v1614 = vmax.f32 %v1486, 0.0
    %v1615 = vmax.f32 %v1487, 0.0
    %v1616 = vmax.f32 %v1488, 0.0
    %v1617 = vmax.f32 %v1489, 0.0
    %v1618 = vmax.f32 %v1490, 0.0
    %v1619 = vmax.f32 %v1491, 0.0
    %v1620 = vmax.f32 %v1492, 0.0
    %v1621 = vmax.f32 %v1493, 0.0
    %v1622 = vmax.f32 %v1494, 0.0
    %v1623 = vmax.f32 %v1495, 0.0
    %v1624 = vmax.f32 %v1496, 0.0
    %v1625 = vmax.f32 %v1497, 0.0
    %v1626 = vmax.f32 %v1498, 0.0
    %v1627 = vmax.f32 %v1499, 0.0
    %v1628 = vmax.f32 %v1500, 0.0
    %v1629 = vmax.f32 %v1501, 0.0
    %v1630 = vmax.f32 %v1502, 0.0
    %v1631 = vmax.f32 %v1503, 0.0
    %v1632 = vmax.f32 %v1504, 0.0
    %v1633 = vmax.f32 %v1505, 0.0
    %v1634 = vmax.f32 %v1506, 0.0
    %v1635 = vmax.f32 %v1507, 0.0
    %v1636 = vmax.f32 %v1508, 0.0
    %v1637 = vmax.f32 %v1509, 0.0
    %v1638 = vpack.c.bf16 %v1518, %v1510
    %v1639 = vpack.c.bf16 %v1519, %v1511
    %v1640 = vpack.c.bf16 %v1520, %v1512
    %v1641 = vpack.c.bf16 %v1521, %v1513
    %v1642 = vpack.c.bf16 %v1522, %v1514
    %v1643 = vpack.c.bf16 %v1523, %v1515
    %v1644 = vpack.c.bf16 %v1524, %v1516
    %v1645 = vpack.c.bf16 %v1525, %v1517
    %v1646 = vpack.c.bf16 %v1534, %v1526
    %v1647 = vpack.c.bf16 %v1535, %v1527
    %v1648 = vpack.c.bf16 %v1536, %v1528
    %v1649 = vpack.c.bf16 %v1537, %v1529
    %v1650 = vpack.c.bf16 %v1538, %v1530
    %v1651 = vpack.c.bf16 %v1539, %v1531
    %v1652 = vpack.c.bf16 %v1540, %v1532
    %v1653 = vpack.c.bf16 %v1541, %v1533
    %v1654 = vpack.c.bf16 %v1550, %v1542
    %v1655 = vpack.c.bf16 %v1551, %v1543
    %v1656 = vpack.c.bf16 %v1552, %v1544
    %v1657 = vpack.c.bf16 %v1553, %v1545
    %v1658 = vpack.c.bf16 %v1554, %v1546
    %v1659 = vpack.c.bf16 %v1555, %v1547
    %v1660 = vpack.c.bf16 %v1556, %v1548
    %v1661 = vpack.c.bf16 %v1557, %v1549
    %v1662 = vpack.c.bf16 %v1566, %v1558
    %v1663 = vpack.c.bf16 %v1567, %v1559
    %v1664 = vpack.c.bf16 %v1568, %v1560
    %v1665 = vpack.c.bf16 %v1569, %v1561
    %v1666 = vpack.c.bf16 %v1570, %v1562
    %v1667 = vpack.c.bf16 %v1571, %v1563
    %v1668 = vpack.c.bf16 %v1572, %v1564
    %v1669 = vpack.c.bf16 %v1573, %v1565
    %v1670 = vpack.c.bf16 %v1582, %v1574
    %v1671 = vpack.c.bf16 %v1583, %v1575
    %v1672 = vpack.c.bf16 %v1584, %v1576
    %v1673 = vpack.c.bf16 %v1585, %v1577
    %v1674 = vpack.c.bf16 %v1586, %v1578
    %v1675 = vpack.c.bf16 %v1587, %v1579
    %v1676 = vpack.c.bf16 %v1588, %v1580
    %v1677 = vpack.c.bf16 %v1589, %v1581
    %v1678 = vpack.c.bf16 %v1598, %v1590
    %v1679 = vpack.c.bf16 %v1599, %v1591
    %v1680 = vpack.c.bf16 %v1600, %v1592
    %v1681 = vpack.c.bf16 %v1601, %v1593
    %v1682 = vpack.c.bf16 %v1602, %v1594
    %v1683 = vpack.c.bf16 %v1603, %v1595
    %v1684 = vpack.c.bf16 %v1604, %v1596
    %v1685 = vpack.c.bf16 %v1605, %v1597
    %v1686 = vpack.c.bf16 %v1614, %v1606
    %v1687 = vpack.c.bf16 %v1615, %v1607
    %v1688 = vpack.c.bf16 %v1616, %v1608
    %v1689 = vpack.c.bf16 %v1617, %v1609
    %v1690 = vpack.c.bf16 %v1618, %v1610
    %v1691 = vpack.c.bf16 %v1619, %v1611
    %v1692 = vpack.c.bf16 %v1620, %v1612
    %v1693 = vpack.c.bf16 %v1621, %v1613
    %v1694 = vpack.c.bf16 %v1630, %v1622
    %v1695 = vpack.c.bf16 %v1631, %v1623
    %v1696 = vpack.c.bf16 %v1632, %v1624
    %v1697 = vpack.c.bf16 %v1633, %v1625
    %v1698 = vpack.c.bf16 %v1634, %v1626
    %v1699 = vpack.c.bf16 %v1635, %v1627
    %v1700 = vpack.c.bf16 %v1636, %v1628
    %v1701 = vpack.c.bf16 %v1637, %v1629
    %v1702 = vld [vmem:[#allocation2 + $0x40] sm:$0xff]
    %v1703 = vld [vmem:[#allocation2 + $0x48] sm:$0xf]
    %v1704 = vld [vmem:[#allocation2 + $0x60] sm:$0xff]
    %v1705 = vld [vmem:[#allocation2 + $0x68] sm:$0xf]
    %v1706 = vld [vmem:[#allocation2 + $0x80] sm:$0xff]
    %v1707 = vld [vmem:[#allocation2 + $0x88] sm:$0xf]
    %v1708 = vld [vmem:[#allocation2 + $0xa0] sm:$0xff]
    %v1709 = vld [vmem:[#allocation2 + $0xa8] sm:$0xf]
    %v1710 = vld [vmem:[#allocation2 + $0xc0] sm:$0xff]
    %v1711 = vld [vmem:[#allocation2 + $0xc8] sm:$0xf]
    %v1712 = vld [vmem:[#allocation2 + $0xe0] sm:$0xff]
    %v1713 = vld [vmem:[#allocation2 + $0xe8] sm:$0xf]
    %v1714 = vld [vmem:[#allocation2 + $0x100] sm:$0xff]
    %v1715 = vld [vmem:[#allocation2 + $0x108] sm:$0xf]
    %v1716 = vld [vmem:[#allocation2 + $0x120] sm:$0xff]
    %v1717 = vld [vmem:[#allocation2 + $0x128] sm:$0xf]
    %v1718 = vld [vmem:[#allocation2 + $0x140] sm:$0xff]
    %v1719 = vld [vmem:[#allocation2 + $0x148] sm:$0xf]
    %v1720 = vld [vmem:[#allocation2 + $0x160] sm:$0xff]
    %v1721 = vld [vmem:[#allocation2 + $0x168] sm:$0xf]
    %v1722 = vld [vmem:[#allocation2 + $0x180] sm:$0xff]
    %v1723 = vld [vmem:[#allocation2 + $0x188] sm:$0xf]
    %v1724 = vld [vmem:[#allocation2 + $0x1a0] sm:$0xff]
    %v1725 = vld [vmem:[#allocation2 + $0x1a8] sm:$0xf]
    %v1726 = vld [vmem:[#allocation2 + $0x1c0] sm:$0xff]
    %v1727 = vld [vmem:[#allocation2 + $0x1c8] sm:$0xf]
    %v1728 = vld [vmem:[#allocation2 + $0x1e0] sm:$0xff]
    %v1729 = vld [vmem:[#allocation2 + $0x1e8] sm:$0xf]
    %v1730 = vld [vmem:[#allocation2 + $0x200] sm:$0xff]
    %v1731 = vld [vmem:[#allocation2 + $0x208] sm:$0xf]
    %v1732 = vld [vmem:[#allocation2 + $0x220] sm:$0xff]
    %v1733 = vld [vmem:[#allocation2 + $0x228] sm:$0xf]
    %v1734 = vld [vmem:[#allocation2 + $0x240] sm:$0xff]
    %v1735 = vld [vmem:[#allocation2 + $0x248] sm:$0xf]
    %v1736 = vld [vmem:[#allocation2 + $0x260] sm:$0xff]
    %v1737 = vld [vmem:[#allocation2 + $0x268] sm:$0xf]
    %v1738 = vld [vmem:[#allocation2 + $0x280] sm:$0xff]
    %v1739 = vld [vmem:[#allocation2 + $0x288] sm:$0xf]
    %v1740 = vld [vmem:[#allocation2 + $0x2a0] sm:$0xff]
    %v1741 = vld [vmem:[#allocation2 + $0x2a8] sm:$0xf]
    %v1742 = vld [vmem:[#allocation2 + $0x2c0] sm:$0xff]
    %v1743 = vld [vmem:[#allocation2 + $0x2c8] sm:$0xf]
    %v1744 = vld [vmem:[#allocation2 + $0x2e0] sm:$0xff]
    %v1745 = vld [vmem:[#allocation2 + $0x2e8] sm:$0xf]
    %v1746 = vld [vmem:[#allocation2 + $0x300] sm:$0xff]
    %v1747 = vld [vmem:[#allocation2 + $0x308] sm:$0xf]
    %v1748 = vld [vmem:[#allocation2 + $0x320] sm:$0xff]
    %v1749 = vld [vmem:[#allocation2 + $0x328] sm:$0xf]
    %v1750 = vld [vmem:[#allocation2 + $0x340] sm:$0xff]
    %v1751 = vld [vmem:[#allocation2 + $0x348] sm:$0xf]
    %v1752 = vld [vmem:[#allocation2 + $0x360] sm:$0xff]
    %v1753 = vld [vmem:[#allocation2 + $0x368] sm:$0xf]
    %v1754 = vld [vmem:[#allocation2 + $0x380] sm:$0xff]
    %v1755 = vld [vmem:[#allocation2 + $0x388] sm:$0xf]
    %v1756 = vld [vmem:[#allocation2 + $0x3a0] sm:$0xff]
    %v1757 = vld [vmem:[#allocation2 + $0x3a8] sm:$0xf]
    %v1758 = vld [vmem:[#allocation2 + $0x3c0] sm:$0xff]
    %v1759 = vld [vmem:[#allocation2 + $0x3c8] sm:$0xf]
    %v1760 = vld [vmem:[#allocation2 + $0x3e0] sm:$0xff]
    %v1761 = vld [vmem:[#allocation2 + $0x3e8] sm:$0xf]
    %v1762 = vld [vmem:[#allocation2 + $0x400] sm:$0xff]
    %v1763 = vld [vmem:[#allocation2 + $0x408] sm:$0xf]
    %v1764 = vld [vmem:[#allocation2 + $0x420] sm:$0xff]
    %v1765 = vld [vmem:[#allocation2 + $0x428] sm:$0xf]
    %v1766 = vld [vmem:[#allocation2 + $0x440] sm:$0xff]
    %v1767 = vld [vmem:[#allocation2 + $0x448] sm:$0xf]
    %v1768 = vld [vmem:[#allocation2 + $0x460] sm:$0xff]
    %v1769 = vld [vmem:[#allocation2 + $0x468] sm:$0xf]
    %v1770 = vld [vmem:[#allocation2 + $0x480] sm:$0xff]
    %v1771 = vld [vmem:[#allocation2 + $0x488] sm:$0xf]
    %v1772 = vld [vmem:[#allocation2 + $0x4a0] sm:$0xff]
    %v1773 = vld [vmem:[#allocation2 + $0x4a8] sm:$0xf]
    %v1774 = vld [vmem:[#allocation2 + $0x4c0] sm:$0xff]
    %v1775 = vld [vmem:[#allocation2 + $0x4c8] sm:$0xf]
    %v1776 = vld [vmem:[#allocation2 + $0x4e0] sm:$0xff]
    %v1777 = vld [vmem:[#allocation2 + $0x4e8] sm:$0xf]
    %v1778 = vld [vmem:[#allocation2 + $0x500] sm:$0xff]
    %v1779 = vld [vmem:[#allocation2 + $0x508] sm:$0xf]
    %v1780 = vld [vmem:[#allocation2 + $0x520] sm:$0xff]
    %v1781 = vld [vmem:[#allocation2 + $0x528] sm:$0xf]
    %v1782 = vld [vmem:[#allocation2 + $0x540] sm:$0xff]
    %v1783 = vld [vmem:[#allocation2 + $0x548] sm:$0xf]
    %v1784 = vld [vmem:[#allocation2 + $0x560] sm:$0xff]
    %v1785 = vld [vmem:[#allocation2 + $0x568] sm:$0xf]
    %v1786 = vld [vmem:[#allocation2 + $0x580] sm:$0xff]
    %v1787 = vld [vmem:[#allocation2 + $0x588] sm:$0xf]
    %v1788 = vld [vmem:[#allocation2 + $0x5a0] sm:$0xff]
    %v1789 = vld [vmem:[#allocation2 + $0x5a8] sm:$0xf]
    %v1790 = vld [vmem:[#allocation2 + $0x5c0] sm:$0xff]
    %v1791 = vld [vmem:[#allocation2 + $0x5c8] sm:$0xf]
    %v1792 = vld [vmem:[#allocation2 + $0x5e0] sm:$0xff]
    %v1793 = vld [vmem:[#allocation2 + $0x5e8] sm:$0xf]
    %v1794 = vld [vmem:[#allocation2 + $0x600] sm:$0xff]
    %v1795 = vld [vmem:[#allocation2 + $0x608] sm:$0xf]
    %v1796 = vld [vmem:[#allocation2 + $0x620] sm:$0xff]
    %v1797 = vld [vmem:[#allocation2 + $0x628] sm:$0xf]
    %v1798 = vld [vmem:[#allocation2 + $0x640] sm:$0xff]
    %v1799 = vld [vmem:[#allocation2 + $0x648] sm:$0xf]
    %v1800 = vld [vmem:[#allocation2 + $0x660] sm:$0xff]
    %v1801 = vld [vmem:[#allocation2 + $0x668] sm:$0xf]
    %v1802 = vld [vmem:[#allocation2 + $0x680] sm:$0xff]
    %v1803 = vld [vmem:[#allocation2 + $0x688] sm:$0xf]
    %v1804 = vld [vmem:[#allocation2 + $0x6a0] sm:$0xff]
    %v1805 = vld [vmem:[#allocation2 + $0x6a8] sm:$0xf]
    %v1806 = vld [vmem:[#allocation2 + $0x6c0] sm:$0xff]
    %v1807 = vld [vmem:[#allocation2 + $0x6c8] sm:$0xf]
    %v1808 = vld [vmem:[#allocation2 + $0x6e0] sm:$0xff]
    %v1809 = vld [vmem:[#allocation2 + $0x6e8] sm:$0xf]
    %v1810 = vld [vmem:[#allocation2 + $0x700] sm:$0xff]
    %v1811 = vld [vmem:[#allocation2 + $0x708] sm:$0xf]
    %v1812 = vld [vmem:[#allocation2 + $0x720] sm:$0xff]
    %v1813 = vld [vmem:[#allocation2 + $0x728] sm:$0xf]
    %v1814 = vld [vmem:[#allocation2 + $0x740] sm:$0xff]
    %v1815 = vld [vmem:[#allocation2 + $0x748] sm:$0xf]
    %v1816 = vld [vmem:[#allocation2 + $0x760] sm:$0xff]
    %v1817 = vld [vmem:[#allocation2 + $0x768] sm:$0xf]
    %v1818 = vld [vmem:[#allocation2 + $0x780] sm:$0xff]
    %v1819 = vld [vmem:[#allocation2 + $0x788] sm:$0xf]
    %v1820 = vld [vmem:[#allocation2 + $0x7a0] sm:$0xff]
    %v1821 = vld [vmem:[#allocation2 + $0x7a8] sm:$0xf]
    %v1822 = vld [vmem:[#allocation2 + $0x7c0] sm:$0xff]
    %v1823 = vld [vmem:[#allocation2 + $0x7c8] sm:$0xf]
    %v1824 = vld [vmem:[#allocation2 + $0x7e0] sm:$0xff]
    %v1825 = vld [vmem:[#allocation2 + $0x7e8] sm:$0xf]
    %v1826 = vld [vmem:[#allocation2 + $0x800] sm:$0xff]
    %v1827 = vld [vmem:[#allocation2 + $0x808] sm:$0xf]
    %v1828 = vld [vmem:[#allocation2 + $0x820] sm:$0xff]
    %v1829 = vld [vmem:[#allocation2 + $0x828] sm:$0xf]
    %v1830 = vlaneseq
    %v1831 = vshrl.u32 %v1830, 7
    %v1832 = vsub.s32 5, %v1831
    %v1833 = vrot.slane %v46, %v1832
    %v1834 = vlaneseq
    %v1835 = vshrl.u32 %v1834, 7
    %v1836 = vsub.s32 5, %v1835
    %v1837 = vrot.slane %v47, %v1836
    %v1838 = vlaneseq
    %v1839 = vshrl.u32 %v1838, 7
    %v1840 = vsub.s32 5, %v1839
    %v1841 = vrot.slane %v48, %v1840
    %v1970 = vunpack.c.l.b16 %v1702
    %v1971 = vunpack.c.h.b16 %v1702
    %v1972 = vunpack.c.l.b16 %v1703
    %v1973 = vunpack.c.l.b16 %v1704
    %v1974 = vunpack.c.h.b16 %v1704
    %v1975 = vunpack.c.l.b16 %v1705
    %v1976 = vunpack.c.l.b16 %v1706
    %v1977 = vunpack.c.h.b16 %v1706
    %v1978 = vunpack.c.l.b16 %v1707
    %v1979 = vunpack.c.l.b16 %v1708
    %v1980 = vunpack.c.h.b16 %v1708
    %v1981 = vunpack.c.l.b16 %v1709
    %v1982 = vunpack.c.l.b16 %v1710
    %v1983 = vunpack.c.h.b16 %v1710
    %v1984 = vunpack.c.l.b16 %v1711
    %v1985 = vunpack.c.l.b16 %v1712
    %v1986 = vunpack.c.h.b16 %v1712
    %v1987 = vunpack.c.l.b16 %v1713
    %v1988 = vunpack.c.l.b16 %v1714
    %v1989 = vunpack.c.h.b16 %v1714
    %v1990 = vunpack.c.l.b16 %v1715
    %v1991 = vunpack.c.l.b16 %v1716
    %v1992 = vunpack.c.h.b16 %v1716
    %v1993 = vunpack.c.l.b16 %v1717
    %v1994 = vunpack.c.l.b16 %v1718
    %v1995 = vunpack.c.h.b16 %v1718
    %v1996 = vunpack.c.l.b16 %v1719
    %v1997 = vunpack.c.l.b16 %v1720
    %v1998 = vunpack.c.h.b16 %v1720
    %v1999 = vunpack.c.l.b16 %v1721
    %v2000 = vunpack.c.l.b16 %v1722
    %v2001 = vunpack.c.h.b16 %v1722
    %v2002 = vunpack.c.l.b16 %v1723
    %v2003 = vunpack.c.l.b16 %v1724
    %v2004 = vunpack.c.h.b16 %v1724
    %v2005 = vunpack.c.l.b16 %v1725
    %v2006 = vunpack.c.l.b16 %v1726
    %v2007 = vunpack.c.h.b16 %v1726
    %v2008 = vunpack.c.l.b16 %v1727
    %v2009 = vunpack.c.l.b16 %v1728
    %v2010 = vunpack.c.h.b16 %v1728
    %v2011 = vunpack.c.l.b16 %v1729
    %v2012 = vunpack.c.l.b16 %v1730
    %v2013 = vunpack.c.h.b16 %v1730
    %v2014 = vunpack.c.l.b16 %v1731
    %v2015 = vunpack.c.l.b16 %v1732
    %v2016 = vunpack.c.h.b16 %v1732
    %v2017 = vunpack.c.l.b16 %v1733
    %v2018 = vunpack.c.l.b16 %v1734
    %v2019 = vunpack.c.h.b16 %v1734
    %v2020 = vunpack.c.l.b16 %v1735
    %v2021 = vunpack.c.l.b16 %v1736
    %v2022 = vunpack.c.h.b16 %v1736
    %v2023 = vunpack.c.l.b16 %v1737
    %v2024 = vunpack.c.l.b16 %v1738
    %v2025 = vunpack.c.h.b16 %v1738
    %v2026 = vunpack.c.l.b16 %v1739
    %v2027 = vunpack.c.l.b16 %v1740
    %v2028 = vunpack.c.h.b16 %v1740
    %v2029 = vunpack.c.l.b16 %v1741
    %v2030 = vunpack.c.l.b16 %v1742
    %v2031 = vunpack.c.h.b16 %v1742
    %v2032 = vunpack.c.l.b16 %v1743
    %v2033 = vunpack.c.l.b16 %v1744
    %v2034 = vunpack.c.h.b16 %v1744
    %v2035 = vunpack.c.l.b16 %v1745
    %v2036 = vunpack.c.l.b16 %v1746
    %v2037 = vunpack.c.h.b16 %v1746
    %v2038 = vunpack.c.l.b16 %v1747
    %v2039 = vunpack.c.l.b16 %v1748
    %v2040 = vunpack.c.h.b16 %v1748
    %v2041 = vunpack.c.l.b16 %v1749
    %v2042 = vunpack.c.l.b16 %v1750
    %v2043 = vunpack.c.h.b16 %v1750
    %v2044 = vunpack.c.l.b16 %v1751
    %v2045 = vunpack.c.l.b16 %v1752
    %v2046 = vunpack.c.h.b16 %v1752
    %v2047 = vunpack.c.l.b16 %v1753
    %v2048 = vunpack.c.l.b16 %v1754
    %v2049 = vunpack.c.h.b16 %v1754
    %v2050 = vunpack.c.l.b16 %v1755
    %v2051 = vunpack.c.l.b16 %v1756
    %v2052 = vunpack.c.h.b16 %v1756
    %v2053 = vunpack.c.l.b16 %v1757
    %v2054 = vunpack.c.l.b16 %v1758
    %v2055 = vunpack.c.h.b16 %v1758
    %v2056 = vunpack.c.l.b16 %v1759
    %v2057 = vunpack.c.l.b16 %v1760
    %v2058 = vunpack.c.h.b16 %v1760
    %v2059 = vunpack.c.l.b16 %v1761
    %v2060 = vunpack.c.l.b16 %v1762
    %v2061 = vunpack.c.h.b16 %v1762
    %v2062 = vunpack.c.l.b16 %v1763
    %v2063 = vunpack.c.l.b16 %v1764
    %v2064 = vunpack.c.h.b16 %v1764
    %v2065 = vunpack.c.l.b16 %v1765
    %v2066 = vunpack.c.l.b16 %v1766
    %v2067 = vunpack.c.h.b16 %v1766
    %v2068 = vunpack.c.l.b16 %v1767
    %v2069 = vunpack.c.l.b16 %v1768
    %v2070 = vunpack.c.h.b16 %v1768
    %v2071 = vunpack.c.l.b16 %v1769
    %v2072 = vunpack.c.l.b16 %v1770
    %v2073 = vunpack.c.h.b16 %v1770
    %v2074 = vunpack.c.l.b16 %v1771
    %v2075 = vunpack.c.l.b16 %v1772
    %v2076 = vunpack.c.h.b16 %v1772
    %v2077 = vunpack.c.l.b16 %v1773
    %v2078 = vunpack.c.l.b16 %v1774
    %v2079 = vunpack.c.h.b16 %v1774
    %v2080 = vunpack.c.l.b16 %v1775
    %v2081 = vunpack.c.l.b16 %v1776
    %v2082 = vunpack.c.h.b16 %v1776
    %v2083 = vunpack.c.l.b16 %v1777
    %v2084 = vunpack.c.l.b16 %v1778
    %v2085 = vunpack.c.h.b16 %v1778
    %v2086 = vunpack.c.l.b16 %v1779
    %v2087 = vunpack.c.l.b16 %v1780
    %v2088 = vunpack.c.h.b16 %v1780
    %v2089 = vunpack.c.l.b16 %v1781
    %v2090 = vunpack.c.l.b16 %v1782
    %v2091 = vunpack.c.h.b16 %v1782
    %v2092 = vunpack.c.l.b16 %v1783
    %v2093 = vunpack.c.l.b16 %v1784
    %v2094 = vunpack.c.h.b16 %v1784
    %v2095 = vunpack.c.l.b16 %v1785
    %v2096 = vunpack.c.l.b16 %v1786
    %v2097 = vunpack.c.h.b16 %v1786
    %v2098 = vunpack.c.l.b16 %v1787
    %v2099 = vunpack.c.l.b16 %v1788
    %v2100 = vunpack.c.h.b16 %v1788
    %v2101 = vunpack.c.l.b16 %v1789
    %v2102 = vunpack.c.l.b16 %v1790
    %v2103 = vunpack.c.h.b16 %v1790
    %v2104 = vunpack.c.l.b16 %v1791
    %v2105 = vunpack.c.l.b16 %v1792
    %v2106 = vunpack.c.h.b16 %v1792
    %v2107 = vunpack.c.l.b16 %v1793
    %v2108 = vunpack.c.l.b16 %v1794
    %v2109 = vunpack.c.h.b16 %v1794
    %v2110 = vunpack.c.l.b16 %v1795
    %v2111 = vunpack.c.l.b16 %v1796
    %v2112 = vunpack.c.h.b16 %v1796
    %v2113 = vunpack.c.l.b16 %v1797
    %v2114 = vunpack.c.l.b16 %v1798
    %v2115 = vunpack.c.h.b16 %v1798
    %v2116 = vunpack.c.l.b16 %v1799
    %v2117 = vunpack.c.l.b16 %v1800
    %v2118 = vunpack.c.h.b16 %v1800
    %v2119 = vunpack.c.l.b16 %v1801
    %v2120 = vunpack.c.l.b16 %v1802
    %v2121 = vunpack.c.h.b16 %v1802
    %v2122 = vunpack.c.l.b16 %v1803
    %v2123 = vunpack.c.l.b16 %v1804
    %v2124 = vunpack.c.h.b16 %v1804
    %v2125 = vunpack.c.l.b16 %v1805
    %v2126 = vunpack.c.l.b16 %v1806
    %v2127 = vunpack.c.h.b16 %v1806
    %v2128 = vunpack.c.l.b16 %v1807
    %v2129 = vunpack.c.l.b16 %v1808
    %v2130 = vunpack.c.h.b16 %v1808
    %v2131 = vunpack.c.l.b16 %v1809
    %v2132 = vunpack.c.l.b16 %v1810
    %v2133 = vunpack.c.h.b16 %v1810
    %v2134 = vunpack.c.l.b16 %v1811
    %v2135 = vunpack.c.l.b16 %v1812
    %v2136 = vunpack.c.h.b16 %v1812
    %v2137 = vunpack.c.l.b16 %v1813
    %v2138 = vunpack.c.l.b16 %v1814
    %v2139 = vunpack.c.h.b16 %v1814
    %v2140 = vunpack.c.l.b16 %v1815
    %v2141 = vunpack.c.l.b16 %v1816
    %v2142 = vunpack.c.h.b16 %v1816
    %v2143 = vunpack.c.l.b16 %v1817
    %v2144 = vunpack.c.l.b16 %v1818
    %v2145 = vunpack.c.h.b16 %v1818
    %v2146 = vunpack.c.l.b16 %v1819
    %v2147 = vunpack.c.l.b16 %v1820
    %v2148 = vunpack.c.h.b16 %v1820
    %v2149 = vunpack.c.l.b16 %v1821
    %v2150 = vunpack.c.l.b16 %v1822
    %v2151 = vunpack.c.h.b16 %v1822
    %v2152 = vunpack.c.l.b16 %v1823
    %v2153 = vunpack.c.l.b16 %v1824
    %v2154 = vunpack.c.h.b16 %v1824
    %v2155 = vunpack.c.l.b16 %v1825
    %v2156 = vunpack.c.l.b16 %v1826
    %v2157 = vunpack.c.h.b16 %v1826
    %v2158 = vunpack.c.l.b16 %v1827
    %v2159 = vunpack.c.l.b16 %v1828
    %v2160 = vunpack.c.h.b16 %v1828
    %v2161 = vunpack.c.l.b16 %v1829
    %v2162 = vpack.c.b16 %v1973, %v1970
    %v2163 = vpack.c.b16 %v1974, %v1971
    %v2164 = vpack.c.b16 %v1975, %v1972
    %v2165 = vpack.c.b16 %v1979, %v1976
    %v2166 = vpack.c.b16 %v1980, %v1977
    %v2167 = vpack.c.b16 %v1981, %v1978
    %v2168 = vpack.c.b16 %v1985, %v1982
    %v2169 = vpack.c.b16 %v1986, %v1983
    %v2170 = vpack.c.b16 %v1987, %v1984
    %v2171 = vpack.c.b16 %v1991, %v1988
    %v2172 = vpack.c.b16 %v1992, %v1989
    %v2173 = vpack.c.b16 %v1993, %v1990
    %v2174 = vpack.c.b16 %v1997, %v1994
    %v2175 = vpack.c.b16 %v1998, %v1995
    %v2176 = vpack.c.b16 %v1999, %v1996
    %v2177 = vpack.c.b16 %v2003, %v2000
    %v2178 = vpack.c.b16 %v2004, %v2001
    %v2179 = vpack.c.b16 %v2005, %v2002
    %v2180 = vpack.c.b16 %v2009, %v2006
    %v2181 = vpack.c.b16 %v2010, %v2007
    %v2182 = vpack.c.b16 %v2011, %v2008
    %v2183 = vpack.c.b16 %v2015, %v2012
    %v2184 = vpack.c.b16 %v2016, %v2013
    %v2185 = vpack.c.b16 %v2017, %v2014
    %v2186 = vpack.c.b16 %v2021, %v2018
    %v2187 = vpack.c.b16 %v2022, %v2019
    %v2188 = vpack.c.b16 %v2023, %v2020
    %v2189 = vpack.c.b16 %v2027, %v2024
    %v2190 = vpack.c.b16 %v2028, %v2025
    %v2191 = vpack.c.b16 %v2029, %v2026
    %v2192 = vpack.c.b16 %v2033, %v2030
    %v2193 = vpack.c.b16 %v2034, %v2031
    %v2194 = vpack.c.b16 %v2035, %v2032
    %v2195 = vpack.c.b16 %v2039, %v2036
    %v2196 = vpack.c.b16 %v2040, %v2037
    %v2197 = vpack.c.b16 %v2041, %v2038
    %v2198 = vpack.c.b16 %v2045, %v2042
    %v2199 = vpack.c.b16 %v2046, %v2043
    %v2200 = vpack.c.b16 %v2047, %v2044
    %v2201 = vpack.c.b16 %v2051, %v2048
    %v2202 = vpack.c.b16 %v2052, %v2049
    %v2203 = vpack.c.b16 %v2053, %v2050
    %v2204 = vpack.c.b16 %v2057, %v2054
    %v2205 = vpack.c.b16 %v2058, %v2055
    %v2206 = vpack.c.b16 %v2059, %v2056
    %v2207 = vpack.c.b16 %v2063, %v2060
    %v2208 = vpack.c.b16 %v2064, %v2061
    %v2209 = vpack.c.b16 %v2065, %v2062
    %v2210 = vpack.c.b16 %v2069, %v2066
    %v2211 = vpack.c.b16 %v2070, %v2067
    %v2212 = vpack.c.b16 %v2071, %v2068
    %v2213 = vpack.c.b16 %v2075, %v2072
    %v2214 = vpack.c.b16 %v2076, %v2073
    %v2215 = vpack.c.b16 %v2077, %v2074
    %v2216 = vpack.c.b16 %v2081, %v2078
    %v2217 = vpack.c.b16 %v2082, %v2079
    %v2218 = vpack.c.b16 %v2083, %v2080
    %v2219 = vpack.c.b16 %v2087, %v2084
    %v2220 = vpack.c.b16 %v2088, %v2085
    %v2221 = vpack.c.b16 %v2089, %v2086
    %v2222 = vpack.c.b16 %v2093, %v2090
    %v2223 = vpack.c.b16 %v2094, %v2091
    %v2224 = vpack.c.b16 %v2095, %v2092
    %v2225 = vpack.c.b16 %v2099, %v2096
    %v2226 = vpack.c.b16 %v2100, %v2097
    %v2227 = vpack.c.b16 %v2101, %v2098
    %v2228 = vpack.c.b16 %v2105, %v2102
    %v2229 = vpack.c.b16 %v2106, %v2103
    %v2230 = vpack.c.b16 %v2107, %v2104
    %v2231 = vpack.c.b16 %v2111, %v2108
    %v2232 = vpack.c.b16 %v2112, %v2109
    %v2233 = vpack.c.b16 %v2113, %v2110
    %v2234 = vpack.c.b16 %v2117, %v2114
    %v2235 = vpack.c.b16 %v2118, %v2115
    %v2236 = vpack.c.b16 %v2119, %v2116
    %v2237 = vpack.c.b16 %v2123, %v2120
    %v2238 = vpack.c.b16 %v2124, %v2121
    %v2239 = vpack.c.b16 %v2125, %v2122
    %v2240 = vpack.c.b16 %v2129, %v2126
    %v2241 = vpack.c.b16 %v2130, %v2127
    %v2242 = vpack.c.b16 %v2131, %v2128
    %v2243 = vpack.c.b16 %v2135, %v2132
    %v2244 = vpack.c.b16 %v2136, %v2133
    %v2245 = vpack.c.b16 %v2137, %v2134
    %v2246 = vpack.c.b16 %v2141, %v2138
    %v2247 = vpack.c.b16 %v2142, %v2139
    %v2248 = vpack.c.b16 %v2143, %v2140
    %v2249 = vpack.c.b16 %v2147, %v2144
    %v2250 = vpack.c.b16 %v2148, %v2145
    %v2251 = vpack.c.b16 %v2149, %v2146
    %v2252 = vpack.c.b16 %v2153, %v2150
    %v2253 = vpack.c.b16 %v2154, %v2151
    %v2254 = vpack.c.b16 %v2155, %v2152
    %v2255 = vpack.c.b16 %v2159, %v2156
    %v2256 = vpack.c.b16 %v2160, %v2157
    %v2257 = vpack.c.b16 %v2161, %v2158
    %2354 = vmatprep.subr.bf16.mxu0 %v2184
    %2355 = vmatpush1.bf16.msra.mxu0 %v2183
    %2356 = vmatprep.subr.bf16.mxu0 %v2181
    %2357 = vmatpush1.bf16.msra.mxu0 %v2180
    %2358 = vmatprep.subr.bf16.mxu0 %v2178
    %2359 = vmatpush1.bf16.msra.mxu0 %v2177
    %2360 = vmatprep.subr.bf16.mxu0 %v2175
    %2361 = vmatpush1.bf16.msra.mxu0 %v2174
    %2362 = vmatprep.subr.bf16.mxu0 %v2172
    %2363 = vmatpush1.bf16.msra.mxu0 %v2171
    %2364 = vmatprep.subr.bf16.mxu0 %v2169
    %2365 = vmatpush1.bf16.msra.mxu0 %v2168
    %2366 = vmatprep.subr.bf16.mxu0 %v2166
    %2367 = vmatpush1.bf16.msra.mxu0 %v2165
    %2368 = vmatprep.subr.bf16.mxu0 %v2163
    %2369 = vmatpush1.bf16.msra.mxu0 %v2162
    %2370 = vmatprep.subr.bf16.mxu0 %v2208
    %2371 = vmatpush2.bf16.msra.mxu0 %v2207
    %2372 = vmatprep.subr.bf16.mxu0 %v2205
    %2373 = vmatpush2.bf16.msra.mxu0 %v2204
    %2374 = vmatprep.subr.bf16.mxu0 %v2202
    %2375 = vmatpush2.bf16.msra.mxu0 %v2201
    %2376 = vmatprep.subr.bf16.mxu0 %v2199
    %2377 = vmatpush2.bf16.msra.mxu0 %v2198
    %2378 = vmatprep.subr.bf16.mxu0 %v2196
    %2379 = vmatpush2.bf16.msra.mxu0 %v2195
    %2380 = vmatprep.subr.bf16.mxu0 %v2193
    %2381 = vmatpush2.bf16.msra.mxu0 %v2192
    %2382 = vmatprep.subr.bf16.mxu0 %v2190
    %2383 = vmatpush2.bf16.msra.mxu0 %v2189
    %2384 = vmatprep.subr.bf16.mxu0 %v2187
    %2385 = vmatpush2.bf16.msra.mxu0 %v2186
    %2386 = vmatprep.mubr.bf16.mxu0 %v1639
    %2387 = vmatmul.mubr.bf16.gmra.mxu0 %v1638
    %v2388 = vpop.f32.mrf.mxu0
    %v2389 = vadd.f32 %v1833, %v2388
    %v2390 = vpop.f32.mrf.mxu0
    %v2391 = vadd.f32 %v1837, %v2390
    %v2392 = vpop.f32.mrf.mxu0
    %v2393 = vadd.f32 %v1833, %v2392
    %v2394 = vpop.f32.mrf.mxu0
    %v2395 = vadd.f32 %v1837, %v2394
    %2396 = vmatprep.mubr.bf16.mxu0 %v1647
    %2397 = vmatmul.mubr.bf16.gmra.mxu0 %v1646
    %v2398 = vpop.f32.mrf.mxu0
    %v2399 = vadd.f32 %v1833, %v2398
    %v2400 = vpop.f32.mrf.mxu0
    %v2401 = vadd.f32 %v1837, %v2400
    %v2402 = vpop.f32.mrf.mxu0
    %v2403 = vadd.f32 %v1833, %v2402
    %v2404 = vpop.f32.mrf.mxu0
    %v2405 = vadd.f32 %v1837, %v2404
    %2406 = vmatprep.mubr.bf16.mxu0 %v1655
    %2407 = vmatmul.mubr.bf16.gmra.mxu0 %v1654
    %v2408 = vpop.f32.mrf.mxu0
    %v2409 = vadd.f32 %v1833, %v2408
    %v2410 = vpop.f32.mrf.mxu0
    %v2411 = vadd.f32 %v1837, %v2410
    %v2412 = vpop.f32.mrf.mxu0
    %v2413 = vadd.f32 %v1833, %v2412
    %v2414 = vpop.f32.mrf.mxu0
    %v2415 = vadd.f32 %v1837, %v2414
    %2416 = vmatprep.mubr.bf16.mxu0 %v1663
    %2417 = vmatmul.mubr.bf16.gmra.mxu0 %v1662
    %v2418 = vpop.f32.mrf.mxu0
    %v2419 = vadd.f32 %v1833, %v2418
    %v2420 = vpop.f32.mrf.mxu0
    %v2421 = vadd.f32 %v1837, %v2420
    %v2422 = vpop.f32.mrf.mxu0
    %v2423 = vadd.f32 %v1833, %v2422
    %v2424 = vpop.f32.mrf.mxu0
    %v2425 = vadd.f32 %v1837, %v2424
    %2426 = vmatprep.mubr.bf16.mxu0 %v1671
    %2427 = vmatmul.mubr.bf16.gmra.mxu0 %v1670
    %v2428 = vpop.f32.mrf.mxu0
    %v2429 = vadd.f32 %v1833, %v2428
    %v2430 = vpop.f32.mrf.mxu0
    %v2431 = vadd.f32 %v1837, %v2430
    %v2432 = vpop.f32.mrf.mxu0
    %v2433 = vadd.f32 %v1833, %v2432
    %v2434 = vpop.f32.mrf.mxu0
    %v2435 = vadd.f32 %v1837, %v2434
    %2436 = vmatprep.mubr.bf16.mxu0 %v1679
    %2437 = vmatmul.mubr.bf16.gmra.mxu0 %v1678
    %v2438 = vpop.f32.mrf.mxu0
    %v2439 = vadd.f32 %v1833, %v2438
    %v2440 = vpop.f32.mrf.mxu0
    %v2441 = vadd.f32 %v1837, %v2440
    %v2442 = vpop.f32.mrf.mxu0
    %v2443 = vadd.f32 %v1833, %v2442
    %v2444 = vpop.f32.mrf.mxu0
    %v2445 = vadd.f32 %v1837, %v2444
    %2446 = vmatprep.mubr.bf16.mxu0 %v1687
    %2447 = vmatmul.mubr.bf16.gmra.mxu0 %v1686
    %v2448 = vpop.f32.mrf.mxu0
    %v2449 = vadd.f32 %v1833, %v2448
    %v2450 = vpop.f32.mrf.mxu0
    %v2451 = vadd.f32 %v1837, %v2450
    %v2452 = vpop.f32.mrf.mxu0
    %v2453 = vadd.f32 %v1833, %v2452
    %v2454 = vpop.f32.mrf.mxu0
    %v2455 = vadd.f32 %v1837, %v2454
    %2456 = vmatprep.mubr.bf16.mxu0 %v1695
    %2457 = vmatmul.mubr.bf16.gmra.mxu0 %v1694
    %v2458 = vpop.f32.mrf.mxu0
    %v2459 = vadd.f32 %v1833, %v2458
    %v2460 = vpop.f32.mrf.mxu0
    %v2461 = vadd.f32 %v1837, %v2460
    %v2462 = vpop.f32.mrf.mxu0
    %v2463 = vadd.f32 %v1833, %v2462
    %v2464 = vpop.f32.mrf.mxu0
    %v2465 = vadd.f32 %v1837, %v2464
    %2466 = vdwg.mxu0
    %2467 = vmatprep.subr.bf16.mxu0 %v2232
    %2468 = vmatpush1.bf16.msra.mxu0 %v2231
    %2469 = vmatprep.subr.bf16.mxu0 %v2229
    %2470 = vmatpush1.bf16.msra.mxu0 %v2228
    %2471 = vmatprep.subr.bf16.mxu0 %v2226
    %2472 = vmatpush1.bf16.msra.mxu0 %v2225
    %2473 = vmatprep.subr.bf16.mxu0 %v2223
    %2474 = vmatpush1.bf16.msra.mxu0 %v2222
    %2475 = vmatprep.subr.bf16.mxu0 %v2220
    %2476 = vmatpush1.bf16.msra.mxu0 %v2219
    %2477 = vmatprep.subr.bf16.mxu0 %v2217
    %2478 = vmatpush1.bf16.msra.mxu0 %v2216
    %2479 = vmatprep.subr.bf16.mxu0 %v2214
    %2480 = vmatpush1.bf16.msra.mxu0 %v2213
    %2481 = vmatprep.subr.bf16.mxu0 %v2211
    %2482 = vmatpush1.bf16.msra.mxu0 %v2210
    %2483 = vmatprep.subr.bf16.mxu0 %v2256
    %2484 = vmatpush2.bf16.msra.mxu0 %v2255
    %2485 = vmatprep.subr.bf16.mxu0 %v2253
    %2486 = vmatpush2.bf16.msra.mxu0 %v2252
    %2487 = vmatprep.subr.bf16.mxu0 %v2250
    %2488 = vmatpush2.bf16.msra.mxu0 %v2249
    %2489 = vmatprep.subr.bf16.mxu0 %v2247
    %2490 = vmatpush2.bf16.msra.mxu0 %v2246
    %2491 = vmatprep.subr.bf16.mxu0 %v2244
    %2492 = vmatpush2.bf16.msra.mxu0 %v2243
    %2493 = vmatprep.subr.bf16.mxu0 %v2241
    %2494 = vmatpush2.bf16.msra.mxu0 %v2240
    %2495 = vmatprep.subr.bf16.mxu0 %v2238
    %2496 = vmatpush2.bf16.msra.mxu0 %v2237
    %2497 = vmatprep.subr.bf16.mxu0 %v2235
    %2498 = vmatpush2.bf16.msra.mxu0 %v2234
    %2499 = vmatprep.mubr.bf16.mxu0 %v1641
    %2500 = vmatmul.mubr.bf16.gmra.mxu0 %v1640
    %v2501 = vpop.f32.mrf.mxu0
    %v2502 = vadd.f32 %v2389, %v2501
    %v2503 = vpop.f32.mrf.mxu0
    %v2504 = vadd.f32 %v2391, %v2503
    %v2505 = vpop.f32.mrf.mxu0
    %v2506 = vadd.f32 %v2393, %v2505
    %v2507 = vpop.f32.mrf.mxu0
    %v2508 = vadd.f32 %v2395, %v2507
    %2509 = vmatprep.mubr.bf16.mxu0 %v1649
    %2510 = vmatmul.mubr.bf16.gmra.mxu0 %v1648
    %v2511 = vpop.f32.mrf.mxu0
    %v2512 = vadd.f32 %v2399, %v2511
    %v2513 = vpop.f32.mrf.mxu0
    %v2514 = vadd.f32 %v2401, %v2513
    %v2515 = vpop.f32.mrf.mxu0
    %v2516 = vadd.f32 %v2403, %v2515
    %v2517 = vpop.f32.mrf.mxu0
    %v2518 = vadd.f32 %v2405, %v2517
    %2519 = vmatprep.mubr.bf16.mxu0 %v1657
    %2520 = vmatmul.mubr.bf16.gmra.mxu0 %v1656
    %v2521 = vpop.f32.mrf.mxu0
    %v2522 = vadd.f32 %v2409, %v2521
    %v2523 = vpop.f32.mrf.mxu0
    %v2524 = vadd.f32 %v2411, %v2523
    %v2525 = vpop.f32.mrf.mxu0
    %v2526 = vadd.f32 %v2413, %v2525
    %v2527 = vpop.f32.mrf.mxu0
    %v2528 = vadd.f32 %v2415, %v2527
    %2529 = vmatprep.mubr.bf16.mxu0 %v1665
    %2530 = vmatmul.mubr.bf16.gmra.mxu0 %v1664
    %v2531 = vpop.f32.mrf.mxu0
    %v2532 = vadd.f32 %v2419, %v2531
    %v2533 = vpop.f32.mrf.mxu0
    %v2534 = vadd.f32 %v2421, %v2533
    %v2535 = vpop.f32.mrf.mxu0
    %v2536 = vadd.f32 %v2423, %v2535
    %v2537 = vpop.f32.mrf.mxu0
    %v2538 = vadd.f32 %v2425, %v2537
    %2539 = vmatprep.mubr.bf16.mxu0 %v1673
    %2540 = vmatmul.mubr.bf16.gmra.mxu0 %v1672
    %v2541 = vpop.f32.mrf.mxu0
    %v2542 = vadd.f32 %v2429, %v2541
    %v2543 = vpop.f32.mrf.mxu0
    %v2544 = vadd.f32 %v2431, %v2543
    %v2545 = vpop.f32.mrf.mxu0
    %v2546 = vadd.f32 %v2433, %v2545
    %v2547 = vpop.f32.mrf.mxu0
    %v2548 = vadd.f32 %v2435, %v2547
    %2549 = vmatprep.mubr.bf16.mxu0 %v1681
    %2550 = vmatmul.mubr.bf16.gmra.mxu0 %v1680
    %v2551 = vpop.f32.mrf.mxu0
    %v2552 = vadd.f32 %v2439, %v2551
    %v2553 = vpop.f32.mrf.mxu0
    %v2554 = vadd.f32 %v2441, %v2553
    %v2555 = vpop.f32.mrf.mxu0
    %v2556 = vadd.f32 %v2443, %v2555
    %v2557 = vpop.f32.mrf.mxu0
    %v2558 = vadd.f32 %v2445, %v2557
    %2559 = vmatprep.mubr.bf16.mxu0 %v1689
    %2560 = vmatmul.mubr.bf16.gmra.mxu0 %v1688
    %v2561 = vpop.f32.mrf.mxu0
    %v2562 = vadd.f32 %v2449, %v2561
    %v2563 = vpop.f32.mrf.mxu0
    %v2564 = vadd.f32 %v2451, %v2563
    %v2565 = vpop.f32.mrf.mxu0
    %v2566 = vadd.f32 %v2453, %v2565
    %v2567 = vpop.f32.mrf.mxu0
    %v2568 = vadd.f32 %v2455, %v2567
    %2569 = vmatprep.mubr.bf16.mxu0 %v1697
    %2570 = vmatmul.mubr.bf16.gmra.mxu0 %v1696
    %v2571 = vpop.f32.mrf.mxu0
    %v2572 = vadd.f32 %v2459, %v2571
    %v2573 = vpop.f32.mrf.mxu0
    %v2574 = vadd.f32 %v2461, %v2573
    %v2575 = vpop.f32.mrf.mxu0
    %v2576 = vadd.f32 %v2463, %v2575
    %v2577 = vpop.f32.mrf.mxu0
    %v2578 = vadd.f32 %v2465, %v2577
    %2579 = vdwg.mxu0
    %2580 = vmatprep.subr.bf16.mxu0 0
    %2581 = vmatpush1.bf16.msra.mxu0 %v2185
    %2582 = vmatprep.subr.bf16.mxu0 0
    %2583 = vmatpush1.bf16.msra.mxu0 %v2182
    %2584 = vmatprep.subr.bf16.mxu0 0
    %2585 = vmatpush1.bf16.msra.mxu0 %v2179
    %2586 = vmatprep.subr.bf16.mxu0 0
    %2587 = vmatpush1.bf16.msra.mxu0 %v2176
    %2588 = vmatprep.subr.bf16.mxu0 0
    %2589 = vmatpush1.bf16.msra.mxu0 %v2173
    %2590 = vmatprep.subr.bf16.mxu0 0
    %2591 = vmatpush1.bf16.msra.mxu0 %v2170
    %2592 = vmatprep.subr.bf16.mxu0 0
    %2593 = vmatpush1.bf16.msra.mxu0 %v2167
    %2594 = vmatprep.subr.bf16.mxu0 0
    %2595 = vmatpush1.bf16.msra.mxu0 %v2164
    %2596 = vmatprep.subr.bf16.mxu0 0
    %2597 = vmatpush2.bf16.msra.mxu0 %v2209
    %2598 = vmatprep.subr.bf16.mxu0 0
    %2599 = vmatpush2.bf16.msra.mxu0 %v2206
    %2600 = vmatprep.subr.bf16.mxu0 0
    %2601 = vmatpush2.bf16.msra.mxu0 %v2203
    %2602 = vmatprep.subr.bf16.mxu0 0
    %2603 = vmatpush2.bf16.msra.mxu0 %v2200
    %2604 = vmatprep.subr.bf16.mxu0 0
    %2605 = vmatpush2.bf16.msra.mxu0 %v2197
    %2606 = vmatprep.subr.bf16.mxu0 0
    %2607 = vmatpush2.bf16.msra.mxu0 %v2194
    %2608 = vmatprep.subr.bf16.mxu0 0
    %2609 = vmatpush2.bf16.msra.mxu0 %v2191
    %2610 = vmatprep.subr.bf16.mxu0 0
    %2611 = vmatpush2.bf16.msra.mxu0 %v2188
    %2612 = vmatprep.mubr.bf16.mxu0 %v1639
    %2613 = vmatmul.mubr.bf16.gmra.mxu0 %v1638
    %v2614 = vpop.f32.mrf.mxu0
    %v2615 = vadd.f32 %v1841, %v2614
    %v2616 = vpop.f32.mrf.mxu0
    %v2617 = vpop.f32.mrf.mxu0
    %v2618 = vadd.f32 %v1841, %v2617
    %v2619 = vpop.f32.mrf.mxu0
    %2620 = vmatprep.mubr.bf16.mxu0 %v1647
    %2621 = vmatmul.mubr.bf16.gmra.mxu0 %v1646
    %v2622 = vpop.f32.mrf.mxu0
    %v2623 = vadd.f32 %v1841, %v2622
    %v2624 = vpop.f32.mrf.mxu0
    %v2625 = vpop.f32.mrf.mxu0
    %v2626 = vadd.f32 %v1841, %v2625
    %v2627 = vpop.f32.mrf.mxu0
    %2628 = vmatprep.mubr.bf16.mxu0 %v1655
    %2629 = vmatmul.mubr.bf16.gmra.mxu0 %v1654
    %v2630 = vpop.f32.mrf.mxu0
    %v2631 = vadd.f32 %v1841, %v2630
    %v2632 = vpop.f32.mrf.mxu0
    %v2633 = vpop.f32.mrf.mxu0
    %v2634 = vadd.f32 %v1841, %v2633
    %v2635 = vpop.f32.mrf.mxu0
    %2636 = vmatprep.mubr.bf16.mxu0 %v1663
    %2637 = vmatmul.mubr.bf16.gmra.mxu0 %v1662
    %v2638 = vpop.f32.mrf.mxu0
    %v2639 = vadd.f32 %v1841, %v2638
    %v2640 = vpop.f32.mrf.mxu0
    %v2641 = vpop.f32.mrf.mxu0
    %v2642 = vadd.f32 %v1841, %v2641
    %v2643 = vpop.f32.mrf.mxu0
    %2644 = vmatprep.mubr.bf16.mxu0 %v1671
    %2645 = vmatmul.mubr.bf16.gmra.mxu0 %v1670
    %v2646 = vpop.f32.mrf.mxu0
    %v2647 = vadd.f32 %v1841, %v2646
    %v2648 = vpop.f32.mrf.mxu0
    %v2649 = vpop.f32.mrf.mxu0
    %v2650 = vadd.f32 %v1841, %v2649
    %v2651 = vpop.f32.mrf.mxu0
    %2652 = vmatprep.mubr.bf16.mxu0 %v1679
    %2653 = vmatmul.mubr.bf16.gmra.mxu0 %v1678
    %v2654 = vpop.f32.mrf.mxu0
    %v2655 = vadd.f32 %v1841, %v2654
    %v2656 = vpop.f32.mrf.mxu0
    %v2657 = vpop.f32.mrf.mxu0
    %v2658 = vadd.f32 %v1841, %v2657
    %v2659 = vpop.f32.mrf.mxu0
    %2660 = vmatprep.mubr.bf16.mxu0 %v1687
    %2661 = vmatmul.mubr.bf16.gmra.mxu0 %v1686
    %v2662 = vpop.f32.mrf.mxu0
    %v2663 = vadd.f32 %v1841, %v2662
    %v2664 = vpop.f32.mrf.mxu0
    %v2665 = vpop.f32.mrf.mxu0
    %v2666 = vadd.f32 %v1841, %v2665
    %v2667 = vpop.f32.mrf.mxu0
    %2668 = vmatprep.mubr.bf16.mxu0 %v1695
    %2669 = vmatmul.mubr.bf16.gmra.mxu0 %v1694
    %v2670 = vpop.f32.mrf.mxu0
    %v2671 = vadd.f32 %v1841, %v2670
    %v2672 = vpop.f32.mrf.mxu0
    %v2673 = vpop.f32.mrf.mxu0
    %v2674 = vadd.f32 %v1841, %v2673
    %v2675 = vpop.f32.mrf.mxu0
    %2676 = vdwg.mxu0
    %2677 = vmatprep.subr.bf16.mxu0 0
    %2678 = vmatpush1.bf16.msra.mxu0 %v2233
    %2679 = vmatprep.subr.bf16.mxu0 0
    %2680 = vmatpush1.bf16.msra.mxu0 %v2230
    %2681 = vmatprep.subr.bf16.mxu0 0
    %2682 = vmatpush1.bf16.msra.mxu0 %v2227
    %2683 = vmatprep.subr.bf16.mxu0 0
    %2684 = vmatpush1.bf16.msra.mxu0 %v2224
    %2685 = vmatprep.subr.bf16.mxu0 0
    %2686 = vmatpush1.bf16.msra.mxu0 %v2221
    %2687 = vmatprep.subr.bf16.mxu0 0
    %2688 = vmatpush1.bf16.msra.mxu0 %v2218
    %2689 = vmatprep.subr.bf16.mxu0 0
    %2690 = vmatpush1.bf16.msra.mxu0 %v2215
    %2691 = vmatprep.subr.bf16.mxu0 0
    %2692 = vmatpush1.bf16.msra.mxu0 %v2212
    %2693 = vmatprep.subr.bf16.mxu0 0
    %2694 = vmatpush2.bf16.msra.mxu0 %v2257
    %2695 = vmatprep.subr.bf16.mxu0 0
    %2696 = vmatpush2.bf16.msra.mxu0 %v2254
    %2697 = vmatprep.subr.bf16.mxu0 0
    %2698 = vmatpush2.bf16.msra.mxu0 %v2251
    %2699 = vmatprep.subr.bf16.mxu0 0
    %2700 = vmatpush2.bf16.msra.mxu0 %v2248
    %2701 = vmatprep.subr.bf16.mxu0 0
    %2702 = vmatpush2.bf16.msra.mxu0 %v2245
    %2703 = vmatprep.subr.bf16.mxu0 0
    %2704 = vmatpush2.bf16.msra.mxu0 %v2242
    %2705 = vmatprep.subr.bf16.mxu0 0
    %2706 = vmatpush2.bf16.msra.mxu0 %v2239
    %2707 = vmatprep.subr.bf16.mxu0 0
    %2708 = vmatpush2.bf16.msra.mxu0 %v2236
    %2709 = vmatprep.mubr.bf16.mxu0 %v1641
    %2710 = vmatmul.mubr.bf16.gmra.mxu0 %v1640
    %v2711 = vpop.f32.mrf.mxu0
    %v2712 = vadd.f32 %v2615, %v2711
    %v2713 = vpop.f32.mrf.mxu0
    %v2714 = vpop.f32.mrf.mxu0
    %v2715 = vadd.f32 %v2618, %v2714
    %v2716 = vpop.f32.mrf.mxu0
    %2717 = vmatprep.mubr.bf16.mxu0 %v1649
    %2718 = vmatmul.mubr.bf16.gmra.mxu0 %v1648
    %v2719 = vpop.f32.mrf.mxu0
    %v2720 = vadd.f32 %v2623, %v2719
    %v2721 = vpop.f32.mrf.mxu0
    %v2722 = vpop.f32.mrf.mxu0
    %v2723 = vadd.f32 %v2626, %v2722
    %v2724 = vpop.f32.mrf.mxu0
    %2725 = vmatprep.mubr.bf16.mxu0 %v1657
    %2726 = vmatmul.mubr.bf16.gmra.mxu0 %v1656
    %v2727 = vpop.f32.mrf.mxu0
    %v2728 = vadd.f32 %v2631, %v2727
    %v2729 = vpop.f32.mrf.mxu0
    %v2730 = vpop.f32.mrf.mxu0
    %v2731 = vadd.f32 %v2634, %v2730
    %v2732 = vpop.f32.mrf.mxu0
    %2733 = vmatprep.mubr.bf16.mxu0 %v1665
    %2734 = vmatmul.mubr.bf16.gmra.mxu0 %v1664
    %v2735 = vpop.f32.mrf.mxu0
    %v2736 = vadd.f32 %v2639, %v2735
    %v2737 = vpop.f32.mrf.mxu0
    %v2738 = vpop.f32.mrf.mxu0
    %v2739 = vadd.f32 %v2642, %v2738
    %v2740 = vpop.f32.mrf.mxu0
    %2741 = vmatprep.mubr.bf16.mxu0 %v1673
    %2742 = vmatmul.mubr.bf16.gmra.mxu0 %v1672
    %v2743 = vpop.f32.mrf.mxu0
    %v2744 = vadd.f32 %v2647, %v2743
    %v2745 = vpop.f32.mrf.mxu0
    %v2746 = vpop.f32.mrf.mxu0
    %v2747 = vadd.f32 %v2650, %v2746
    %v2748 = vpop.f32.mrf.mxu0
    %2749 = vmatprep.mubr.bf16.mxu0 %v1681
    %2750 = vmatmul.mubr.bf16.gmra.mxu0 %v1680
    %v2751 = vpop.f32.mrf.mxu0
    %v2752 = vadd.f32 %v2655, %v2751
    %v2753 = vpop.f32.mrf.mxu0
    %v2754 = vpop.f32.mrf.mxu0
    %v2755 = vadd.f32 %v2658, %v2754
    %v2756 = vpop.f32.mrf.mxu0
    %2757 = vmatprep.mubr.bf16.mxu0 %v1689
    %2758 = vmatmul.mubr.bf16.gmra.mxu0 %v1688
    %v2759 = vpop.f32.mrf.mxu0
    %v2760 = vadd.f32 %v2663, %v2759
    %v2761 = vpop.f32.mrf.mxu0
    %v2762 = vpop.f32.mrf.mxu0
    %v2763 = vadd.f32 %v2666, %v2762
    %v2764 = vpop.f32.mrf.mxu0
    %2765 = vmatprep.mubr.bf16.mxu0 %v1697
    %2766 = vmatmul.mubr.bf16.gmra.mxu0 %v1696
    %v2767 = vpop.f32.mrf.mxu0
    %v2768 = vadd.f32 %v2671, %v2767
    %v2769 = vpop.f32.mrf.mxu0
    %v2770 = vpop.f32.mrf.mxu0
    %v2771 = vadd.f32 %v2674, %v2770
    %v2772 = vpop.f32.mrf.mxu0
    %2773 = vdwg.mxu0
    %v2774 = vmax.f32 %v2502, 0.0
    %v2775 = vmax.f32 %v2504, 0.0
    %v2776 = vmax.f32 %v2712, 0.0
    %v2777 = vmax.f32 %v2506, 0.0
    %v2778 = vmax.f32 %v2508, 0.0
    %v2779 = vmax.f32 %v2715, 0.0
    %v2780 = vmax.f32 %v2512, 0.0
    %v2781 = vmax.f32 %v2514, 0.0
    %v2782 = vmax.f32 %v2720, 0.0
    %v2783 = vmax.f32 %v2516, 0.0
    %v2784 = vmax.f32 %v2518, 0.0
    %v2785 = vmax.f32 %v2723, 0.0
    %v2786 = vmax.f32 %v2522, 0.0
    %v2787 = vmax.f32 %v2524, 0.0
    %v2788 = vmax.f32 %v2728, 0.0
    %v2789 = vmax.f32 %v2526, 0.0
    %v2790 = vmax.f32 %v2528, 0.0
    %v2791 = vmax.f32 %v2731, 0.0
    %v2792 = vmax.f32 %v2532, 0.0
    %v2793 = vmax.f32 %v2534, 0.0
    %v2794 = vmax.f32 %v2736, 0.0
    %v2795 = vmax.f32 %v2536, 0.0
    %v2796 = vmax.f32 %v2538, 0.0
    %v2797 = vmax.f32 %v2739, 0.0
    %v2798 = vmax.f32 %v2542, 0.0
    %v2799 = vmax.f32 %v2544, 0.0
    %v2800 = vmax.f32 %v2744, 0.0
    %v2801 = vmax.f32 %v2546, 0.0
    %v2802 = vmax.f32 %v2548, 0.0
    %v2803 = vmax.f32 %v2747, 0.0
    %v2804 = vmax.f32 %v2552, 0.0
    %v2805 = vmax.f32 %v2554, 0.0
    %v2806 = vmax.f32 %v2752, 0.0
    %v2807 = vmax.f32 %v2556, 0.0
    %v2808 = vmax.f32 %v2558, 0.0
    %v2809 = vmax.f32 %v2755, 0.0
    %v2810 = vmax.f32 %v2562, 0.0
    %v2811 = vmax.f32 %v2564, 0.0
    %v2812 = vmax.f32 %v2760, 0.0
    %v2813 = vmax.f32 %v2566, 0.0
    %v2814 = vmax.f32 %v2568, 0.0
    %v2815 = vmax.f32 %v2763, 0.0
    %v2816 = vmax.f32 %v2572, 0.0
    %v2817 = vmax.f32 %v2574, 0.0
    %v2818 = vmax.f32 %v2768, 0.0
    %v2819 = vmax.f32 %v2576, 0.0
    %v2820 = vmax.f32 %v2578, 0.0
    %v2821 = vmax.f32 %v2771, 0.0
    %v2822 = vld [vmem:[#allocation2 + $0x4c] sm:$0xff]
    %v2823 = vld [vmem:[#allocation2 + $0x54] sm:$0xf]
    %v2824 = vld [vmem:[#allocation2 + $0x6c] sm:$0xff]
    %v2825 = vld [vmem:[#allocation2 + $0x74] sm:$0xf]
    %v2826 = vld [vmem:[#allocation2 + $0x8c] sm:$0xff]
    %v2827 = vld [vmem:[#allocation2 + $0x94] sm:$0xf]
    %v2828 = vld [vmem:[#allocation2 + $0xac] sm:$0xff]
    %v2829 = vld [vmem:[#allocation2 + $0xb4] sm:$0xf]
    %v2830 = vld [vmem:[#allocation2 + $0xcc] sm:$0xff]
    %v2831 = vld [vmem:[#allocation2 + $0xd4] sm:$0xf]
    %v2832 = vld [vmem:[#allocation2 + $0xec] sm:$0xff]
    %v2833 = vld [vmem:[#allocation2 + $0xf4] sm:$0xf]
    %v2834 = vld [vmem:[#allocation2 + $0x10c] sm:$0xff]
    %v2835 = vld [vmem:[#allocation2 + $0x114] sm:$0xf]
    %v2836 = vld [vmem:[#allocation2 + $0x12c] sm:$0xff]
    %v2837 = vld [vmem:[#allocation2 + $0x134] sm:$0xf]
    %v2838 = vld [vmem:[#allocation2 + $0x14c] sm:$0xff]
    %v2839 = vld [vmem:[#allocation2 + $0x154] sm:$0xf]
    %v2840 = vld [vmem:[#allocation2 + $0x16c] sm:$0xff]
    %v2841 = vld [vmem:[#allocation2 + $0x174] sm:$0xf]
    %v2842 = vld [vmem:[#allocation2 + $0x18c] sm:$0xff]
    %v2843 = vld [vmem:[#allocation2 + $0x194] sm:$0xf]
    %v2844 = vld [vmem:[#allocation2 + $0x1ac] sm:$0xff]
    %v2845 = vld [vmem:[#allocation2 + $0x1b4] sm:$0xf]
    %v2846 = vld [vmem:[#allocation2 + $0x1cc] sm:$0xff]
    %v2847 = vld [vmem:[#allocation2 + $0x1d4] sm:$0xf]
    %v2848 = vld [vmem:[#allocation2 + $0x1ec] sm:$0xff]
    %v2849 = vld [vmem:[#allocation2 + $0x1f4] sm:$0xf]
    %v2850 = vld [vmem:[#allocation2 + $0x20c] sm:$0xff]
    %v2851 = vld [vmem:[#allocation2 + $0x214] sm:$0xf]
    %v2852 = vld [vmem:[#allocation2 + $0x22c] sm:$0xff]
    %v2853 = vld [vmem:[#allocation2 + $0x234] sm:$0xf]
    %v2854 = vld [vmem:[#allocation2 + $0x24c] sm:$0xff]
    %v2855 = vld [vmem:[#allocation2 + $0x254] sm:$0xf]
    %v2856 = vld [vmem:[#allocation2 + $0x26c] sm:$0xff]
    %v2857 = vld [vmem:[#allocation2 + $0x274] sm:$0xf]
    %v2858 = vld [vmem:[#allocation2 + $0x28c] sm:$0xff]
    %v2859 = vld [vmem:[#allocation2 + $0x294] sm:$0xf]
    %v2860 = vld [vmem:[#allocation2 + $0x2ac] sm:$0xff]
    %v2861 = vld [vmem:[#allocation2 + $0x2b4] sm:$0xf]
    %v2862 = vld [vmem:[#allocation2 + $0x2cc] sm:$0xff]
    %v2863 = vld [vmem:[#allocation2 + $0x2d4] sm:$0xf]
    %v2864 = vld [vmem:[#allocation2 + $0x2ec] sm:$0xff]
    %v2865 = vld [vmem:[#allocation2 + $0x2f4] sm:$0xf]
    %v2866 = vld [vmem:[#allocation2 + $0x30c] sm:$0xff]
    %v2867 = vld [vmem:[#allocation2 + $0x314] sm:$0xf]
    %v2868 = vld [vmem:[#allocation2 + $0x32c] sm:$0xff]
    %v2869 = vld [vmem:[#allocation2 + $0x334] sm:$0xf]
    %v2870 = vld [vmem:[#allocation2 + $0x34c] sm:$0xff]
    %v2871 = vld [vmem:[#allocation2 + $0x354] sm:$0xf]
    %v2872 = vld [vmem:[#allocation2 + $0x36c] sm:$0xff]
    %v2873 = vld [vmem:[#allocation2 + $0x374] sm:$0xf]
    %v2874 = vld [vmem:[#allocation2 + $0x38c] sm:$0xff]
    %v2875 = vld [vmem:[#allocation2 + $0x394] sm:$0xf]
    %v2876 = vld [vmem:[#allocation2 + $0x3ac] sm:$0xff]
    %v2877 = vld [vmem:[#allocation2 + $0x3b4] sm:$0xf]
    %v2878 = vld [vmem:[#allocation2 + $0x3cc] sm:$0xff]
    %v2879 = vld [vmem:[#allocation2 + $0x3d4] sm:$0xf]
    %v2880 = vld [vmem:[#allocation2 + $0x3ec] sm:$0xff]
    %v2881 = vld [vmem:[#allocation2 + $0x3f4] sm:$0xf]
    %v2882 = vld [vmem:[#allocation2 + $0x40c] sm:$0xff]
    %v2883 = vld [vmem:[#allocation2 + $0x414] sm:$0xf]
    %v2884 = vld [vmem:[#allocation2 + $0x42c] sm:$0xff]
    %v2885 = vld [vmem:[#allocation2 + $0x434] sm:$0xf]
    %v2886 = vld [vmem:[#allocation2 + $0x44c] sm:$0xff]
    %v2887 = vld [vmem:[#allocation2 + $0x454] sm:$0xf]
    %v2888 = vld [vmem:[#allocation2 + $0x46c] sm:$0xff]
    %v2889 = vld [vmem:[#allocation2 + $0x474] sm:$0xf]
    %v2890 = vld [vmem:[#allocation2 + $0x48c] sm:$0xff]
    %v2891 = vld [vmem:[#allocation2 + $0x494] sm:$0xf]
    %v2892 = vld [vmem:[#allocation2 + $0x4ac] sm:$0xff]
    %v2893 = vld [vmem:[#allocation2 + $0x4b4] sm:$0xf]
    %v2894 = vld [vmem:[#allocation2 + $0x4cc] sm:$0xff]
    %v2895 = vld [vmem:[#allocation2 + $0x4d4] sm:$0xf]
    %v2896 = vld [vmem:[#allocation2 + $0x4ec] sm:$0xff]
    %v2897 = vld [vmem:[#allocation2 + $0x4f4] sm:$0xf]
    %v2898 = vld [vmem:[#allocation2 + $0x50c] sm:$0xff]
    %v2899 = vld [vmem:[#allocation2 + $0x514] sm:$0xf]
    %v2900 = vld [vmem:[#allocation2 + $0x52c] sm:$0xff]
    %v2901 = vld [vmem:[#allocation2 + $0x534] sm:$0xf]
    %v2902 = vld [vmem:[#allocation2 + $0x54c] sm:$0xff]
    %v2903 = vld [vmem:[#allocation2 + $0x554] sm:$0xf]
    %v2904 = vld [vmem:[#allocation2 + $0x56c] sm:$0xff]
    %v2905 = vld [vmem:[#allocation2 + $0x574] sm:$0xf]
    %v2906 = vld [vmem:[#allocation2 + $0x58c] sm:$0xff]
    %v2907 = vld [vmem:[#allocation2 + $0x594] sm:$0xf]
    %v2908 = vld [vmem:[#allocation2 + $0x5ac] sm:$0xff]
    %v2909 = vld [vmem:[#allocation2 + $0x5b4] sm:$0xf]
    %v2910 = vld [vmem:[#allocation2 + $0x5cc] sm:$0xff]
    %v2911 = vld [vmem:[#allocation2 + $0x5d4] sm:$0xf]
    %v2912 = vld [vmem:[#allocation2 + $0x5ec] sm:$0xff]
    %v2913 = vld [vmem:[#allocation2 + $0x5f4] sm:$0xf]
    %v2914 = vld [vmem:[#allocation2 + $0x60c] sm:$0xff]
    %v2915 = vld [vmem:[#allocation2 + $0x614] sm:$0xf]
    %v2916 = vld [vmem:[#allocation2 + $0x62c] sm:$0xff]
    %v2917 = vld [vmem:[#allocation2 + $0x634] sm:$0xf]
    %v2918 = vld [vmem:[#allocation2 + $0x64c] sm:$0xff]
    %v2919 = vld [vmem:[#allocation2 + $0x654] sm:$0xf]
    %v2920 = vld [vmem:[#allocation2 + $0x66c] sm:$0xff]
    %v2921 = vld [vmem:[#allocation2 + $0x674] sm:$0xf]
    %v2922 = vld [vmem:[#allocation2 + $0x68c] sm:$0xff]
    %v2923 = vld [vmem:[#allocation2 + $0x694] sm:$0xf]
    %v2924 = vld [vmem:[#allocation2 + $0x6ac] sm:$0xff]
    %v2925 = vld [vmem:[#allocation2 + $0x6b4] sm:$0xf]
    %v2926 = vld [vmem:[#allocation2 + $0x6cc] sm:$0xff]
    %v2927 = vld [vmem:[#allocation2 + $0x6d4] sm:$0xf]
    %v2928 = vld [vmem:[#allocation2 + $0x6ec] sm:$0xff]
    %v2929 = vld [vmem:[#allocation2 + $0x6f4] sm:$0xf]
    %v2930 = vld [vmem:[#allocation2 + $0x70c] sm:$0xff]
    %v2931 = vld [vmem:[#allocation2 + $0x714] sm:$0xf]
    %v2932 = vld [vmem:[#allocation2 + $0x72c] sm:$0xff]
    %v2933 = vld [vmem:[#allocation2 + $0x734] sm:$0xf]
    %v2934 = vld [vmem:[#allocation2 + $0x74c] sm:$0xff]
    %v2935 = vld [vmem:[#allocation2 + $0x754] sm:$0xf]
    %v2936 = vld [vmem:[#allocation2 + $0x76c] sm:$0xff]
    %v2937 = vld [vmem:[#allocation2 + $0x774] sm:$0xf]
    %v2938 = vld [vmem:[#allocation2 + $0x78c] sm:$0xff]
    %v2939 = vld [vmem:[#allocation2 + $0x794] sm:$0xf]
    %v2940 = vld [vmem:[#allocation2 + $0x7ac] sm:$0xff]
    %v2941 = vld [vmem:[#allocation2 + $0x7b4] sm:$0xf]
    %v2942 = vld [vmem:[#allocation2 + $0x7cc] sm:$0xff]
    %v2943 = vld [vmem:[#allocation2 + $0x7d4] sm:$0xf]
    %v2944 = vld [vmem:[#allocation2 + $0x7ec] sm:$0xff]
    %v2945 = vld [vmem:[#allocation2 + $0x7f4] sm:$0xf]
    %v2946 = vld [vmem:[#allocation2 + $0x80c] sm:$0xff]
    %v2947 = vld [vmem:[#allocation2 + $0x814] sm:$0xf]
    %v2948 = vld [vmem:[#allocation2 + $0x82c] sm:$0xff]
    %v2949 = vld [vmem:[#allocation2 + $0x834] sm:$0xf]
    %v2950 = vlaneseq
    %v2951 = vshrl.u32 %v2950, 7
    %v2952 = vsub.s32 5, %v2951
    %v2953 = vrot.slane %v49, %v2952
    %v2954 = vlaneseq
    %v2955 = vshrl.u32 %v2954, 7
    %v2956 = vsub.s32 5, %v2955
    %v2957 = vrot.slane %v50, %v2956
    %v2958 = vlaneseq
    %v2959 = vshrl.u32 %v2958, 7
    %v2960 = vsub.s32 5, %v2959
    %v2961 = vrot.slane %v51, %v2960
    %v3090 = vunpack.c.l.b16 %v2822
    %v3091 = vunpack.c.h.b16 %v2822
    %v3092 = vunpack.c.l.b16 %v2823
    %v3093 = vunpack.c.l.b16 %v2824
    %v3094 = vunpack.c.h.b16 %v2824
    %v3095 = vunpack.c.l.b16 %v2825
    %v3096 = vunpack.c.l.b16 %v2826
    %v3097 = vunpack.c.h.b16 %v2826
    %v3098 = vunpack.c.l.b16 %v2827
    %v3099 = vunpack.c.l.b16 %v2828
    %v3100 = vunpack.c.h.b16 %v2828
    %v3101 = vunpack.c.l.b16 %v2829
    %v3102 = vunpack.c.l.b16 %v2830
    %v3103 = vunpack.c.h.b16 %v2830
    %v3104 = vunpack.c.l.b16 %v2831
    %v3105 = vunpack.c.l.b16 %v2832
    %v3106 = vunpack.c.h.b16 %v2832
    %v3107 = vunpack.c.l.b16 %v2833
    %v3108 = vunpack.c.l.b16 %v2834
    %v3109 = vunpack.c.h.b16 %v2834
    %v3110 = vunpack.c.l.b16 %v2835
    %v3111 = vunpack.c.l.b16 %v2836
    %v3112 = vunpack.c.h.b16 %v2836
    %v3113 = vunpack.c.l.b16 %v2837
    %v3114 = vunpack.c.l.b16 %v2838
    %v3115 = vunpack.c.h.b16 %v2838
    %v3116 = vunpack.c.l.b16 %v2839
    %v3117 = vunpack.c.l.b16 %v2840
    %v3118 = vunpack.c.h.b16 %v2840
    %v3119 = vunpack.c.l.b16 %v2841
    %v3120 = vunpack.c.l.b16 %v2842
    %v3121 = vunpack.c.h.b16 %v2842
    %v3122 = vunpack.c.l.b16 %v2843
    %v3123 = vunpack.c.l.b16 %v2844
    %v3124 = vunpack.c.h.b16 %v2844
    %v3125 = vunpack.c.l.b16 %v2845
    %v3126 = vunpack.c.l.b16 %v2846
    %v3127 = vunpack.c.h.b16 %v2846
    %v3128 = vunpack.c.l.b16 %v2847
    %v3129 = vunpack.c.l.b16 %v2848
    %v3130 = vunpack.c.h.b16 %v2848
    %v3131 = vunpack.c.l.b16 %v2849
    %v3132 = vunpack.c.l.b16 %v2850
    %v3133 = vunpack.c.h.b16 %v2850
    %v3134 = vunpack.c.l.b16 %v2851
    %v3135 = vunpack.c.l.b16 %v2852
    %v3136 = vunpack.c.h.b16 %v2852
    %v3137 = vunpack.c.l.b16 %v2853
    %v3138 = vunpack.c.l.b16 %v2854
    %v3139 = vunpack.c.h.b16 %v2854
    %v3140 = vunpack.c.l.b16 %v2855
    %v3141 = vunpack.c.l.b16 %v2856
    %v3142 = vunpack.c.h.b16 %v2856
    %v3143 = vunpack.c.l.b16 %v2857
    %v3144 = vunpack.c.l.b16 %v2858
    %v3145 = vunpack.c.h.b16 %v2858
    %v3146 = vunpack.c.l.b16 %v2859
    %v3147 = vunpack.c.l.b16 %v2860
    %v3148 = vunpack.c.h.b16 %v2860
    %v3149 = vunpack.c.l.b16 %v2861
    %v3150 = vunpack.c.l.b16 %v2862
    %v3151 = vunpack.c.h.b16 %v2862
    %v3152 = vunpack.c.l.b16 %v2863
    %v3153 = vunpack.c.l.b16 %v2864
    %v3154 = vunpack.c.h.b16 %v2864
    %v3155 = vunpack.c.l.b16 %v2865
    %v3156 = vunpack.c.l.b16 %v2866
    %v3157 = vunpack.c.h.b16 %v2866
    %v3158 = vunpack.c.l.b16 %v2867
    %v3159 = vunpack.c.l.b16 %v2868
    %v3160 = vunpack.c.h.b16 %v2868
    %v3161 = vunpack.c.l.b16 %v2869
    %v3162 = vunpack.c.l.b16 %v2870
    %v3163 = vunpack.c.h.b16 %v2870
    %v3164 = vunpack.c.l.b16 %v2871
    %v3165 = vunpack.c.l.b16 %v2872
    %v3166 = vunpack.c.h.b16 %v2872
    %v3167 = vunpack.c.l.b16 %v2873
    %v3168 = vunpack.c.l.b16 %v2874
    %v3169 = vunpack.c.h.b16 %v2874
    %v3170 = vunpack.c.l.b16 %v2875
    %v3171 = vunpack.c.l.b16 %v2876
    %v3172 = vunpack.c.h.b16 %v2876
    %v3173 = vunpack.c.l.b16 %v2877
    %v3174 = vunpack.c.l.b16 %v2878
    %v3175 = vunpack.c.h.b16 %v2878
    %v3176 = vunpack.c.l.b16 %v2879
    %v3177 = vunpack.c.l.b16 %v2880
    %v3178 = vunpack.c.h.b16 %v2880
    %v3179 = vunpack.c.l.b16 %v2881
    %v3180 = vunpack.c.l.b16 %v2882
    %v3181 = vunpack.c.h.b16 %v2882
    %v3182 = vunpack.c.l.b16 %v2883
    %v3183 = vunpack.c.l.b16 %v2884
    %v3184 = vunpack.c.h.b16 %v2884
    %v3185 = vunpack.c.l.b16 %v2885
    %v3186 = vunpack.c.l.b16 %v2886
    %v3187 = vunpack.c.h.b16 %v2886
    %v3188 = vunpack.c.l.b16 %v2887
    %v3189 = vunpack.c.l.b16 %v2888
    %v3190 = vunpack.c.h.b16 %v2888
    %v3191 = vunpack.c.l.b16 %v2889
    %v3192 = vunpack.c.l.b16 %v2890
    %v3193 = vunpack.c.h.b16 %v2890
    %v3194 = vunpack.c.l.b16 %v2891
    %v3195 = vunpack.c.l.b16 %v2892
    %v3196 = vunpack.c.h.b16 %v2892
    %v3197 = vunpack.c.l.b16 %v2893
    %v3198 = vunpack.c.l.b16 %v2894
    %v3199 = vunpack.c.h.b16 %v2894
    %v3200 = vunpack.c.l.b16 %v2895
    %v3201 = vunpack.c.l.b16 %v2896
    %v3202 = vunpack.c.h.b16 %v2896
    %v3203 = vunpack.c.l.b16 %v2897
    %v3204 = vunpack.c.l.b16 %v2898
    %v3205 = vunpack.c.h.b16 %v2898
    %v3206 = vunpack.c.l.b16 %v2899
    %v3207 = vunpack.c.l.b16 %v2900
    %v3208 = vunpack.c.h.b16 %v2900
    %v3209 = vunpack.c.l.b16 %v2901
    %v3210 = vunpack.c.l.b16 %v2902
    %v3211 = vunpack.c.h.b16 %v2902
    %v3212 = vunpack.c.l.b16 %v2903
    %v3213 = vunpack.c.l.b16 %v2904
    %v3214 = vunpack.c.h.b16 %v2904
    %v3215 = vunpack.c.l.b16 %v2905
    %v3216 = vunpack.c.l.b16 %v2906
    %v3217 = vunpack.c.h.b16 %v2906
    %v3218 = vunpack.c.l.b16 %v2907
    %v3219 = vunpack.c.l.b16 %v2908
    %v3220 = vunpack.c.h.b16 %v2908
    %v3221 = vunpack.c.l.b16 %v2909
    %v3222 = vunpack.c.l.b16 %v2910
    %v3223 = vunpack.c.h.b16 %v2910
    %v3224 = vunpack.c.l.b16 %v2911
    %v3225 = vunpack.c.l.b16 %v2912
    %v3226 = vunpack.c.h.b16 %v2912
    %v3227 = vunpack.c.l.b16 %v2913
    %v3228 = vunpack.c.l.b16 %v2914
    %v3229 = vunpack.c.h.b16 %v2914
    %v3230 = vunpack.c.l.b16 %v2915
    %v3231 = vunpack.c.l.b16 %v2916
    %v3232 = vunpack.c.h.b16 %v2916
    %v3233 = vunpack.c.l.b16 %v2917
    %v3234 = vunpack.c.l.b16 %v2918
    %v3235 = vunpack.c.h.b16 %v2918
    %v3236 = vunpack.c.l.b16 %v2919
    %v3237 = vunpack.c.l.b16 %v2920
    %v3238 = vunpack.c.h.b16 %v2920
    %v3239 = vunpack.c.l.b16 %v2921
    %v3240 = vunpack.c.l.b16 %v2922
    %v3241 = vunpack.c.h.b16 %v2922
    %v3242 = vunpack.c.l.b16 %v2923
    %v3243 = vunpack.c.l.b16 %v2924
    %v3244 = vunpack.c.h.b16 %v2924
    %v3245 = vunpack.c.l.b16 %v2925
    %v3246 = vunpack.c.l.b16 %v2926
    %v3247 = vunpack.c.h.b16 %v2926
    %v3248 = vunpack.c.l.b16 %v2927
    %v3249 = vunpack.c.l.b16 %v2928
    %v3250 = vunpack.c.h.b16 %v2928
    %v3251 = vunpack.c.l.b16 %v2929
    %v3252 = vunpack.c.l.b16 %v2930
    %v3253 = vunpack.c.h.b16 %v2930
    %v3254 = vunpack.c.l.b16 %v2931
    %v3255 = vunpack.c.l.b16 %v2932
    %v3256 = vunpack.c.h.b16 %v2932
    %v3257 = vunpack.c.l.b16 %v2933
    %v3258 = vunpack.c.l.b16 %v2934
    %v3259 = vunpack.c.h.b16 %v2934
    %v3260 = vunpack.c.l.b16 %v2935
    %v3261 = vunpack.c.l.b16 %v2936
    %v3262 = vunpack.c.h.b16 %v2936
    %v3263 = vunpack.c.l.b16 %v2937
    %v3264 = vunpack.c.l.b16 %v2938
    %v3265 = vunpack.c.h.b16 %v2938
    %v3266 = vunpack.c.l.b16 %v2939
    %v3267 = vunpack.c.l.b16 %v2940
    %v3268 = vunpack.c.h.b16 %v2940
    %v3269 = vunpack.c.l.b16 %v2941
    %v3270 = vunpack.c.l.b16 %v2942
    %v3271 = vunpack.c.h.b16 %v2942
    %v3272 = vunpack.c.l.b16 %v2943
    %v3273 = vunpack.c.l.b16 %v2944
    %v3274 = vunpack.c.h.b16 %v2944
    %v3275 = vunpack.c.l.b16 %v2945
    %v3276 = vunpack.c.l.b16 %v2946
    %v3277 = vunpack.c.h.b16 %v2946
    %v3278 = vunpack.c.l.b16 %v2947
    %v3279 = vunpack.c.l.b16 %v2948
    %v3280 = vunpack.c.h.b16 %v2948
    %v3281 = vunpack.c.l.b16 %v2949
    %v3282 = vpack.c.b16 %v3093, %v3090
    %v3283 = vpack.c.b16 %v3094, %v3091
    %v3284 = vpack.c.b16 %v3095, %v3092
    %v3285 = vpack.c.b16 %v3099, %v3096
    %v3286 = vpack.c.b16 %v3100, %v3097
    %v3287 = vpack.c.b16 %v3101, %v3098
    %v3288 = vpack.c.b16 %v3105, %v3102
    %v3289 = vpack.c.b16 %v3106, %v3103
    %v3290 = vpack.c.b16 %v3107, %v3104
    %v3291 = vpack.c.b16 %v3111, %v3108
    %v3292 = vpack.c.b16 %v3112, %v3109
    %v3293 = vpack.c.b16 %v3113, %v3110
    %v3294 = vpack.c.b16 %v3117, %v3114
    %v3295 = vpack.c.b16 %v3118, %v3115
    %v3296 = vpack.c.b16 %v3119, %v3116
    %v3297 = vpack.c.b16 %v3123, %v3120
    %v3298 = vpack.c.b16 %v3124, %v3121
    %v3299 = vpack.c.b16 %v3125, %v3122
    %v3300 = vpack.c.b16 %v3129, %v3126
    %v3301 = vpack.c.b16 %v3130, %v3127
    %v3302 = vpack.c.b16 %v3131, %v3128
    %v3303 = vpack.c.b16 %v3135, %v3132
    %v3304 = vpack.c.b16 %v3136, %v3133
    %v3305 = vpack.c.b16 %v3137, %v3134
    %v3306 = vpack.c.b16 %v3141, %v3138
    %v3307 = vpack.c.b16 %v3142, %v3139
    %v3308 = vpack.c.b16 %v3143, %v3140
    %v3309 = vpack.c.b16 %v3147, %v3144
    %v3310 = vpack.c.b16 %v3148, %v3145
    %v3311 = vpack.c.b16 %v3149, %v3146
    %v3312 = vpack.c.b16 %v3153, %v3150
    %v3313 = vpack.c.b16 %v3154, %v3151
    %v3314 = vpack.c.b16 %v3155, %v3152
    %v3315 = vpack.c.b16 %v3159, %v3156
    %v3316 = vpack.c.b16 %v3160, %v3157
    %v3317 = vpack.c.b16 %v3161, %v3158
    %v3318 = vpack.c.b16 %v3165, %v3162
    %v3319 = vpack.c.b16 %v3166, %v3163
    %v3320 = vpack.c.b16 %v3167, %v3164
    %v3321 = vpack.c.b16 %v3171, %v3168
    %v3322 = vpack.c.b16 %v3172, %v3169
    %v3323 = vpack.c.b16 %v3173, %v3170
    %v3324 = vpack.c.b16 %v3177, %v3174
    %v3325 = vpack.c.b16 %v3178, %v3175
    %v3326 = vpack.c.b16 %v3179, %v3176
    %v3327 = vpack.c.b16 %v3183, %v3180
    %v3328 = vpack.c.b16 %v3184, %v3181
    %v3329 = vpack.c.b16 %v3185, %v3182
    %v3330 = vpack.c.b16 %v3189, %v3186
    %v3331 = vpack.c.b16 %v3190, %v3187
    %v3332 = vpack.c.b16 %v3191, %v3188
    %v3333 = vpack.c.b16 %v3195, %v3192
    %v3334 = vpack.c.b16 %v3196, %v3193
    %v3335 = vpack.c.b16 %v3197, %v3194
    %v3336 = vpack.c.b16 %v3201, %v3198
    %v3337 = vpack.c.b16 %v3202, %v3199
    %v3338 = vpack.c.b16 %v3203, %v3200
    %v3339 = vpack.c.b16 %v3207, %v3204
    %v3340 = vpack.c.b16 %v3208, %v3205
    %v3341 = vpack.c.b16 %v3209, %v3206
    %v3342 = vpack.c.b16 %v3213, %v3210
    %v3343 = vpack.c.b16 %v3214, %v3211
    %v3344 = vpack.c.b16 %v3215, %v3212
    %v3345 = vpack.c.b16 %v3219, %v3216
    %v3346 = vpack.c.b16 %v3220, %v3217
    %v3347 = vpack.c.b16 %v3221, %v3218
    %v3348 = vpack.c.b16 %v3225, %v3222
    %v3349 = vpack.c.b16 %v3226, %v3223
    %v3350 = vpack.c.b16 %v3227, %v3224
    %v3351 = vpack.c.b16 %v3231, %v3228
    %v3352 = vpack.c.b16 %v3232, %v3229
    %v3353 = vpack.c.b16 %v3233, %v3230
    %v3354 = vpack.c.b16 %v3237, %v3234
    %v3355 = vpack.c.b16 %v3238, %v3235
    %v3356 = vpack.c.b16 %v3239, %v3236
    %v3357 = vpack.c.b16 %v3243, %v3240
    %v3358 = vpack.c.b16 %v3244, %v3241
    %v3359 = vpack.c.b16 %v3245, %v3242
    %v3360 = vpack.c.b16 %v3249, %v3246
    %v3361 = vpack.c.b16 %v3250, %v3247
    %v3362 = vpack.c.b16 %v3251, %v3248
    %v3363 = vpack.c.b16 %v3255, %v3252
    %v3364 = vpack.c.b16 %v3256, %v3253
    %v3365 = vpack.c.b16 %v3257, %v3254
    %v3366 = vpack.c.b16 %v3261, %v3258
    %v3367 = vpack.c.b16 %v3262, %v3259
    %v3368 = vpack.c.b16 %v3263, %v3260
    %v3369 = vpack.c.b16 %v3267, %v3264
    %v3370 = vpack.c.b16 %v3268, %v3265
    %v3371 = vpack.c.b16 %v3269, %v3266
    %v3372 = vpack.c.b16 %v3273, %v3270
    %v3373 = vpack.c.b16 %v3274, %v3271
    %v3374 = vpack.c.b16 %v3275, %v3272
    %v3375 = vpack.c.b16 %v3279, %v3276
    %v3376 = vpack.c.b16 %v3280, %v3277
    %v3377 = vpack.c.b16 %v3281, %v3278
    %3474 = vmatprep.subr.bf16.mxu0 %v3304
    %3475 = vmatpush1.bf16.msra.mxu0 %v3303
    %3476 = vmatprep.subr.bf16.mxu0 %v3301
    %3477 = vmatpush1.bf16.msra.mxu0 %v3300
    %3478 = vmatprep.subr.bf16.mxu0 %v3298
    %3479 = vmatpush1.bf16.msra.mxu0 %v3297
    %3480 = vmatprep.subr.bf16.mxu0 %v3295
    %3481 = vmatpush1.bf16.msra.mxu0 %v3294
    %3482 = vmatprep.subr.bf16.mxu0 %v3292
    %3483 = vmatpush1.bf16.msra.mxu0 %v3291
    %3484 = vmatprep.subr.bf16.mxu0 %v3289
    %3485 = vmatpush1.bf16.msra.mxu0 %v3288
    %3486 = vmatprep.subr.bf16.mxu0 %v3286
    %3487 = vmatpush1.bf16.msra.mxu0 %v3285
    %3488 = vmatprep.subr.bf16.mxu0 %v3283
    %3489 = vmatpush1.bf16.msra.mxu0 %v3282
    %3490 = vmatprep.subr.bf16.mxu0 %v3328
    %3491 = vmatpush2.bf16.msra.mxu0 %v3327
    %3492 = vmatprep.subr.bf16.mxu0 %v3325
    %3493 = vmatpush2.bf16.msra.mxu0 %v3324
    %3494 = vmatprep.subr.bf16.mxu0 %v3322
    %3495 = vmatpush2.bf16.msra.mxu0 %v3321
    %3496 = vmatprep.subr.bf16.mxu0 %v3319
    %3497 = vmatpush2.bf16.msra.mxu0 %v3318
    %3498 = vmatprep.subr.bf16.mxu0 %v3316
    %3499 = vmatpush2.bf16.msra.mxu0 %v3315
    %3500 = vmatprep.subr.bf16.mxu0 %v3313
    %3501 = vmatpush2.bf16.msra.mxu0 %v3312
    %3502 = vmatprep.subr.bf16.mxu0 %v3310
    %3503 = vmatpush2.bf16.msra.mxu0 %v3309
    %3504 = vmatprep.subr.bf16.mxu0 %v3307
    %3505 = vmatpush2.bf16.msra.mxu0 %v3306
    %3506 = vmatprep.mubr.bf16.mxu0 %v1643
    %3507 = vmatmul.mubr.bf16.gmra.mxu0 %v1642
    %v3508 = vpop.f32.mrf.mxu0
    %v3509 = vadd.f32 %v2953, %v3508
    %v3510 = vpop.f32.mrf.mxu0
    %v3511 = vadd.f32 %v2957, %v3510
    %v3512 = vpop.f32.mrf.mxu0
    %v3513 = vadd.f32 %v2953, %v3512
    %v3514 = vpop.f32.mrf.mxu0
    %v3515 = vadd.f32 %v2957, %v3514
    %3516 = vmatprep.mubr.bf16.mxu0 %v1651
    %3517 = vmatmul.mubr.bf16.gmra.mxu0 %v1650
    %v3518 = vpop.f32.mrf.mxu0
    %v3519 = vadd.f32 %v2953, %v3518
    %v3520 = vpop.f32.mrf.mxu0
    %v3521 = vadd.f32 %v2957, %v3520
    %v3522 = vpop.f32.mrf.mxu0
    %v3523 = vadd.f32 %v2953, %v3522
    %v3524 = vpop.f32.mrf.mxu0
    %v3525 = vadd.f32 %v2957, %v3524
    %3526 = vmatprep.mubr.bf16.mxu0 %v1659
    %3527 = vmatmul.mubr.bf16.gmra.mxu0 %v1658
    %v3528 = vpop.f32.mrf.mxu0
    %v3529 = vadd.f32 %v2953, %v3528
    %v3530 = vpop.f32.mrf.mxu0
    %v3531 = vadd.f32 %v2957, %v3530
    %v3532 = vpop.f32.mrf.mxu0
    %v3533 = vadd.f32 %v2953, %v3532
    %v3534 = vpop.f32.mrf.mxu0
    %v3535 = vadd.f32 %v2957, %v3534
    %3536 = vmatprep.mubr.bf16.mxu0 %v1667
    %3537 = vmatmul.mubr.bf16.gmra.mxu0 %v1666
    %v3538 = vpop.f32.mrf.mxu0
    %v3539 = vadd.f32 %v2953, %v3538
    %v3540 = vpop.f32.mrf.mxu0
    %v3541 = vadd.f32 %v2957, %v3540
    %v3542 = vpop.f32.mrf.mxu0
    %v3543 = vadd.f32 %v2953, %v3542
    %v3544 = vpop.f32.mrf.mxu0
    %v3545 = vadd.f32 %v2957, %v3544
    %3546 = vmatprep.mubr.bf16.mxu0 %v1675
    %3547 = vmatmul.mubr.bf16.gmra.mxu0 %v1674
    %v3548 = vpop.f32.mrf.mxu0
    %v3549 = vadd.f32 %v2953, %v3548
    %v3550 = vpop.f32.mrf.mxu0
    %v3551 = vadd.f32 %v2957, %v3550
    %v3552 = vpop.f32.mrf.mxu0
    %v3553 = vadd.f32 %v2953, %v3552
    %v3554 = vpop.f32.mrf.mxu0
    %v3555 = vadd.f32 %v2957, %v3554
    %3556 = vmatprep.mubr.bf16.mxu0 %v1683
    %3557 = vmatmul.mubr.bf16.gmra.mxu0 %v1682
    %v3558 = vpop.f32.mrf.mxu0
    %v3559 = vadd.f32 %v2953, %v3558
    %v3560 = vpop.f32.mrf.mxu0
    %v3561 = vadd.f32 %v2957, %v3560
    %v3562 = vpop.f32.mrf.mxu0
    %v3563 = vadd.f32 %v2953, %v3562
    %v3564 = vpop.f32.mrf.mxu0
    %v3565 = vadd.f32 %v2957, %v3564
    %3566 = vmatprep.mubr.bf16.mxu0 %v1691
    %3567 = vmatmul.mubr.bf16.gmra.mxu0 %v1690
    %v3568 = vpop.f32.mrf.mxu0
    %v3569 = vadd.f32 %v2953, %v3568
    %v3570 = vpop.f32.mrf.mxu0
    %v3571 = vadd.f32 %v2957, %v3570
    %v3572 = vpop.f32.mrf.mxu0
    %v3573 = vadd.f32 %v2953, %v3572
    %v3574 = vpop.f32.mrf.mxu0
    %v3575 = vadd.f32 %v2957, %v3574
    %3576 = vmatprep.mubr.bf16.mxu0 %v1699
    %3577 = vmatmul.mubr.bf16.gmra.mxu0 %v1698
    %v3578 = vpop.f32.mrf.mxu0
    %v3579 = vadd.f32 %v2953, %v3578
    %v3580 = vpop.f32.mrf.mxu0
    %v3581 = vadd.f32 %v2957, %v3580
    %v3582 = vpop.f32.mrf.mxu0
    %v3583 = vadd.f32 %v2953, %v3582
    %v3584 = vpop.f32.mrf.mxu0
    %v3585 = vadd.f32 %v2957, %v3584
    %3586 = vdwg.mxu0
    %3587 = vmatprep.subr.bf16.mxu0 %v3352
    %3588 = vmatpush1.bf16.msra.mxu0 %v3351
    %3589 = vmatprep.subr.bf16.mxu0 %v3349
    %3590 = vmatpush1.bf16.msra.mxu0 %v3348
    %3591 = vmatprep.subr.bf16.mxu0 %v3346
    %3592 = vmatpush1.bf16.msra.mxu0 %v3345
    %3593 = vmatprep.subr.bf16.mxu0 %v3343
    %3594 = vmatpush1.bf16.msra.mxu0 %v3342
    %3595 = vmatprep.subr.bf16.mxu0 %v3340
    %3596 = vmatpush1.bf16.msra.mxu0 %v3339
    %3597 = vmatprep.subr.bf16.mxu0 %v3337
    %3598 = vmatpush1.bf16.msra.mxu0 %v3336
    %3599 = vmatprep.subr.bf16.mxu0 %v3334
    %3600 = vmatpush1.bf16.msra.mxu0 %v3333
    %3601 = vmatprep.subr.bf16.mxu0 %v3331
    %3602 = vmatpush1.bf16.msra.mxu0 %v3330
    %3603 = vmatprep.subr.bf16.mxu0 %v3376
    %3604 = vmatpush2.bf16.msra.mxu0 %v3375
    %3605 = vmatprep.subr.bf16.mxu0 %v3373
    %3606 = vmatpush2.bf16.msra.mxu0 %v3372
    %3607 = vmatprep.subr.bf16.mxu0 %v3370
    %3608 = vmatpush2.bf16.msra.mxu0 %v3369
    %3609 = vmatprep.subr.bf16.mxu0 %v3367
    %3610 = vmatpush2.bf16.msra.mxu0 %v3366
    %3611 = vmatprep.subr.bf16.mxu0 %v3364
    %3612 = vmatpush2.bf16.msra.mxu0 %v3363
    %3613 = vmatprep.subr.bf16.mxu0 %v3361
    %3614 = vmatpush2.bf16.msra.mxu0 %v3360
    %3615 = vmatprep.subr.bf16.mxu0 %v3358
    %3616 = vmatpush2.bf16.msra.mxu0 %v3357
    %3617 = vmatprep.subr.bf16.mxu0 %v3355
    %3618 = vmatpush2.bf16.msra.mxu0 %v3354
    %3619 = vmatprep.mubr.bf16.mxu0 %v1645
    %3620 = vmatmul.mubr.bf16.gmra.mxu0 %v1644
    %v3621 = vpop.f32.mrf.mxu0
    %v3622 = vadd.f32 %v3509, %v3621
    %v3623 = vpop.f32.mrf.mxu0
    %v3624 = vadd.f32 %v3511, %v3623
    %v3625 = vpop.f32.mrf.mxu0
    %v3626 = vadd.f32 %v3513, %v3625
    %v3627 = vpop.f32.mrf.mxu0
    %v3628 = vadd.f32 %v3515, %v3627
    %3629 = vmatprep.mubr.bf16.mxu0 %v1653
    %3630 = vmatmul.mubr.bf16.gmra.mxu0 %v1652
    %v3631 = vpop.f32.mrf.mxu0
    %v3632 = vadd.f32 %v3519, %v3631
    %v3633 = vpop.f32.mrf.mxu0
    %v3634 = vadd.f32 %v3521, %v3633
    %v3635 = vpop.f32.mrf.mxu0
    %v3636 = vadd.f32 %v3523, %v3635
    %v3637 = vpop.f32.mrf.mxu0
    %v3638 = vadd.f32 %v3525, %v3637
    %3639 = vmatprep.mubr.bf16.mxu0 %v1661
    %3640 = vmatmul.mubr.bf16.gmra.mxu0 %v1660
    %v3641 = vpop.f32.mrf.mxu0
    %v3642 = vadd.f32 %v3529, %v3641
    %v3643 = vpop.f32.mrf.mxu0
    %v3644 = vadd.f32 %v3531, %v3643
    %v3645 = vpop.f32.mrf.mxu0
    %v3646 = vadd.f32 %v3533, %v3645
    %v3647 = vpop.f32.mrf.mxu0
    %v3648 = vadd.f32 %v3535, %v3647
    %3649 = vmatprep.mubr.bf16.mxu0 %v1669
    %3650 = vmatmul.mubr.bf16.gmra.mxu0 %v1668
    %v3651 = vpop.f32.mrf.mxu0
    %v3652 = vadd.f32 %v3539, %v3651
    %v3653 = vpop.f32.mrf.mxu0
    %v3654 = vadd.f32 %v3541, %v3653
    %v3655 = vpop.f32.mrf.mxu0
    %v3656 = vadd.f32 %v3543, %v3655
    %v3657 = vpop.f32.mrf.mxu0
    %v3658 = vadd.f32 %v3545, %v3657
    %3659 = vmatprep.mubr.bf16.mxu0 %v1677
    %3660 = vmatmul.mubr.bf16.gmra.mxu0 %v1676
    %v3661 = vpop.f32.mrf.mxu0
    %v3662 = vadd.f32 %v3549, %v3661
    %v3663 = vpop.f32.mrf.mxu0
    %v3664 = vadd.f32 %v3551, %v3663
    %v3665 = vpop.f32.mrf.mxu0
    %v3666 = vadd.f32 %v3553, %v3665
    %v3667 = vpop.f32.mrf.mxu0
    %v3668 = vadd.f32 %v3555, %v3667
    %3669 = vmatprep.mubr.bf16.mxu0 %v1685
    %3670 = vmatmul.mubr.bf16.gmra.mxu0 %v1684
    %v3671 = vpop.f32.mrf.mxu0
    %v3672 = vadd.f32 %v3559, %v3671
    %v3673 = vpop.f32.mrf.mxu0
    %v3674 = vadd.f32 %v3561, %v3673
    %v3675 = vpop.f32.mrf.mxu0
    %v3676 = vadd.f32 %v3563, %v3675
    %v3677 = vpop.f32.mrf.mxu0
    %v3678 = vadd.f32 %v3565, %v3677
    %3679 = vmatprep.mubr.bf16.mxu0 %v1693
    %3680 = vmatmul.mubr.bf16.gmra.mxu0 %v1692
    %v3681 = vpop.f32.mrf.mxu0
    %v3682 = vadd.f32 %v3569, %v3681
    %v3683 = vpop.f32.mrf.mxu0
    %v3684 = vadd.f32 %v3571, %v3683
    %v3685 = vpop.f32.mrf.mxu0
    %v3686 = vadd.f32 %v3573, %v3685
    %v3687 = vpop.f32.mrf.mxu0
    %v3688 = vadd.f32 %v3575, %v3687
    %3689 = vmatprep.mubr.bf16.mxu0 %v1701
    %3690 = vmatmul.mubr.bf16.gmra.mxu0 %v1700
    %v3691 = vpop.f32.mrf.mxu0
    %v3692 = vadd.f32 %v3579, %v3691
    %v3693 = vpop.f32.mrf.mxu0
    %v3694 = vadd.f32 %v3581, %v3693
    %v3695 = vpop.f32.mrf.mxu0
    %v3696 = vadd.f32 %v3583, %v3695
    %v3697 = vpop.f32.mrf.mxu0
    %v3698 = vadd.f32 %v3585, %v3697
    %3699 = vdwg.mxu0
    %3700 = vmatprep.subr.bf16.mxu0 0
    %3701 = vmatpush1.bf16.msra.mxu0 %v3305
    %3702 = vmatprep.subr.bf16.mxu0 0
    %3703 = vmatpush1.bf16.msra.mxu0 %v3302
    %3704 = vmatprep.subr.bf16.mxu0 0
    %3705 = vmatpush1.bf16.msra.mxu0 %v3299
    %3706 = vmatprep.subr.bf16.mxu0 0
    %3707 = vmatpush1.bf16.msra.mxu0 %v3296
    %3708 = vmatprep.subr.bf16.mxu0 0
    %3709 = vmatpush1.bf16.msra.mxu0 %v3293
    %3710 = vmatprep.subr.bf16.mxu0 0
    %3711 = vmatpush1.bf16.msra.mxu0 %v3290
    %3712 = vmatprep.subr.bf16.mxu0 0
    %3713 = vmatpush1.bf16.msra.mxu0 %v3287
    %3714 = vmatprep.subr.bf16.mxu0 0
    %3715 = vmatpush1.bf16.msra.mxu0 %v3284
    %3716 = vmatprep.subr.bf16.mxu0 0
    %3717 = vmatpush2.bf16.msra.mxu0 %v3329
    %3718 = vmatprep.subr.bf16.mxu0 0
    %3719 = vmatpush2.bf16.msra.mxu0 %v3326
    %3720 = vmatprep.subr.bf16.mxu0 0
    %3721 = vmatpush2.bf16.msra.mxu0 %v3323
    %3722 = vmatprep.subr.bf16.mxu0 0
    %3723 = vmatpush2.bf16.msra.mxu0 %v3320
    %3724 = vmatprep.subr.bf16.mxu0 0
    %3725 = vmatpush2.bf16.msra.mxu0 %v3317
    %3726 = vmatprep.subr.bf16.mxu0 0
    %3727 = vmatpush2.bf16.msra.mxu0 %v3314
    %3728 = vmatprep.subr.bf16.mxu0 0
    %3729 = vmatpush2.bf16.msra.mxu0 %v3311
    %3730 = vmatprep.subr.bf16.mxu0 0
    %3731 = vmatpush2.bf16.msra.mxu0 %v3308
    %3732 = vmatprep.mubr.bf16.mxu0 %v1643
    %3733 = vmatmul.mubr.bf16.gmra.mxu0 %v1642
    %v3734 = vpop.f32.mrf.mxu0
    %v3735 = vadd.f32 %v2961, %v3734
    %v3736 = vpop.f32.mrf.mxu0
    %v3737 = vpop.f32.mrf.mxu0
    %v3738 = vadd.f32 %v2961, %v3737
    %v3739 = vpop.f32.mrf.mxu0
    %3740 = vmatprep.mubr.bf16.mxu0 %v1651
    %3741 = vmatmul.mubr.bf16.gmra.mxu0 %v1650
    %v3742 = vpop.f32.mrf.mxu0
    %v3743 = vadd.f32 %v2961, %v3742
    %v3744 = vpop.f32.mrf.mxu0
    %v3745 = vpop.f32.mrf.mxu0
    %v3746 = vadd.f32 %v2961, %v3745
    %v3747 = vpop.f32.mrf.mxu0
    %3748 = vmatprep.mubr.bf16.mxu0 %v1659
    %3749 = vmatmul.mubr.bf16.gmra.mxu0 %v1658
    %v3750 = vpop.f32.mrf.mxu0
    %v3751 = vadd.f32 %v2961, %v3750
    %v3752 = vpop.f32.mrf.mxu0
    %v3753 = vpop.f32.mrf.mxu0
    %v3754 = vadd.f32 %v2961, %v3753
    %v3755 = vpop.f32.mrf.mxu0
    %3756 = vmatprep.mubr.bf16.mxu0 %v1667
    %3757 = vmatmul.mubr.bf16.gmra.mxu0 %v1666
    %v3758 = vpop.f32.mrf.mxu0
    %v3759 = vadd.f32 %v2961, %v3758
    %v3760 = vpop.f32.mrf.mxu0
    %v3761 = vpop.f32.mrf.mxu0
    %v3762 = vadd.f32 %v2961, %v3761
    %v3763 = vpop.f32.mrf.mxu0
    %3764 = vmatprep.mubr.bf16.mxu0 %v1675
    %3765 = vmatmul.mubr.bf16.gmra.mxu0 %v1674
    %v3766 = vpop.f32.mrf.mxu0
    %v3767 = vadd.f32 %v2961, %v3766
    %v3768 = vpop.f32.mrf.mxu0
    %v3769 = vpop.f32.mrf.mxu0
    %v3770 = vadd.f32 %v2961, %v3769
    %v3771 = vpop.f32.mrf.mxu0
    %3772 = vmatprep.mubr.bf16.mxu0 %v1683
    %3773 = vmatmul.mubr.bf16.gmra.mxu0 %v1682
    %v3774 = vpop.f32.mrf.mxu0
    %v3775 = vadd.f32 %v2961, %v3774
    %v3776 = vpop.f32.mrf.mxu0
    %v3777 = vpop.f32.mrf.mxu0
    %v3778 = vadd.f32 %v2961, %v3777
    %v3779 = vpop.f32.mrf.mxu0
    %3780 = vmatprep.mubr.bf16.mxu0 %v1691
    %3781 = vmatmul.mubr.bf16.gmra.mxu0 %v1690
    %v3782 = vpop.f32.mrf.mxu0
    %v3783 = vadd.f32 %v2961, %v3782
    %v3784 = vpop.f32.mrf.mxu0
    %v3785 = vpop.f32.mrf.mxu0
    %v3786 = vadd.f32 %v2961, %v3785
    %v3787 = vpop.f32.mrf.mxu0
    %3788 = vmatprep.mubr.bf16.mxu0 %v1699
    %3789 = vmatmul.mubr.bf16.gmra.mxu0 %v1698
    %v3790 = vpop.f32.mrf.mxu0
    %v3791 = vadd.f32 %v2961, %v3790
    %v3792 = vpop.f32.mrf.mxu0
    %v3793 = vpop.f32.mrf.mxu0
    %v3794 = vadd.f32 %v2961, %v3793
    %v3795 = vpop.f32.mrf.mxu0
    %3796 = vdwg.mxu0
    %3797 = vmatprep.subr.bf16.mxu0 0
    %3798 = vmatpush1.bf16.msra.mxu0 %v3353
    %3799 = vmatprep.subr.bf16.mxu0 0
    %3800 = vmatpush1.bf16.msra.mxu0 %v3350
    %3801 = vmatprep.subr.bf16.mxu0 0
    %3802 = vmatpush1.bf16.msra.mxu0 %v3347
    %3803 = vmatprep.subr.bf16.mxu0 0
    %3804 = vmatpush1.bf16.msra.mxu0 %v3344
    %3805 = vmatprep.subr.bf16.mxu0 0
    %3806 = vmatpush1.bf16.msra.mxu0 %v3341
    %3807 = vmatprep.subr.bf16.mxu0 0
    %3808 = vmatpush1.bf16.msra.mxu0 %v3338
    %3809 = vmatprep.subr.bf16.mxu0 0
    %3810 = vmatpush1.bf16.msra.mxu0 %v3335
    %3811 = vmatprep.subr.bf16.mxu0 0
    %3812 = vmatpush1.bf16.msra.mxu0 %v3332
    %3813 = vmatprep.subr.bf16.mxu0 0
    %3814 = vmatpush2.bf16.msra.mxu0 %v3377
    %3815 = vmatprep.subr.bf16.mxu0 0
    %3816 = vmatpush2.bf16.msra.mxu0 %v3374
    %3817 = vmatprep.subr.bf16.mxu0 0
    %3818 = vmatpush2.bf16.msra.mxu0 %v3371
    %3819 = vmatprep.subr.bf16.mxu0 0
    %3820 = vmatpush2.bf16.msra.mxu0 %v3368
    %3821 = vmatprep.subr.bf16.mxu0 0
    %3822 = vmatpush2.bf16.msra.mxu0 %v3365
    %3823 = vmatprep.subr.bf16.mxu0 0
    %3824 = vmatpush2.bf16.msra.mxu0 %v3362
    %3825 = vmatprep.subr.bf16.mxu0 0
    %3826 = vmatpush2.bf16.msra.mxu0 %v3359
    %3827 = vmatprep.subr.bf16.mxu0 0
    %3828 = vmatpush2.bf16.msra.mxu0 %v3356
    %3829 = vmatprep.mubr.bf16.mxu0 %v1645
    %3830 = vmatmul.mubr.bf16.gmra.mxu0 %v1644
    %v3831 = vpop.f32.mrf.mxu0
    %v3832 = vadd.f32 %v3735, %v3831
    %v3833 = vpop.f32.mrf.mxu0
    %v3834 = vpop.f32.mrf.mxu0
    %v3835 = vadd.f32 %v3738, %v3834
    %v3836 = vpop.f32.mrf.mxu0
    %3837 = vmatprep.mubr.bf16.mxu0 %v1653
    %3838 = vmatmul.mubr.bf16.gmra.mxu0 %v1652
    %v3839 = vpop.f32.mrf.mxu0
    %v3840 = vadd.f32 %v3743, %v3839
    %v3841 = vpop.f32.mrf.mxu0
    %v3842 = vpop.f32.mrf.mxu0
    %v3843 = vadd.f32 %v3746, %v3842
    %v3844 = vpop.f32.mrf.mxu0
    %3845 = vmatprep.mubr.bf16.mxu0 %v1661
    %3846 = vmatmul.mubr.bf16.gmra.mxu0 %v1660
    %v3847 = vpop.f32.mrf.mxu0
    %v3848 = vadd.f32 %v3751, %v3847
    %v3849 = vpop.f32.mrf.mxu0
    %v3850 = vpop.f32.mrf.mxu0
    %v3851 = vadd.f32 %v3754, %v3850
    %v3852 = vpop.f32.mrf.mxu0
    %3853 = vmatprep.mubr.bf16.mxu0 %v1669
    %3854 = vmatmul.mubr.bf16.gmra.mxu0 %v1668
    %v3855 = vpop.f32.mrf.mxu0
    %v3856 = vadd.f32 %v3759, %v3855
    %v3857 = vpop.f32.mrf.mxu0
    %v3858 = vpop.f32.mrf.mxu0
    %v3859 = vadd.f32 %v3762, %v3858
    %v3860 = vpop.f32.mrf.mxu0
    %3861 = vmatprep.mubr.bf16.mxu0 %v1677
    %3862 = vmatmul.mubr.bf16.gmra.mxu0 %v1676
    %v3863 = vpop.f32.mrf.mxu0
    %v3864 = vadd.f32 %v3767, %v3863
    %v3865 = vpop.f32.mrf.mxu0
    %v3866 = vpop.f32.mrf.mxu0
    %v3867 = vadd.f32 %v3770, %v3866
    %v3868 = vpop.f32.mrf.mxu0
    %3869 = vmatprep.mubr.bf16.mxu0 %v1685
    %3870 = vmatmul.mubr.bf16.gmra.mxu0 %v1684
    %v3871 = vpop.f32.mrf.mxu0
    %v3872 = vadd.f32 %v3775, %v3871
    %v3873 = vpop.f32.mrf.mxu0
    %v3874 = vpop.f32.mrf.mxu0
    %v3875 = vadd.f32 %v3778, %v3874
    %v3876 = vpop.f32.mrf.mxu0
    %3877 = vmatprep.mubr.bf16.mxu0 %v1693
    %3878 = vmatmul.mubr.bf16.gmra.mxu0 %v1692
    %v3879 = vpop.f32.mrf.mxu0
    %v3880 = vadd.f32 %v3783, %v3879
    %v3881 = vpop.f32.mrf.mxu0
    %v3882 = vpop.f32.mrf.mxu0
    %v3883 = vadd.f32 %v3786, %v3882
    %v3884 = vpop.f32.mrf.mxu0
    %3885 = vmatprep.mubr.bf16.mxu0 %v1701
    %3886 = vmatmul.mubr.bf16.gmra.mxu0 %v1700
    %v3887 = vpop.f32.mrf.mxu0
    %v3888 = vadd.f32 %v3791, %v3887
    %v3889 = vpop.f32.mrf.mxu0
    %v3890 = vpop.f32.mrf.mxu0
    %v3891 = vadd.f32 %v3794, %v3890
    %v3892 = vpop.f32.mrf.mxu0
    %3893 = vdwg.mxu0
    %v3894 = vmax.f32 %v3622, 0.0
    %v3895 = vmax.f32 %v3624, 0.0
    %v3896 = vmax.f32 %v3832, 0.0
    %v3897 = vmax.f32 %v3626, 0.0
    %v3898 = vmax.f32 %v3628, 0.0
    %v3899 = vmax.f32 %v3835, 0.0
    %v3900 = vmax.f32 %v3632, 0.0
    %v3901 = vmax.f32 %v3634, 0.0
    %v3902 = vmax.f32 %v3840, 0.0
    %v3903 = vmax.f32 %v3636, 0.0
    %v3904 = vmax.f32 %v3638, 0.0
    %v3905 = vmax.f32 %v3843, 0.0
    %v3906 = vmax.f32 %v3642, 0.0
    %v3907 = vmax.f32 %v3644, 0.0
    %v3908 = vmax.f32 %v3848, 0.0
    %v3909 = vmax.f32 %v3646, 0.0
    %v3910 = vmax.f32 %v3648, 0.0
    %v3911 = vmax.f32 %v3851, 0.0
    %v3912 = vmax.f32 %v3652, 0.0
    %v3913 = vmax.f32 %v3654, 0.0
    %v3914 = vmax.f32 %v3856, 0.0
    %v3915 = vmax.f32 %v3656, 0.0
    %v3916 = vmax.f32 %v3658, 0.0
    %v3917 = vmax.f32 %v3859, 0.0
    %v3918 = vmax.f32 %v3662, 0.0
    %v3919 = vmax.f32 %v3664, 0.0
    %v3920 = vmax.f32 %v3864, 0.0
    %v3921 = vmax.f32 %v3666, 0.0
    %v3922 = vmax.f32 %v3668, 0.0
    %v3923 = vmax.f32 %v3867, 0.0
    %v3924 = vmax.f32 %v3672, 0.0
    %v3925 = vmax.f32 %v3674, 0.0
    %v3926 = vmax.f32 %v3872, 0.0
    %v3927 = vmax.f32 %v3676, 0.0
    %v3928 = vmax.f32 %v3678, 0.0
    %v3929 = vmax.f32 %v3875, 0.0
    %v3930 = vmax.f32 %v3682, 0.0
    %v3931 = vmax.f32 %v3684, 0.0
    %v3932 = vmax.f32 %v3880, 0.0
    %v3933 = vmax.f32 %v3686, 0.0
    %v3934 = vmax.f32 %v3688, 0.0
    %v3935 = vmax.f32 %v3883, 0.0
    %v3936 = vmax.f32 %v3692, 0.0
    %v3937 = vmax.f32 %v3694, 0.0
    %v3938 = vmax.f32 %v3888, 0.0
    %v3939 = vmax.f32 %v3696, 0.0
    %v3940 = vmax.f32 %v3698, 0.0
    %v3941 = vmax.f32 %v3891, 0.0
    %v3942 = vld [vmem:[#allocation2 + $0x58] sm:$0xf]
    %v3943 = vld [vmem:[#allocation2 + $0x78] sm:$0xf]
    %v3944 = vld [vmem:[#allocation2 + $0x98] sm:$0xf]
    %v3945 = vld [vmem:[#allocation2 + $0xb8] sm:$0xf]
    %v3946 = vld [vmem:[#allocation2 + $0xd8] sm:$0xf]
    %v3947 = vld [vmem:[#allocation2 + $0xf8] sm:$0xf]
    %v3948 = vld [vmem:[#allocation2 + $0x118] sm:$0xf]
    %v3949 = vld [vmem:[#allocation2 + $0x138] sm:$0xf]
    %v3950 = vld [vmem:[#allocation2 + $0x158] sm:$0xf]
    %v3951 = vld [vmem:[#allocation2 + $0x178] sm:$0xf]
    %v3952 = vld [vmem:[#allocation2 + $0x198] sm:$0xf]
    %v3953 = vld [vmem:[#allocation2 + $0x1b8] sm:$0xf]
    %v3954 = vld [vmem:[#allocation2 + $0x1d8] sm:$0xf]
    %v3955 = vld [vmem:[#allocation2 + $0x1f8] sm:$0xf]
    %v3956 = vld [vmem:[#allocation2 + $0x218] sm:$0xf]
    %v3957 = vld [vmem:[#allocation2 + $0x238] sm:$0xf]
    %v3958 = vld [vmem:[#allocation2 + $0x258] sm:$0xf]
    %v3959 = vld [vmem:[#allocation2 + $0x278] sm:$0xf]
    %v3960 = vld [vmem:[#allocation2 + $0x298] sm:$0xf]
    %v3961 = vld [vmem:[#allocation2 + $0x2b8] sm:$0xf]
    %v3962 = vld [vmem:[#allocation2 + $0x2d8] sm:$0xf]
    %v3963 = vld [vmem:[#allocation2 + $0x2f8] sm:$0xf]
    %v3964 = vld [vmem:[#allocation2 + $0x318] sm:$0xf]
    %v3965 = vld [vmem:[#allocation2 + $0x338] sm:$0xf]
    %v3966 = vld [vmem:[#allocation2 + $0x358] sm:$0xf]
    %v3967 = vld [vmem:[#allocation2 + $0x378] sm:$0xf]
    %v3968 = vld [vmem:[#allocation2 + $0x398] sm:$0xf]
    %v3969 = vld [vmem:[#allocation2 + $0x3b8] sm:$0xf]
    %v3970 = vld [vmem:[#allocation2 + $0x3d8] sm:$0xf]
    %v3971 = vld [vmem:[#allocation2 + $0x3f8] sm:$0xf]
    %v3972 = vld [vmem:[#allocation2 + $0x418] sm:$0xf]
    %v3973 = vld [vmem:[#allocation2 + $0x438] sm:$0xf]
    %v3974 = vld [vmem:[#allocation2 + $0x458] sm:$0xf]
    %v3975 = vld [vmem:[#allocation2 + $0x478] sm:$0xf]
    %v3976 = vld [vmem:[#allocation2 + $0x498] sm:$0xf]
    %v3977 = vld [vmem:[#allocation2 + $0x4b8] sm:$0xf]
    %v3978 = vld [vmem:[#allocation2 + $0x4d8] sm:$0xf]
    %v3979 = vld [vmem:[#allocation2 + $0x4f8] sm:$0xf]
    %v3980 = vld [vmem:[#allocation2 + $0x518] sm:$0xf]
    %v3981 = vld [vmem:[#allocation2 + $0x538] sm:$0xf]
    %v3982 = vld [vmem:[#allocation2 + $0x558] sm:$0xf]
    %v3983 = vld [vmem:[#allocation2 + $0x578] sm:$0xf]
    %v3984 = vld [vmem:[#allocation2 + $0x598] sm:$0xf]
    %v3985 = vld [vmem:[#allocation2 + $0x5b8] sm:$0xf]
    %v3986 = vld [vmem:[#allocation2 + $0x5d8] sm:$0xf]
    %v3987 = vld [vmem:[#allocation2 + $0x5f8] sm:$0xf]
    %v3988 = vld [vmem:[#allocation2 + $0x618] sm:$0xf]
    %v3989 = vld [vmem:[#allocation2 + $0x638] sm:$0xf]
    %v3990 = vld [vmem:[#allocation2 + $0x5c] sm:$0xf]
    %v3991 = vld [vmem:[#allocation2 + $0x7c] sm:$0xf]
    %v3992 = vld [vmem:[#allocation2 + $0x9c] sm:$0xf]
    %v3993 = vld [vmem:[#allocation2 + $0xbc] sm:$0xf]
    %v3994 = vld [vmem:[#allocation2 + $0xdc] sm:$0xf]
    %v3995 = vld [vmem:[#allocation2 + $0xfc] sm:$0xf]
    %v3996 = vld [vmem:[#allocation2 + $0x11c] sm:$0xf]
    %v3997 = vld [vmem:[#allocation2 + $0x13c] sm:$0xf]
    %v3998 = vld [vmem:[#allocation2 + $0x15c] sm:$0xf]
    %v3999 = vld [vmem:[#allocation2 + $0x17c] sm:$0xf]
    %v4000 = vld [vmem:[#allocation2 + $0x19c] sm:$0xf]
    %v4001 = vld [vmem:[#allocation2 + $0x1bc] sm:$0xf]
    %v4002 = vld [vmem:[#allocation2 + $0x1dc] sm:$0xf]
    %v4003 = vld [vmem:[#allocation2 + $0x1fc] sm:$0xf]
    %v4004 = vld [vmem:[#allocation2 + $0x21c] sm:$0xf]
    %v4005 = vld [vmem:[#allocation2 + $0x23c] sm:$0xf]
    %v4006 = vld [vmem:[#allocation2 + $0x25c] sm:$0xf]
    %v4007 = vld [vmem:[#allocation2 + $0x27c] sm:$0xf]
    %v4008 = vld [vmem:[#allocation2 + $0x29c] sm:$0xf]
    %v4009 = vld [vmem:[#allocation2 + $0x2bc] sm:$0xf]
    %v4010 = vld [vmem:[#allocation2 + $0x2dc] sm:$0xf]
    %v4011 = vld [vmem:[#allocation2 + $0x2fc] sm:$0xf]
    %v4012 = vld [vmem:[#allocation2 + $0x31c] sm:$0xf]
    %v4013 = vld [vmem:[#allocation2 + $0x33c] sm:$0xf]
    %v4014 = vld [vmem:[#allocation2 + $0x35c] sm:$0xf]
    %v4015 = vld [vmem:[#allocation2 + $0x37c] sm:$0xf]
    %v4016 = vld [vmem:[#allocation2 + $0x39c] sm:$0xf]
    %v4017 = vld [vmem:[#allocation2 + $0x3bc] sm:$0xf]
    %v4018 = vld [vmem:[#allocation2 + $0x3dc] sm:$0xf]
    %v4019 = vld [vmem:[#allocation2 + $0x3fc] sm:$0xf]
    %v4020 = vld [vmem:[#allocation2 + $0x41c] sm:$0xf]
    %v4021 = vld [vmem:[#allocation2 + $0x43c] sm:$0xf]
    %v4022 = vld [vmem:[#allocation2 + $0x45c] sm:$0xf]
    %v4023 = vld [vmem:[#allocation2 + $0x47c] sm:$0xf]
    %v4024 = vld [vmem:[#allocation2 + $0x49c] sm:$0xf]
    %v4025 = vld [vmem:[#allocation2 + $0x4bc] sm:$0xf]
    %v4026 = vld [vmem:[#allocation2 + $0x4dc] sm:$0xf]
    %v4027 = vld [vmem:[#allocation2 + $0x4fc] sm:$0xf]
    %v4028 = vld [vmem:[#allocation2 + $0x51c] sm:$0xf]
    %v4029 = vld [vmem:[#allocation2 + $0x53c] sm:$0xf]
    %v4030 = vld [vmem:[#allocation2 + $0x55c] sm:$0xf]
    %v4031 = vld [vmem:[#allocation2 + $0x57c] sm:$0xf]
    %v4032 = vld [vmem:[#allocation2 + $0x59c] sm:$0xf]
    %v4033 = vld [vmem:[#allocation2 + $0x5bc] sm:$0xf]
    %v4034 = vld [vmem:[#allocation2 + $0x5dc] sm:$0xf]
    %v4035 = vld [vmem:[#allocation2 + $0x5fc] sm:$0xf]
    %v4036 = vld [vmem:[#allocation2 + $0x61c] sm:$0xf]
    %v4037 = vld [vmem:[#allocation2 + $0x63c] sm:$0xf]
    %v4038 = vpack.c.bf16 %v2777, %v2774
    %v4039 = vpack.c.bf16 %v2778, %v2775
    %v4040 = vpack.c.bf16 %v2779, %v2776
    %v4041 = vpack.c.bf16 %v2783, %v2780
    %v4042 = vpack.c.bf16 %v2784, %v2781
    %v4043 = vpack.c.bf16 %v2785, %v2782
    %v4044 = vpack.c.bf16 %v2789, %v2786
    %v4045 = vpack.c.bf16 %v2790, %v2787
    %v4046 = vpack.c.bf16 %v2791, %v2788
    %v4047 = vpack.c.bf16 %v2795, %v2792
    %v4048 = vpack.c.bf16 %v2796, %v2793
    %v4049 = vpack.c.bf16 %v2797, %v2794
    %v4050 = vpack.c.bf16 %v2801, %v2798
    %v4051 = vpack.c.bf16 %v2802, %v2799
    %v4052 = vpack.c.bf16 %v2803, %v2800
    %v4053 = vpack.c.bf16 %v2807, %v2804
    %v4054 = vpack.c.bf16 %v2808, %v2805
    %v4055 = vpack.c.bf16 %v2809, %v2806
    %v4056 = vpack.c.bf16 %v2813, %v2810
    %v4057 = vpack.c.bf16 %v2814, %v2811
    %v4058 = vpack.c.bf16 %v2815, %v2812
    %v4059 = vpack.c.bf16 %v2819, %v2816
    %v4060 = vpack.c.bf16 %v2820, %v2817
    %v4061 = vpack.c.bf16 %v2821, %v2818
    %v4062 = vpack.c.bf16 %v3897, %v3894
    %v4063 = vpack.c.bf16 %v3898, %v3895
    %v4064 = vpack.c.bf16 %v3899, %v3896
    %v4065 = vpack.c.bf16 %v3903, %v3900
    %v4066 = vpack.c.bf16 %v3904, %v3901
    %v4067 = vpack.c.bf16 %v3905, %v3902
    %v4068 = vpack.c.bf16 %v3909, %v3906
    %v4069 = vpack.c.bf16 %v3910, %v3907
    %v4070 = vpack.c.bf16 %v3911, %v3908
    %v4071 = vpack.c.bf16 %v3915, %v3912
    %v4072 = vpack.c.bf16 %v3916, %v3913
    %v4073 = vpack.c.bf16 %v3917, %v3914
    %v4074 = vpack.c.bf16 %v3921, %v3918
    %v4075 = vpack.c.bf16 %v3922, %v3919
    %v4076 = vpack.c.bf16 %v3923, %v3920
    %v4077 = vpack.c.bf16 %v3927, %v3924
    %v4078 = vpack.c.bf16 %v3928, %v3925
    %v4079 = vpack.c.bf16 %v3929, %v3926
    %v4080 = vpack.c.bf16 %v3933, %v3930
    %v4081 = vpack.c.bf16 %v3934, %v3931
    %v4082 = vpack.c.bf16 %v3935, %v3932
    %v4083 = vpack.c.bf16 %v3939, %v3936
    %v4084 = vpack.c.bf16 %v3940, %v3937
    %v4085 = vpack.c.bf16 %v3941, %v3938
    %v4134 = vunpack.c.l.b16 %v3990
    %v4135 = vunpack.c.l.b16 %v3991
    %v4136 = vunpack.c.l.b16 %v3992
    %v4137 = vunpack.c.l.b16 %v3993
    %v4138 = vunpack.c.l.b16 %v3994
    %v4139 = vunpack.c.l.b16 %v3995
    %v4140 = vunpack.c.l.b16 %v3996
    %v4141 = vunpack.c.l.b16 %v3997
    %v4142 = vunpack.c.l.b16 %v3998
    %v4143 = vunpack.c.l.b16 %v3999
    %v4144 = vunpack.c.l.b16 %v4000
    %v4145 = vunpack.c.l.b16 %v4001
    %v4146 = vunpack.c.l.b16 %v4002
    %v4147 = vunpack.c.l.b16 %v4003
    %v4148 = vunpack.c.l.b16 %v4004
    %v4149 = vunpack.c.l.b16 %v4005
    %v4150 = vunpack.c.l.b16 %v4006
    %v4151 = vunpack.c.l.b16 %v4007
    %v4152 = vunpack.c.l.b16 %v4008
    %v4153 = vunpack.c.l.b16 %v4009
    %v4154 = vunpack.c.l.b16 %v4010
    %v4155 = vunpack.c.l.b16 %v4011
    %v4156 = vunpack.c.l.b16 %v4012
    %v4157 = vunpack.c.l.b16 %v4013
    %v4158 = vunpack.c.l.b16 %v4014
    %v4159 = vunpack.c.l.b16 %v4015
    %v4160 = vunpack.c.l.b16 %v4016
    %v4161 = vunpack.c.l.b16 %v4017
    %v4162 = vunpack.c.l.b16 %v4018
    %v4163 = vunpack.c.l.b16 %v4019
    %v4164 = vunpack.c.l.b16 %v4020
    %v4165 = vunpack.c.l.b16 %v4021
    %v4166 = vunpack.c.l.b16 %v4022
    %v4167 = vunpack.c.l.b16 %v4023
    %v4168 = vunpack.c.l.b16 %v4024
    %v4169 = vunpack.c.l.b16 %v4025
    %v4170 = vunpack.c.l.b16 %v4026
    %v4171 = vunpack.c.l.b16 %v4027
    %v4172 = vunpack.c.l.b16 %v4028
    %v4173 = vunpack.c.l.b16 %v4029
    %v4174 = vunpack.c.l.b16 %v4030
    %v4175 = vunpack.c.l.b16 %v4031
    %v4176 = vunpack.c.l.b16 %v4032
    %v4177 = vunpack.c.l.b16 %v4033
    %v4178 = vunpack.c.l.b16 %v4034
    %v4179 = vunpack.c.l.b16 %v4035
    %v4180 = vunpack.c.l.b16 %v4036
    %v4181 = vunpack.c.l.b16 %v4037
    %v4182 = vpack.c.b16 %v4135, %v4134
    %v4183 = vpack.c.b16 %v4137, %v4136
    %v4184 = vpack.c.b16 %v4139, %v4138
    %v4185 = vpack.c.b16 %v4141, %v4140
    %v4186 = vpack.c.b16 %v4143, %v4142
    %v4187 = vpack.c.b16 %v4145, %v4144
    %v4188 = vpack.c.b16 %v4147, %v4146
    %v4189 = vpack.c.b16 %v4149, %v4148
    %v4190 = vpack.c.b16 %v4151, %v4150
    %v4191 = vpack.c.b16 %v4153, %v4152
    %v4192 = vpack.c.b16 %v4155, %v4154
    %v4193 = vpack.c.b16 %v4157, %v4156
    %v4194 = vpack.c.b16 %v4159, %v4158
    %v4195 = vpack.c.b16 %v4161, %v4160
    %v4196 = vpack.c.b16 %v4163, %v4162
    %v4197 = vpack.c.b16 %v4165, %v4164
    %v4198 = vpack.c.b16 %v4167, %v4166
    %v4199 = vpack.c.b16 %v4169, %v4168
    %v4200 = vpack.c.b16 %v4171, %v4170
    %v4201 = vpack.c.b16 %v4173, %v4172
    %v4202 = vpack.c.b16 %v4175, %v4174
    %v4203 = vpack.c.b16 %v4177, %v4176
    %v4204 = vpack.c.b16 %v4179, %v4178
    %v4205 = vpack.c.b16 %v4181, %v4180
    %4230 = vmatprep.subr.bf16.mxu0 0
    %4231 = vmatpush1.bf16.msra.mxu0 %v4189
    %4232 = vmatprep.subr.bf16.mxu0 0
    %4233 = vmatpush1.bf16.msra.mxu0 %v4188
    %4234 = vmatprep.subr.bf16.mxu0 0
    %4235 = vmatpush1.bf16.msra.mxu0 %v4187
    %4236 = vmatprep.subr.bf16.mxu0 0
    %4237 = vmatpush1.bf16.msra.mxu0 %v4186
    %4238 = vmatprep.subr.bf16.mxu0 0
    %4239 = vmatpush1.bf16.msra.mxu0 %v4185
    %4240 = vmatprep.subr.bf16.mxu0 0
    %4241 = vmatpush1.bf16.msra.mxu0 %v4184
    %4242 = vmatprep.subr.bf16.mxu0 0
    %4243 = vmatpush1.bf16.msra.mxu0 %v4183
    %4244 = vmatprep.subr.bf16.mxu0 0
    %4245 = vmatpush1.bf16.msra.mxu0 %v4182
    %4246 = vmatprep.subr.bf16.mxu0 0
    %4247 = vmatpush2.bf16.msra.mxu0 %v4197
    %4248 = vmatprep.subr.bf16.mxu0 0
    %4249 = vmatpush2.bf16.msra.mxu0 %v4196
    %4250 = vmatprep.subr.bf16.mxu0 0
    %4251 = vmatpush2.bf16.msra.mxu0 %v4195
    %4252 = vmatprep.subr.bf16.mxu0 0
    %4253 = vmatpush2.bf16.msra.mxu0 %v4194
    %4254 = vmatprep.subr.bf16.mxu0 0
    %4255 = vmatpush2.bf16.msra.mxu0 %v4193
    %4256 = vmatprep.subr.bf16.mxu0 0
    %4257 = vmatpush2.bf16.msra.mxu0 %v4192
    %4258 = vmatprep.subr.bf16.mxu0 0
    %4259 = vmatpush2.bf16.msra.mxu0 %v4191
    %4260 = vmatprep.subr.bf16.mxu0 0
    %4261 = vmatpush2.bf16.msra.mxu0 %v4190
    %4262 = vmatprep.mubr.bf16.mxu0 %v4063
    %4263 = vmatmul.mubr.bf16.gmra.mxu0 %v4062
    %v4264 = vpop.f32.mrf.mxu0
    %v4265 = vadd.f32 0.0, %v4264
    %v4266 = vpop.f32.mrf.mxu0
    %v4267 = vpop.f32.mrf.mxu0
    %v4268 = vadd.f32 0.0, %v4267
    %v4269 = vpop.f32.mrf.mxu0
    %4270 = vmatprep.mubr.bf16.mxu0 %v4066
    %4271 = vmatmul.mubr.bf16.gmra.mxu0 %v4065
    %v4272 = vpop.f32.mrf.mxu0
    %v4273 = vadd.f32 0.0, %v4272
    %v4274 = vpop.f32.mrf.mxu0
    %v4275 = vpop.f32.mrf.mxu0
    %v4276 = vadd.f32 0.0, %v4275
    %v4277 = vpop.f32.mrf.mxu0
    %4278 = vmatprep.mubr.bf16.mxu0 %v4069
    %4279 = vmatmul.mubr.bf16.gmra.mxu0 %v4068
    %v4280 = vpop.f32.mrf.mxu0
    %v4281 = vadd.f32 0.0, %v4280
    %v4282 = vpop.f32.mrf.mxu0
    %v4283 = vpop.f32.mrf.mxu0
    %v4284 = vadd.f32 0.0, %v4283
    %v4285 = vpop.f32.mrf.mxu0
    %4286 = vmatprep.mubr.bf16.mxu0 %v4072
    %4287 = vmatmul.mubr.bf16.gmra.mxu0 %v4071
    %v4288 = vpop.f32.mrf.mxu0
    %v4289 = vadd.f32 0.0, %v4288
    %v4290 = vpop.f32.mrf.mxu0
    %v4291 = vpop.f32.mrf.mxu0
    %v4292 = vadd.f32 0.0, %v4291
    %v4293 = vpop.f32.mrf.mxu0
    %4294 = vmatprep.mubr.bf16.mxu0 %v4075
    %4295 = vmatmul.mubr.bf16.gmra.mxu0 %v4074
    %v4296 = vpop.f32.mrf.mxu0
    %v4297 = vadd.f32 0.0, %v4296
    %v4298 = vpop.f32.mrf.mxu0
    %v4299 = vpop.f32.mrf.mxu0
    %v4300 = vadd.f32 0.0, %v4299
    %v4301 = vpop.f32.mrf.mxu0
    %4302 = vmatprep.mubr.bf16.mxu0 %v4078
    %4303 = vmatmul.mubr.bf16.gmra.mxu0 %v4077
    %v4304 = vpop.f32.mrf.mxu0
    %v4305 = vadd.f32 0.0, %v4304
    %v4306 = vpop.f32.mrf.mxu0
    %v4307 = vpop.f32.mrf.mxu0
    %v4308 = vadd.f32 0.0, %v4307
    %v4309 = vpop.f32.mrf.mxu0
    %4310 = vmatprep.mubr.bf16.mxu0 %v4081
    %4311 = vmatmul.mubr.bf16.gmra.mxu0 %v4080
    %v4312 = vpop.f32.mrf.mxu0
    %v4313 = vadd.f32 0.0, %v4312
    %v4314 = vpop.f32.mrf.mxu0
    %v4315 = vpop.f32.mrf.mxu0
    %v4316 = vadd.f32 0.0, %v4315
    %v4317 = vpop.f32.mrf.mxu0
    %4318 = vmatprep.mubr.bf16.mxu0 %v4084
    %4319 = vmatmul.mubr.bf16.gmra.mxu0 %v4083
    %v4320 = vpop.f32.mrf.mxu0
    %v4321 = vadd.f32 0.0, %v4320
    %v4322 = vpop.f32.mrf.mxu0
    %v4323 = vpop.f32.mrf.mxu0
    %v4324 = vadd.f32 0.0, %v4323
    %v4325 = vpop.f32.mrf.mxu0
    %4326 = vdwg.mxu0
    %4327 = vmatprep.subr.bf16.mxu0 0
    %4328 = vmatpush1.bf16.msra.mxu0 %v4205
    %4329 = vmatprep.subr.bf16.mxu0 0
    %4330 = vmatpush1.bf16.msra.mxu0 %v4204
    %4331 = vmatprep.subr.bf16.mxu0 0
    %4332 = vmatpush1.bf16.msra.mxu0 %v4203
    %4333 = vmatprep.subr.bf16.mxu0 0
    %4334 = vmatpush1.bf16.msra.mxu0 %v4202
    %4335 = vmatprep.subr.bf16.mxu0 0
    %4336 = vmatpush1.bf16.msra.mxu0 %v4201
    %4337 = vmatprep.subr.bf16.mxu0 0
    %4338 = vmatpush1.bf16.msra.mxu0 %v4200
    %4339 = vmatprep.subr.bf16.mxu0 0
    %4340 = vmatpush1.bf16.msra.mxu0 %v4199
    %4341 = vmatprep.subr.bf16.mxu0 0
    %4342 = vmatpush1.bf16.msra.mxu0 %v4198
    %4343 = vmatprep.subr.bf16.mxu0 0
    %4344 = vmatpush2.bf16.msra.mxu0 0
    %4345 = vmatprep.subr.bf16.mxu0 0
    %4346 = vmatpush2.bf16.msra.mxu0 0
    %4347 = vmatprep.subr.bf16.mxu0 0
    %4348 = vmatpush2.bf16.msra.mxu0 0
    %4349 = vmatprep.subr.bf16.mxu0 0
    %4350 = vmatpush2.bf16.msra.mxu0 0
    %4351 = vmatprep.subr.bf16.mxu0 0
    %4352 = vmatpush2.bf16.msra.mxu0 0
    %4353 = vmatprep.subr.bf16.mxu0 0
    %4354 = vmatpush2.bf16.msra.mxu0 0
    %4355 = vmatprep.subr.bf16.mxu0 0
    %4356 = vmatpush2.bf16.msra.mxu0 0
    %4357 = vmatprep.subr.bf16.mxu0 0
    %4358 = vmatpush2.bf16.msra.mxu0 0
    %4359 = vmatprep.mubr.bf16.mxu0 0
    %4360 = vmatmul.mubr.bf16.gmra.mxu0 %v4064
    %v4361 = vpop.f32.mrf.mxu0
    %v4362 = vadd.f32 %v4265, %v4361
    %v4363 = vpop.f32.mrf.mxu0
    %v4364 = vpop.f32.mrf.mxu0
    %v4365 = vadd.f32 %v4268, %v4364
    %v4366 = vpop.f32.mrf.mxu0
    %4367 = vmatprep.mubr.bf16.mxu0 0
    %4368 = vmatmul.mubr.bf16.gmra.mxu0 %v4067
    %v4369 = vpop.f32.mrf.mxu0
    %v4370 = vadd.f32 %v4273, %v4369
    %v4371 = vpop.f32.mrf.mxu0
    %v4372 = vpop.f32.mrf.mxu0
    %v4373 = vadd.f32 %v4276, %v4372
    %v4374 = vpop.f32.mrf.mxu0
    %4375 = vmatprep.mubr.bf16.mxu0 0
    %4376 = vmatmul.mubr.bf16.gmra.mxu0 %v4070
    %v4377 = vpop.f32.mrf.mxu0
    %v4378 = vadd.f32 %v4281, %v4377
    %v4379 = vpop.f32.mrf.mxu0
    %v4380 = vpop.f32.mrf.mxu0
    %v4381 = vadd.f32 %v4284, %v4380
    %v4382 = vpop.f32.mrf.mxu0
    %4383 = vmatprep.mubr.bf16.mxu0 0
    %4384 = vmatmul.mubr.bf16.gmra.mxu0 %v4073
    %v4385 = vpop.f32.mrf.mxu0
    %v4386 = vadd.f32 %v4289, %v4385
    %v4387 = vpop.f32.mrf.mxu0
    %v4388 = vpop.f32.mrf.mxu0
    %v4389 = vadd.f32 %v4292, %v4388
    %v4390 = vpop.f32.mrf.mxu0
    %4391 = vmatprep.mubr.bf16.mxu0 0
    %4392 = vmatmul.mubr.bf16.gmra.mxu0 %v4076
    %v4393 = vpop.f32.mrf.mxu0
    %v4394 = vadd.f32 %v4297, %v4393
    %v4395 = vpop.f32.mrf.mxu0
    %v4396 = vpop.f32.mrf.mxu0
    %v4397 = vadd.f32 %v4300, %v4396
    %v4398 = vpop.f32.mrf.mxu0
    %4399 = vmatprep.mubr.bf16.mxu0 0
    %4400 = vmatmul.mubr.bf16.gmra.mxu0 %v4079
    %v4401 = vpop.f32.mrf.mxu0
    %v4402 = vadd.f32 %v4305, %v4401
    %v4403 = vpop.f32.mrf.mxu0
    %v4404 = vpop.f32.mrf.mxu0
    %v4405 = vadd.f32 %v4308, %v4404
    %v4406 = vpop.f32.mrf.mxu0
    %4407 = vmatprep.mubr.bf16.mxu0 0
    %4408 = vmatmul.mubr.bf16.gmra.mxu0 %v4082
    %v4409 = vpop.f32.mrf.mxu0
    %v4410 = vadd.f32 %v4313, %v4409
    %v4411 = vpop.f32.mrf.mxu0
    %v4412 = vpop.f32.mrf.mxu0
    %v4413 = vadd.f32 %v4316, %v4412
    %v4414 = vpop.f32.mrf.mxu0
    %4415 = vmatprep.mubr.bf16.mxu0 0
    %4416 = vmatmul.mubr.bf16.gmra.mxu0 %v4085
    %v4417 = vpop.f32.mrf.mxu0
    %v4418 = vadd.f32 %v4321, %v4417
    %v4419 = vpop.f32.mrf.mxu0
    %v4420 = vpop.f32.mrf.mxu0
    %v4421 = vadd.f32 %v4324, %v4420
    %v4422 = vpop.f32.mrf.mxu0
    %4423 = vdwg.mxu0
    %v4472 = vunpack.c.l.b16 %v3942
    %v4473 = vunpack.c.l.b16 %v3943
    %v4474 = vunpack.c.l.b16 %v3944
    %v4475 = vunpack.c.l.b16 %v3945
    %v4476 = vunpack.c.l.b16 %v3946
    %v4477 = vunpack.c.l.b16 %v3947
    %v4478 = vunpack.c.l.b16 %v3948
    %v4479 = vunpack.c.l.b16 %v3949
    %v4480 = vunpack.c.l.b16 %v3950
    %v4481 = vunpack.c.l.b16 %v3951
    %v4482 = vunpack.c.l.b16 %v3952
    %v4483 = vunpack.c.l.b16 %v3953
    %v4484 = vunpack.c.l.b16 %v3954
    %v4485 = vunpack.c.l.b16 %v3955
    %v4486 = vunpack.c.l.b16 %v3956
    %v4487 = vunpack.c.l.b16 %v3957
    %v4488 = vunpack.c.l.b16 %v3958
    %v4489 = vunpack.c.l.b16 %v3959
    %v4490 = vunpack.c.l.b16 %v3960
    %v4491 = vunpack.c.l.b16 %v3961
    %v4492 = vunpack.c.l.b16 %v3962
    %v4493 = vunpack.c.l.b16 %v3963
    %v4494 = vunpack.c.l.b16 %v3964
    %v4495 = vunpack.c.l.b16 %v3965
    %v4496 = vunpack.c.l.b16 %v3966
    %v4497 = vunpack.c.l.b16 %v3967
    %v4498 = vunpack.c.l.b16 %v3968
    %v4499 = vunpack.c.l.b16 %v3969
    %v4500 = vunpack.c.l.b16 %v3970
    %v4501 = vunpack.c.l.b16 %v3971
    %v4502 = vunpack.c.l.b16 %v3972
    %v4503 = vunpack.c.l.b16 %v3973
    %v4504 = vunpack.c.l.b16 %v3974
    %v4505 = vunpack.c.l.b16 %v3975
    %v4506 = vunpack.c.l.b16 %v3976
    %v4507 = vunpack.c.l.b16 %v3977
    %v4508 = vunpack.c.l.b16 %v3978
    %v4509 = vunpack.c.l.b16 %v3979
    %v4510 = vunpack.c.l.b16 %v3980
    %v4511 = vunpack.c.l.b16 %v3981
    %v4512 = vunpack.c.l.b16 %v3982
    %v4513 = vunpack.c.l.b16 %v3983
    %v4514 = vunpack.c.l.b16 %v3984
    %v4515 = vunpack.c.l.b16 %v3985
    %v4516 = vunpack.c.l.b16 %v3986
    %v4517 = vunpack.c.l.b16 %v3987
    %v4518 = vunpack.c.l.b16 %v3988
    %v4519 = vunpack.c.l.b16 %v3989
    %v4520 = vpack.c.b16 %v4473, %v4472
    %v4521 = vpack.c.b16 %v4475, %v4474
    %v4522 = vpack.c.b16 %v4477, %v4476
    %v4523 = vpack.c.b16 %v4479, %v4478
    %v4524 = vpack.c.b16 %v4481, %v4480
    %v4525 = vpack.c.b16 %v4483, %v4482
    %v4526 = vpack.c.b16 %v4485, %v4484
    %v4527 = vpack.c.b16 %v4487, %v4486
    %v4528 = vpack.c.b16 %v4489, %v4488
    %v4529 = vpack.c.b16 %v4491, %v4490
    %v4530 = vpack.c.b16 %v4493, %v4492
    %v4531 = vpack.c.b16 %v4495, %v4494
    %v4532 = vpack.c.b16 %v4497, %v4496
    %v4533 = vpack.c.b16 %v4499, %v4498
    %v4534 = vpack.c.b16 %v4501, %v4500
    %v4535 = vpack.c.b16 %v4503, %v4502
    %v4536 = vpack.c.b16 %v4505, %v4504
    %v4537 = vpack.c.b16 %v4507, %v4506
    %v4538 = vpack.c.b16 %v4509, %v4508
    %v4539 = vpack.c.b16 %v4511, %v4510
    %v4540 = vpack.c.b16 %v4513, %v4512
    %v4541 = vpack.c.b16 %v4515, %v4514
    %v4542 = vpack.c.b16 %v4517, %v4516
    %v4543 = vpack.c.b16 %v4519, %v4518
    %4568 = vmatprep.subr.bf16.mxu0 0
    %4569 = vmatpush1.bf16.msra.mxu0 %v4527
    %4570 = vmatprep.subr.bf16.mxu0 0
    %4571 = vmatpush1.bf16.msra.mxu0 %v4526
    %4572 = vmatprep.subr.bf16.mxu0 0
    %4573 = vmatpush1.bf16.msra.mxu0 %v4525
    %4574 = vmatprep.subr.bf16.mxu0 0
    %4575 = vmatpush1.bf16.msra.mxu0 %v4524
    %4576 = vmatprep.subr.bf16.mxu0 0
    %4577 = vmatpush1.bf16.msra.mxu0 %v4523
    %4578 = vmatprep.subr.bf16.mxu0 0
    %4579 = vmatpush1.bf16.msra.mxu0 %v4522
    %4580 = vmatprep.subr.bf16.mxu0 0
    %4581 = vmatpush1.bf16.msra.mxu0 %v4521
    %4582 = vmatprep.subr.bf16.mxu0 0
    %4583 = vmatpush1.bf16.msra.mxu0 %v4520
    %4584 = vmatprep.subr.bf16.mxu0 0
    %4585 = vmatpush2.bf16.msra.mxu0 %v4535
    %4586 = vmatprep.subr.bf16.mxu0 0
    %4587 = vmatpush2.bf16.msra.mxu0 %v4534
    %4588 = vmatprep.subr.bf16.mxu0 0
    %4589 = vmatpush2.bf16.msra.mxu0 %v4533
    %4590 = vmatprep.subr.bf16.mxu0 0
    %4591 = vmatpush2.bf16.msra.mxu0 %v4532
    %4592 = vmatprep.subr.bf16.mxu0 0
    %4593 = vmatpush2.bf16.msra.mxu0 %v4531
    %4594 = vmatprep.subr.bf16.mxu0 0
    %4595 = vmatpush2.bf16.msra.mxu0 %v4530
    %4596 = vmatprep.subr.bf16.mxu0 0
    %4597 = vmatpush2.bf16.msra.mxu0 %v4529
    %4598 = vmatprep.subr.bf16.mxu0 0
    %4599 = vmatpush2.bf16.msra.mxu0 %v4528
    %4600 = vmatprep.mubr.bf16.mxu0 %v4039
    %4601 = vmatmul.mubr.bf16.gmra.mxu0 %v4038
    %v4602 = vpop.f32.mrf.mxu0
    %v4603 = vadd.f32 %v4362, %v4602
    %v4604 = vpop.f32.mrf.mxu0
    %v4605 = vpop.f32.mrf.mxu0
    %v4606 = vadd.f32 %v4365, %v4605
    %v4607 = vpop.f32.mrf.mxu0
    %4608 = vmatprep.mubr.bf16.mxu0 %v4042
    %4609 = vmatmul.mubr.bf16.gmra.mxu0 %v4041
    %v4610 = vpop.f32.mrf.mxu0
    %v4611 = vadd.f32 %v4370, %v4610
    %v4612 = vpop.f32.mrf.mxu0
    %v4613 = vpop.f32.mrf.mxu0
    %v4614 = vadd.f32 %v4373, %v4613
    %v4615 = vpop.f32.mrf.mxu0
    %4616 = vmatprep.mubr.bf16.mxu0 %v4045
    %4617 = vmatmul.mubr.bf16.gmra.mxu0 %v4044
    %v4618 = vpop.f32.mrf.mxu0
    %v4619 = vadd.f32 %v4378, %v4618
    %v4620 = vpop.f32.mrf.mxu0
    %v4621 = vpop.f32.mrf.mxu0
    %v4622 = vadd.f32 %v4381, %v4621
    %v4623 = vpop.f32.mrf.mxu0
    %4624 = vmatprep.mubr.bf16.mxu0 %v4048
    %4625 = vmatmul.mubr.bf16.gmra.mxu0 %v4047
    %v4626 = vpop.f32.mrf.mxu0
    %v4627 = vadd.f32 %v4386, %v4626
    %v4628 = vpop.f32.mrf.mxu0
    %v4629 = vpop.f32.mrf.mxu0
    %v4630 = vadd.f32 %v4389, %v4629
    %v4631 = vpop.f32.mrf.mxu0
    %4632 = vmatprep.mubr.bf16.mxu0 %v4051
    %4633 = vmatmul.mubr.bf16.gmra.mxu0 %v4050
    %v4634 = vpop.f32.mrf.mxu0
    %v4635 = vadd.f32 %v4394, %v4634
    %v4636 = vpop.f32.mrf.mxu0
    %v4637 = vpop.f32.mrf.mxu0
    %v4638 = vadd.f32 %v4397, %v4637
    %v4639 = vpop.f32.mrf.mxu0
    %4640 = vmatprep.mubr.bf16.mxu0 %v4054
    %4641 = vmatmul.mubr.bf16.gmra.mxu0 %v4053
    %v4642 = vpop.f32.mrf.mxu0
    %v4643 = vadd.f32 %v4402, %v4642
    %v4644 = vpop.f32.mrf.mxu0
    %v4645 = vpop.f32.mrf.mxu0
    %v4646 = vadd.f32 %v4405, %v4645
    %v4647 = vpop.f32.mrf.mxu0
    %4648 = vmatprep.mubr.bf16.mxu0 %v4057
    %4649 = vmatmul.mubr.bf16.gmra.mxu0 %v4056
    %v4650 = vpop.f32.mrf.mxu0
    %v4651 = vadd.f32 %v4410, %v4650
    %v4652 = vpop.f32.mrf.mxu0
    %v4653 = vpop.f32.mrf.mxu0
    %v4654 = vadd.f32 %v4413, %v4653
    %v4655 = vpop.f32.mrf.mxu0
    %4656 = vmatprep.mubr.bf16.mxu0 %v4060
    %4657 = vmatmul.mubr.bf16.gmra.mxu0 %v4059
    %v4658 = vpop.f32.mrf.mxu0
    %v4659 = vadd.f32 %v4418, %v4658
    %v4660 = vpop.f32.mrf.mxu0
    %v4661 = vpop.f32.mrf.mxu0
    %v4662 = vadd.f32 %v4421, %v4661
    %v4663 = vpop.f32.mrf.mxu0
    %4664 = vdwg.mxu0
    %4665 = vmatprep.subr.bf16.mxu0 0
    %4666 = vmatpush1.bf16.msra.mxu0 %v4543
    %4667 = vmatprep.subr.bf16.mxu0 0
    %4668 = vmatpush1.bf16.msra.mxu0 %v4542
    %4669 = vmatprep.subr.bf16.mxu0 0
    %4670 = vmatpush1.bf16.msra.mxu0 %v4541
    %4671 = vmatprep.subr.bf16.mxu0 0
    %4672 = vmatpush1.bf16.msra.mxu0 %v4540
    %4673 = vmatprep.subr.bf16.mxu0 0
    %4674 = vmatpush1.bf16.msra.mxu0 %v4539
    %4675 = vmatprep.subr.bf16.mxu0 0
    %4676 = vmatpush1.bf16.msra.mxu0 %v4538
    %4677 = vmatprep.subr.bf16.mxu0 0
    %4678 = vmatpush1.bf16.msra.mxu0 %v4537
    %4679 = vmatprep.subr.bf16.mxu0 0
    %4680 = vmatpush1.bf16.msra.mxu0 %v4536
    %4681 = vmatprep.subr.bf16.mxu0 0
    %4682 = vmatpush2.bf16.msra.mxu0 0
    %4683 = vmatprep.subr.bf16.mxu0 0
    %4684 = vmatpush2.bf16.msra.mxu0 0
    %4685 = vmatprep.subr.bf16.mxu0 0
    %4686 = vmatpush2.bf16.msra.mxu0 0
    %4687 = vmatprep.subr.bf16.mxu0 0
    %4688 = vmatpush2.bf16.msra.mxu0 0
    %4689 = vmatprep.subr.bf16.mxu0 0
    %4690 = vmatpush2.bf16.msra.mxu0 0
    %4691 = vmatprep.subr.bf16.mxu0 0
    %4692 = vmatpush2.bf16.msra.mxu0 0
    %4693 = vmatprep.subr.bf16.mxu0 0
    %4694 = vmatpush2.bf16.msra.mxu0 0
    %4695 = vmatprep.subr.bf16.mxu0 0
    %4696 = vmatpush2.bf16.msra.mxu0 0
    %4697 = vmatprep.mubr.bf16.mxu0 0
    %4698 = vmatmul.mubr.bf16.gmra.mxu0 %v4040
    %v4699 = vpop.f32.mrf.mxu0
    %v4700 = vadd.f32 %v4603, %v4699
    %v4701 = vpop.f32.mrf.mxu0
    %v4702 = vpop.f32.mrf.mxu0
    %v4703 = vadd.f32 %v4606, %v4702
    %v4704 = vpop.f32.mrf.mxu0
    %4705 = vmatprep.mubr.bf16.mxu0 0
    %4706 = vmatmul.mubr.bf16.gmra.mxu0 %v4043
    %v4707 = vpop.f32.mrf.mxu0
    %v4708 = vadd.f32 %v4611, %v4707
    %v4709 = vpop.f32.mrf.mxu0
    %v4710 = vpop.f32.mrf.mxu0
    %v4711 = vadd.f32 %v4614, %v4710
    %v4712 = vpop.f32.mrf.mxu0
    %4713 = vmatprep.mubr.bf16.mxu0 0
    %4714 = vmatmul.mubr.bf16.gmra.mxu0 %v4046
    %v4715 = vpop.f32.mrf.mxu0
    %v4716 = vadd.f32 %v4619, %v4715
    %v4717 = vpop.f32.mrf.mxu0
    %v4718 = vpop.f32.mrf.mxu0
    %v4719 = vadd.f32 %v4622, %v4718
    %v4720 = vpop.f32.mrf.mxu0
    %4721 = vmatprep.mubr.bf16.mxu0 0
    %4722 = vmatmul.mubr.bf16.gmra.mxu0 %v4049
    %v4723 = vpop.f32.mrf.mxu0
    %v4724 = vadd.f32 %v4627, %v4723
    %v4725 = vpop.f32.mrf.mxu0
    %v4726 = vpop.f32.mrf.mxu0
    %v4727 = vadd.f32 %v4630, %v4726
    %v4728 = vpop.f32.mrf.mxu0
    %4729 = vmatprep.mubr.bf16.mxu0 0
    %4730 = vmatmul.mubr.bf16.gmra.mxu0 %v4052
    %v4731 = vpop.f32.mrf.mxu0
    %v4732 = vadd.f32 %v4635, %v4731
    %v4733 = vpop.f32.mrf.mxu0
    %v4734 = vpop.f32.mrf.mxu0
    %v4735 = vadd.f32 %v4638, %v4734
    %v4736 = vpop.f32.mrf.mxu0
    %4737 = vmatprep.mubr.bf16.mxu0 0
    %4738 = vmatmul.mubr.bf16.gmra.mxu0 %v4055
    %v4739 = vpop.f32.mrf.mxu0
    %v4740 = vadd.f32 %v4643, %v4739
    %v4741 = vpop.f32.mrf.mxu0
    %v4742 = vpop.f32.mrf.mxu0
    %v4743 = vadd.f32 %v4646, %v4742
    %v4744 = vpop.f32.mrf.mxu0
    %4745 = vmatprep.mubr.bf16.mxu0 0
    %4746 = vmatmul.mubr.bf16.gmra.mxu0 %v4058
    %v4747 = vpop.f32.mrf.mxu0
    %v4748 = vadd.f32 %v4651, %v4747
    %v4749 = vpop.f32.mrf.mxu0
    %v4750 = vpop.f32.mrf.mxu0
    %v4751 = vadd.f32 %v4654, %v4750
    %v4752 = vpop.f32.mrf.mxu0
    %4753 = vmatprep.mubr.bf16.mxu0 0
    %4754 = vmatmul.mubr.bf16.gmra.mxu0 %v4061
    %v4755 = vpop.f32.mrf.mxu0
    %v4756 = vadd.f32 %v4659, %v4755
    %v4757 = vpop.f32.mrf.mxu0
    %v4758 = vpop.f32.mrf.mxu0
    %v4759 = vadd.f32 %v4662, %v4758
    %v4760 = vpop.f32.mrf.mxu0
    %4761 = vdwg.mxu0
    %v4762 = vlaneseq
    %v4763 = vshrl.u32 %v4762, 7
    %v4764 = vsub.s32 6, %v4763
    %v4765 = vrot.slane %v46, %v4764
    %v4766 = vadd.f32 %v4700, %v4765
    %v4767 = vadd.f32 %v4703, %v4765
    %v4768 = vadd.f32 %v4708, %v4765
    %v4769 = vadd.f32 %v4711, %v4765
    %v4770 = vadd.f32 %v4716, %v4765
    %v4771 = vadd.f32 %v4719, %v4765
    %v4772 = vadd.f32 %v4724, %v4765
    %v4773 = vadd.f32 %v4727, %v4765
    %v4774 = vadd.f32 %v4732, %v4765
    %v4775 = vadd.f32 %v4735, %v4765
    %v4776 = vadd.f32 %v4740, %v4765
    %v4777 = vadd.f32 %v4743, %v4765
    %v4778 = vadd.f32 %v4748, %v4765
    %v4779 = vadd.f32 %v4751, %v4765
    %v4780 = vadd.f32 %v4756, %v4765
    %v4781 = vadd.f32 %v4759, %v4765
    %4782 = vst [vmem:[%s2] sm:$0xff] %v4766
    %4783 = vst [vmem:[%s2 + $0x8] sm:$0xff] %v4767
    %4784 = vst [vmem:[%s2 + $0x10] sm:$0xff] %v4768
    %4785 = vst [vmem:[%s2 + $0x18] sm:$0xff] %v4769
    %4786 = vst [vmem:[%s2 + $0x20] sm:$0xff] %v4770
    %4787 = vst [vmem:[%s2 + $0x28] sm:$0xff] %v4771
    %4788 = vst [vmem:[%s2 + $0x30] sm:$0xff] %v4772
    %4789 = vst [vmem:[%s2 + $0x38] sm:$0xff] %v4773
    %4790 = vst [vmem:[%s2 + $0x40] sm:$0xff] %v4774
    %4791 = vst [vmem:[%s2 + $0x48] sm:$0xff] %v4775
    %4792 = vst [vmem:[%s2 + $0x50] sm:$0xff] %v4776
    %4793 = vst [vmem:[%s2 + $0x58] sm:$0xff] %v4777
    %4794 = vst [vmem:[%s2 + $0x60] sm:$0xff] %v4778
    %4795 = vst [vmem:[%s2 + $0x68] sm:$0xff] %v4779
    %4796 = vst [vmem:[%s2 + $0x70] sm:$0xff] %v4780
    %4797 = vst [vmem:[%s2 + $0x78] sm:$0xff] %v4781
    // Predicated region
    $region14: #{critic_forward.1} parent=1 // pred_check
      _
    $region15: #{critic_forward.1} parent=1 // pred_check_branch
      %4799 = sbr.rel (0) target = $region17
    $region16: #{critic_forward.1} parent=1 // pred_region
      _
    $region17: #{critic_forward.1} parent=1 // pred_fallthru
      _
    // Predicated region
    $region18: #{critic_forward.1} parent=1 // pred_check
      _
    $region19: #{critic_forward.1} parent=1 // pred_check_branch
      %4801 = sbr.rel (0) target = $region21
    $region20: #{critic_forward.1} parent=1 // pred_region
      _
    $region21: #{critic_forward.1} parent=1 // pred_fallthru
      _
    %4802 = vsyncpa [#allocation3], 1

</llo_original>
